<compile_context>
chip_gen: v6e
topology: v6e:2x2x1
jax: 0.10.0
libtpu: 0.0.40
codegen_flags: <defaults>
</compile_context>

<pallas_src>
import functools

import jax
import jax.numpy as jnp
from jax import lax
from jax.experimental import pallas as pl
from jax.experimental.pallas import tpu as pltpu


def _wrap_i32(v: int) -> int:
    """Python int -> two's-complement int32 value (for hash constants)."""
    v &= 0xFFFFFFFF
    return v - (1 << 32) if v >= (1 << 31) else v


_MIX_A = _wrap_i32(0x9E3779B9)
_MIX_B = _wrap_i32(0x85EBCA6B)
_MIX_C = _wrap_i32(0x7FEB352D)
_MIX_D = _wrap_i32(0x846CA68B)
_SALT1 = _wrap_i32(0x243F6A89)
_SALT2 = _wrap_i32(0x452821E6)


def _shr_logical(x, n):
    """Logical right shift by a constant. The shift operand is shape-matched to x
    so the lax primitive never relies on implicit broadcasting."""
    return lax.shift_right_logical(x, jnp.full(x.shape, n, x.dtype))


def _hash_i32(x):
    """SplitMix32-style finalizer on int32 lanes (wraps identically to uint32).

    Pure 32-bit VPU integer ops (xor / logical shift / mul), so it lowers both
    under Mosaic and in interpret mode.
    """
    x = x ^ _shr_logical(x, 16)
    x = x * jnp.int32(_MIX_C)
    x = x ^ _shr_logical(x, 15)
    x = x * jnp.int32(_MIX_D)
    x = x ^ _shr_logical(x, 16)
    return x


def _solarnet_kernel(train, keep_threshold, inv_keep, *refs):
    """Fused fc1-relu-(drop)-fc2-relu-(drop)-fc3-relu-fc4 for one batch tile.

    The output is lane-dense: the tb results of this tile are written as a
    (1, tb) row (values along lanes) instead of a lane-width-1 (tb, 1) column.
    """
    if train:
        (seed_ref, x_ref, w1_ref, b1_ref, w2_ref, b2_ref,
         w3_ref, b3_ref, w4_ref, b4_ref, o_ref) = refs
    else:
        (x_ref, w1_ref, b1_ref, w2_ref, b2_ref,
         w3_ref, b3_ref, w4_ref, b4_ref, o_ref) = refs
        seed_ref = None

    tb = x_ref.shape[0]
    cdt = w1_ref.dtype   # matmul-input dtype (f32 or bf16); accumulation stays f32

    if train:
        # Row-dependent part of the dropout hash: rank-1 (tb, 1), computed once
        # per tile and shared by both dropout layers (saves two full-shape iotas
        # and two full-shape int muls per layer vs the naive version).
        row0 = pl.program_id(0) * tb   # global row offset -> unique mask per tile
        rows = lax.broadcasted_iota(jnp.int32, (tb, 1), 0) + row0
        row_mix = (rows * jnp.int32(_MIX_B)) ^ (seed_ref[0] * jnp.int32(_MIX_A))

    def dropout(h, layer_salt):
        if not train:
            return h
        ncol = h.shape[1]
        # Column-dependent part: rank-1 (1, ncol). Only the xor-combine and the
        # finalizer run at full (tb, ncol) shape.
        col_mix = lax.broadcasted_iota(jnp.int32, (1, ncol), 1) * jnp.int32(_MIX_C)
        mixed = (row_mix ^ jnp.int32(layer_salt)) ^ col_mix          # (tb, ncol)
        u31 = _shr_logical(_hash_i32(mixed), 1)                      # uniform [0, 2^31)
        keep_mask = u31 < jnp.int32(keep_threshold)                  # single int compare
        return jnp.where(keep_mask, h * jnp.float32(inv_keep), jnp.float32(0.0))

    # Cast the streamed tile to the matmul dtype *inside* the kernel: x travels
    # HBM -> VMEM exactly once, in its stored dtype (no wrapper-side bf16 copy).
    x = x_ref[...].astype(cdt)

    h1 = jnp.dot(x, w1_ref[...], preferred_element_type=jnp.float32) + b1_ref[...]
    h1 = dropout(jnp.maximum(h1, 0.0), _SALT1)

    h2 = jnp.dot(h1.astype(cdt), w2_ref[...],
                 preferred_element_type=jnp.float32) + b2_ref[...]
    h2 = dropout(jnp.maximum(h2, 0.0), _SALT2)

    h3 = jnp.dot(h2.astype(cdt), w3_ref[...],
                 preferred_element_type=jnp.float32) + b3_ref[...]
    h3 = jnp.maximum(h3, 0.0)

    # Final 32 -> 1 layer on the VPU (mul) + XLU (lane reduce); an N=1 MXU
    # matmul would waste a full MXU pass.  Result laid along lanes -> (1, tb).
    out_row = jnp.sum(h3 * w4_ref[...], axis=-1)                     # (tb,)
    o_ref[...] = (out_row[None, :] + b4_ref[...]).astype(o_ref.dtype)


def solarnet_forward(x, params, *, eval_mode=True, p=0.2, seed=0,
                     tile_batch=1024, compute_dtype=jnp.float32):
    """x: [B, F] (stored dtype is streamed as-is). params: w1..w4 [fan_in, fan_out],
    b1..b4 [1, fan_out].  Returns [B, 1] float32.  eval_mode=False enables
    in-kernel inverted dropout (stateless hash PRNG keyed on (seed, row, col, layer))."""
    assert x.ndim == 2
    B, F = x.shape
    if not eval_mode:
        assert 0.0 <= p < 1.0, "dropout p must be in [0, 1)"

    train = (not eval_mode) and p > 0.0
    keep = 1.0 - p
    # Realized keep probability is keep_threshold / 2^31; the clamp only bites
    # when keep*2^31 >= 2^31 (p ~ 0), where the error is < 2^-31 — negligible.
    keep_threshold = min(int(keep * (1 << 31)), (1 << 31) - 1)
    inv_keep = (1.0 / keep) if keep > 0.0 else 1.0

    # Batch tile: large tiles amortize the ~0.35us per-grid-step overhead
    # (512-1024 row tiles reach ~85% of the HBM roofline vs ~63% at 256); VMEM
    # is nowhere near the limit at 1024 rows, even on v7x's 64 MiB.  If the
    # whole batch fits in one tile, split it into two steps (rounded up to a
    # sublane multiple of 8) so v7x's two TensorCores both get work under
    # dimension_semantics=("parallel",).
    tb = min(int(tile_batch), B)
    if tb >= B and B > 8:
        tb = ((pl.cdiv(B, 2) + 7) // 8) * 8
    num_tiles = pl.cdiv(B, tb)
    grid = (num_tiles,)

    cdt = jnp.dtype(compute_dtype)
    # Weights/biases are tiny (<60 KiB) and stay resident in VMEM for the whole
    # grid (constant block index).  bf16 weights are the fast path on every
    # generation (v5e's MXU is bf16-native too).  x itself is NOT cast here.
    w1 = params["w1"].astype(cdt)
    w2 = params["w2"].astype(cdt)
    w3 = params["w3"].astype(cdt)
    w4_row = params["w4"].astype(jnp.float32).reshape(1, -1)   # VPU epilogue, f32
    b1 = params["b1"].astype(jnp.float32)
    b2 = params["b2"].astype(jnp.float32)
    b3 = params["b3"].astype(jnp.float32)
    b4 = params["b4"].astype(jnp.float32)

    def resident(a):
        # Same block index every grid step -> stays pinned in VMEM.
        # (pipeline_mode=pl.Buffered(1) would also drop the redundant second
        #  buffer for these invariant operands, but at <60 KiB total it is
        #  wall-clock neutral here, so we keep the default.)
        return pl.BlockSpec(a.shape, lambda i: (0, 0))

    x_spec = pl.BlockSpec((tb, F), lambda i: (i, 0))
    # Lane-dense output: one (1, tb) row block per grid step.  The leading grid
    # axis is squeezed out of the kernel ref; the last two block dims equal the
    # full array dims, so any tb (including a ragged last tile) is layout-legal.
    out_spec = pl.BlockSpec((None, 1, tb), lambda i: (i, 0, 0))

    in_specs = [x_spec,
                resident(w1), resident(b1),
                resident(w2), resident(b2),
                resident(w3), resident(b3),
                resident(w4_row), resident(b4)]
    args = [x, w1, b1, w2, b2, w3, b3, w4_row, b4]

    if train:
        in_specs = [pl.BlockSpec(memory_space=pltpu.MemorySpace.SMEM)] + in_specs
        args = [jnp.array([seed], dtype=jnp.int32)] + args

    flops = 2 * B * (F * 128 + 128 * 64 + 64 * 32 + 32 * 1)
    bytes_accessed = (sum(int(a.size) * a.dtype.itemsize for a in args)
                      + num_tiles * tb * 4)

    kernel = functools.partial(_solarnet_kernel, train, keep_threshold, inv_keep)

    out = pl.pallas_call(
        kernel,
        grid=grid,
        in_specs=in_specs,
        out_specs=out_spec,
        out_shape=jax.ShapeDtypeStruct((num_tiles, 1, tb), jnp.float32),
        compiler_params=pltpu.CompilerParams(
            # Batch tiles are independent -> shard across TCs on v7x; harmless
            # (sequential loop) on single-TC v5e/v6e.
            dimension_semantics=("parallel",)),
        cost_estimate=pl.CostEstimate(
            flops=flops, transcendentals=0, bytes_accessed=bytes_accessed),
    )(*args)

    # Undo the lane-dense packing: (num_tiles, 1, tb) -> (B, 1).  Rows past B in
    # the padded last tile are discarded.  Pure layout plumbing (B*4 bytes).
    return out.reshape(num_tiles * tb)[:B].reshape(B, 1)


def init_solarnet_params(key, input_size):
    """Init matching torch nn.Linear: U(-1/sqrt(fan_in), +1/sqrt(fan_in))."""
    dims = [(input_size, 128), (128, 64), (64, 32), (32, 1)]
    params = {}
    for i, (fan_in, fan_out) in enumerate(dims, start=1):
        key, kw, kb = jax.random.split(key, 3)
        bound = 1.0 / (fan_in ** 0.5)
        params[f"w{i}"] = jax.random.uniform(
            kw, (fan_in, fan_out), jnp.float32, minval=-bound, maxval=bound)
        params[f"b{i}"] = jax.random.uniform(
            kb, (1, fan_out), jnp.float32, minval=-bound, maxval=bound)
    return params


def solarnet_reference(x, params):
    """Pure-JAX reference (eval mode)."""
    h = jnp.maximum(x @ params["w1"] + params["b1"], 0.0)
    h = jnp.maximum(h @ params["w2"] + params["b2"], 0.0)
    h = jnp.maximum(h @ params["w3"] + params["b3"], 0.0)
    return h @ params["w4"] + params["b4"]


if __name__ == "__main__":
    key = jax.random.PRNGKey(0)
    k_param, k_x = jax.random.split(key)

    input_size = 32
    batch = 512   # default tile policy splits this into 2 grid steps of 256
    params = init_solarnet_params(k_param, input_size)
    x = jax.random.normal(k_x, (batch, input_size), dtype=jnp.float32)
    ref = solarnet_reference(x, params)

    # 1) eval mode, f32 matmuls — tight check vs pure-JAX reference.
    out = jax.block_until_ready(solarnet_forward(x, params, eval_mode=True))
    assert out.shape == (batch, 1), out.shape
    assert jnp.allclose(out, ref, atol=1e-5, rtol=1e-5)

    # 2) eval mode, bf16 MXU inputs (fast path on all generations incl. v5e;
    #    x still streams as f32 and is cast inside the kernel).
    out_bf16 = jax.block_until_ready(
        solarnet_forward(x, params, eval_mode=True, compute_dtype=jnp.bfloat16))
    assert out_bf16.shape == (batch, 1)
    assert jnp.allclose(out_bf16, ref, atol=1e-1, rtol=1e-1)

    # 3) ragged batch (B % tile != 0) — exercises the padded last tile and the
    #    lane-dense output reshape/slice path.
    xr = x[:100]
    out_r = jax.block_until_ready(solarnet_forward(xr, params, eval_mode=True))
    assert out_r.shape == (100, 1)
    assert jnp.allclose(out_r, ref[:100], atol=1e-5, rtol=1e-5)

    # 4) training mode: in-kernel inverted dropout via stateless hash PRNG.
    # TODO(synk): dropout mask stream intentionally does not replicate torch's RNG.
    out_train = jax.block_until_ready(
        solarnet_forward(x, params, eval_mode=False, p=0.2, seed=123))
    assert out_train.shape == (batch, 1)
    assert bool(jnp.all(jnp.isfinite(out_train)))
    assert not jnp.allclose(out_train, ref, atol=1e-6)   # dropout actually fired

    print("KERNEL_OK")
</pallas_src>

<mosaic_0001>
module attributes {stable_mosaic.version = 11 : i64} {
  func.func @_solarnet_kernel(%arg0: i32, %arg1: memref<256x32xf32, #tpu.memory_space<vmem>>, %arg2: memref<32x128xf32, #tpu.memory_space<vmem>>, %arg3: memref<1x128xf32, #tpu.memory_space<vmem>>, %arg4: memref<128x64xf32, #tpu.memory_space<vmem>>, %arg5: memref<1x64xf32, #tpu.memory_space<vmem>>, %arg6: memref<64x32xf32, #tpu.memory_space<vmem>>, %arg7: memref<1x32xf32, #tpu.memory_space<vmem>>, %arg8: memref<1x32xf32, #tpu.memory_space<vmem>>, %arg9: memref<1x1xf32, #tpu.memory_space<vmem>>, %arg10: memref<1x1x256xf32, #tpu.memory_space<vmem>>) attributes {dimension_semantics = [#tpu.dimension_semantics<parallel>], iteration_bounds = array<i64: 2>, scalar_prefetch = 0 : i64, scratch_operands = 0 : i64, tpu.core_type = #tpu.core_type<tc>, window_params = [{transform_indices = @transform_0, window_bounds = array<i64: 256, 32>}, {pipeline_mode = #tpu.pipeline_mode<synchronous>, transform_indices = @transform_1, window_bounds = array<i64: 32, 128>}, {pipeline_mode = #tpu.pipeline_mode<synchronous>, transform_indices = @transform_2, window_bounds = array<i64: 1, 128>}, {pipeline_mode = #tpu.pipeline_mode<synchronous>, transform_indices = @transform_3, window_bounds = array<i64: 128, 64>}, {pipeline_mode = #tpu.pipeline_mode<synchronous>, transform_indices = @transform_4, window_bounds = array<i64: 1, 64>}, {pipeline_mode = #tpu.pipeline_mode<synchronous>, transform_indices = @transform_5, window_bounds = array<i64: 64, 32>}, {pipeline_mode = #tpu.pipeline_mode<synchronous>, transform_indices = @transform_6, window_bounds = array<i64: 1, 32>}, {pipeline_mode = #tpu.pipeline_mode<synchronous>, transform_indices = @transform_7, window_bounds = array<i64: 1, 32>}, {pipeline_mode = #tpu.pipeline_mode<synchronous>, transform_indices = @transform_8, window_bounds = array<i64: 1, 1>}, {transform_indices = @transform_9, window_bounds = array<i64: 1, 1, 256>}]} {
    %c0 = arith.constant 0 : index
    %c0_0 = arith.constant 0 : index
    %0 = vector.load %arg1[%c0, %c0_0] : memref<256x32xf32, #tpu.memory_space<vmem>>, vector<256x32xf32>
    %c0_1 = arith.constant 0 : index
    %c0_2 = arith.constant 0 : index
    %1 = vector.load %arg2[%c0_1, %c0_2] : memref<32x128xf32, #tpu.memory_space<vmem>>, vector<32x128xf32>
    %cst = arith.constant dense<0.000000e+00> : vector<256x128xf32>
    %2 = tpu.matmul %0, %1, %cst {dimension_numbers = #tpu.dot_dimension_numbers<[1], [0], [0], [1], [0, 0, 1, 1], [], []>} : vector<256x32xf32>, vector<32x128xf32>, vector<256x128xf32> -> vector<256x128xf32>
    %c0_3 = arith.constant 0 : index
    %c0_4 = arith.constant 0 : index
    %3 = vector.load %arg3[%c0_3, %c0_4] : memref<1x128xf32, #tpu.memory_space<vmem>>, vector<1x128xf32>
    %4 = vector.broadcast %3 : vector<1x128xf32> to vector<256x128xf32>
    %5 = arith.addf %2, %4 : vector<256x128xf32>
    %cst_5 = arith.constant 0.000000e+00 : f32
    %6 = vector.broadcast %cst_5 : f32 to vector<256x128xf32>
    %7 = arith.maximumf %5, %6 : vector<256x128xf32>
    %c0_6 = arith.constant 0 : index
    %c0_7 = arith.constant 0 : index
    %8 = vector.load %arg4[%c0_6, %c0_7] : memref<128x64xf32, #tpu.memory_space<vmem>>, vector<128x64xf32>
    %cst_8 = arith.constant dense<0.000000e+00> : vector<256x64xf32>
    %9 = tpu.matmul %7, %8, %cst_8 {dimension_numbers = #tpu.dot_dimension_numbers<[1], [0], [0], [1], [0, 0, 1, 1], [], []>} : vector<256x128xf32>, vector<128x64xf32>, vector<256x64xf32> -> vector<256x64xf32>
    %c0_9 = arith.constant 0 : index
    %c0_10 = arith.constant 0 : index
    %10 = vector.load %arg5[%c0_9, %c0_10] : memref<1x64xf32, #tpu.memory_space<vmem>>, vector<1x64xf32>
    %11 = vector.broadcast %10 : vector<1x64xf32> to vector<256x64xf32>
    %12 = arith.addf %9, %11 : vector<256x64xf32>
    %cst_11 = arith.constant 0.000000e+00 : f32
    %13 = vector.broadcast %cst_11 : f32 to vector<256x64xf32>
    %14 = arith.maximumf %12, %13 : vector<256x64xf32>
    %c0_12 = arith.constant 0 : index
    %c0_13 = arith.constant 0 : index
    %15 = vector.load %arg6[%c0_12, %c0_13] : memref<64x32xf32, #tpu.memory_space<vmem>>, vector<64x32xf32>
    %cst_14 = arith.constant dense<0.000000e+00> : vector<256x32xf32>
    %16 = tpu.matmul %14, %15, %cst_14 {dimension_numbers = #tpu.dot_dimension_numbers<[1], [0], [0], [1], [0, 0, 1, 1], [], []>} : vector<256x64xf32>, vector<64x32xf32>, vector<256x32xf32> -> vector<256x32xf32>
    %c0_15 = arith.constant 0 : index
    %c0_16 = arith.constant 0 : index
    %17 = vector.load %arg7[%c0_15, %c0_16] : memref<1x32xf32, #tpu.memory_space<vmem>>, vector<1x32xf32>
    %18 = vector.broadcast %17 : vector<1x32xf32> to vector<256x32xf32>
    %19 = arith.addf %16, %18 : vector<256x32xf32>
    %cst_17 = arith.constant 0.000000e+00 : f32
    %20 = vector.broadcast %cst_17 : f32 to vector<256x32xf32>
    %21 = arith.maximumf %19, %20 : vector<256x32xf32>
    %c0_18 = arith.constant 0 : index
    %c0_19 = arith.constant 0 : index
    %22 = vector.load %arg8[%c0_18, %c0_19] : memref<1x32xf32, #tpu.memory_space<vmem>>, vector<1x32xf32>
    %23 = vector.broadcast %22 : vector<1x32xf32> to vector<256x32xf32>
    %24 = arith.mulf %21, %23 : vector<256x32xf32>
    %cst_20 = arith.constant dense<0.000000e+00> : vector<256xf32>
    %25 = vector.multi_reduction <add>, %24, %cst_20 [1] : vector<256x32xf32> to vector<256xf32>
    %26 = vector.shape_cast %25 : vector<256xf32> to vector<1x256xf32>
    %c0_21 = arith.constant 0 : index
    %c0_22 = arith.constant 0 : index
    %27 = vector.load %arg9[%c0_21, %c0_22] : memref<1x1xf32, #tpu.memory_space<vmem>>, vector<1x1xf32>
    %28 = vector.broadcast %27 : vector<1x1xf32> to vector<1x256xf32>
    %29 = arith.addf %26, %28 : vector<1x256xf32>
    %c0_23 = arith.constant 0 : index
    %c0_24 = arith.constant 0 : index
    %c0_25 = arith.constant 0 : index
    %30 = vector.load %arg10[%c0_23, %c0_24, %c0_25] : memref<1x1x256xf32, #tpu.memory_space<vmem>>, vector<1x1x256xf32>
    %31 = vector.shape_cast %30 : vector<1x1x256xf32> to vector<1x256xf32>
    %32 = vector.shape_cast %29 : vector<1x256xf32> to vector<1x1x256xf32>
    tpu.vector_store %arg10[%c0_23, %c0_24, %c0_25], %32 {strides = array<i32>} : memref<1x1x256xf32, #tpu.memory_space<vmem>>, vector<1x1x256xf32>,
    return
  }
  func.func @transform_0(%arg0: i32) -> (i32, i32) {
    %c0_i32 = arith.constant 0 : i32
    %c0_i32_0 = arith.constant 0 : i32
    return %arg0, %c0_i32 : i32, i32
  }
  func.func @transform_1(%arg0: i32) -> (i32, i32) {
    %c0_i32 = arith.constant 0 : i32
    %c0_i32_0 = arith.constant 0 : i32
    %c0_i32_1 = arith.constant 0 : i32
    return %c0_i32, %c0_i32_0 : i32, i32
  }
  func.func @transform_2(%arg0: i32) -> (i32, i32) {
    %c0_i32 = arith.constant 0 : i32
    %c0_i32_0 = arith.constant 0 : i32
    %c0_i32_1 = arith.constant 0 : i32
    return %c0_i32, %c0_i32_0 : i32, i32
  }
  func.func @transform_3(%arg0: i32) -> (i32, i32) {
    %c0_i32 = arith.constant 0 : i32
    %c0_i32_0 = arith.constant 0 : i32
    %c0_i32_1 = arith.constant 0 : i32
    return %c0_i32, %c0_i32_0 : i32, i32
  }
  func.func @transform_4(%arg0: i32) -> (i32, i32) {
    %c0_i32 = arith.constant 0 : i32
    %c0_i32_0 = arith.constant 0 : i32
    %c0_i32_1 = arith.constant 0 : i32
    return %c0_i32, %c0_i32_0 : i32, i32
  }
  func.func @transform_5(%arg0: i32) -> (i32, i32) {
    %c0_i32 = arith.constant 0 : i32
    %c0_i32_0 = arith.constant 0 : i32
    %c0_i32_1 = arith.constant 0 : i32
    return %c0_i32, %c0_i32_0 : i32, i32
  }
  func.func @transform_6(%arg0: i32) -> (i32, i32) {
    %c0_i32 = arith.constant 0 : i32
    %c0_i32_0 = arith.constant 0 : i32
    %c0_i32_1 = arith.constant 0 : i32
    return %c0_i32, %c0_i32_0 : i32, i32
  }
  func.func @transform_7(%arg0: i32) -> (i32, i32) {
    %c0_i32 = arith.constant 0 : i32
    %c0_i32_0 = arith.constant 0 : i32
    %c0_i32_1 = arith.constant 0 : i32
    return %c0_i32, %c0_i32_0 : i32, i32
  }
  func.func @transform_8(%arg0: i32) -> (i32, i32) {
    %c0_i32 = arith.constant 0 : i32
    %c0_i32_0 = arith.constant 0 : i32
    %c0_i32_1 = arith.constant 0 : i32
    return %c0_i32, %c0_i32_0 : i32, i32
  }
  func.func @transform_9(%arg0: i32) -> (i32, i32, i32) {
    %c0_i32 = arith.constant 0 : i32
    %c0_i32_0 = arith.constant 0 : i32
    %c0_i32_1 = arith.constant 0 : i32
    return %arg0, %c0_i32, %c0_i32_0 : i32, i32, i32
  }
}

</mosaic_0001>

<llo_original>
// kernel: tpu_custom_call.1
$region0: #{tpu_custom_call.1}
  #allocation0 [shape = 'u32[]', space=smem, size = 0x4, offset = 0x4, fixed_abs, tag = 'smem constant byte address 0x4 - core index']
  #allocation1 [shape = 'u32[144,128]{1,0:T(1,128)}', space=vmem, size = 0x12000, scoped, tag = 'internal scratch']
  #allocation2 [shape = 'f32[1,1]{1,0:T(1,128)S(1)}', space=vmem, size = 0x200, scoped, tag = 'scoped memory for tpu_custom_call.1']
  %s0 = inlined_call_operand.vmem [shape: f32[512,32], index: 0, kind: input, shape index: {}]
  %s1 = inlined_call_operand.vmem [shape: f32[32,128], index: 1, kind: input, shape index: {}]
  %s2 = inlined_call_operand.vmem [shape: f32[1,128], index: 2, kind: input, shape index: {}]
  %s3 = inlined_call_operand.vmem [shape: f32[128,64], index: 3, kind: input, shape index: {}]
  %s4 = inlined_call_operand.vmem [shape: f32[1,64], index: 4, kind: input, shape index: {}]
  %s5 = inlined_call_operand.vmem [shape: f32[64,32], index: 5, kind: input, shape index: {}]
  %s6 = inlined_call_operand.vmem [shape: f32[1,32], index: 6, kind: input, shape index: {}]
  %s7 = inlined_call_operand.vmem [shape: f32[1,32], index: 7, kind: input, shape index: {}]
  %s8 = inlined_call_operand.<no memory space> [shape: f32[1,1], index: 8, kind: input, shape index: {}]
  %s9 = inlined_call_operand.hbm [shape: f32[2,1,256], index: 9, kind: output, shape index: {}]
  %s10 = sld [smem:[#allocation0]]
  $region69: #{tpu_custom_call.1} parent=0
    _
  %s12 = ssub.s32 1, %s10
  %s13 = scalar_select 0, %s12, %s10
  %v14 = vstv %s8
  %15 = vst [vmem:[#allocation2] sm:$0x1] %v14
  $region1: #{tpu_custom_call.1} parent=0
    #allocation3 [shape = 'u8[2048]{0}', space=vmem, size = 0x800, scoped, tag = 'output window, operand 0']
    #allocation4 [shape = 's32[2]{0}', space=sflag, size = 0x8, scoped, tag = 'scoped memory for tpu_custom_call.1']
    %16 = vsyncpa [#allocation4], 0
    %s17 = scalar_lea.sflag [#allocation4], 1
    %18 = vsyncpa %s17, 0
    loop: start=0, step=1, limit=4
    $region2: #{tpu_custom_call.1} parent=1 // loop_pre_header
      _
    $region3: #{tpu_custom_call.1} parent=1 // loop_header
      %s20 = sphi 0, %s24
      %p21 = scmp.ge.s32.totalorder %s20, 4
      %s30 = sphi 0, %s32
      %s33 = sphi 0, %s30
      %s34 = sphi 0, %s33
      %s50 = sphi 0, %s34
      %s54 = sphi 0, %s54
      %s56 = sphi 0, %s54
      %s57 = sphi 0, %s56
      %s71 = sphi 0, %s57
      %s75 = sphi 0, %s75
      %s77 = sphi 0, %s75
      %s78 = sphi 0, %s77
      %s92 = sphi 0, %s78
      %s96 = sphi 0, %s96
      %s98 = sphi 0, %s96
      %s99 = sphi 0, %s98
      %s113 = sphi 0, %s99
      %s117 = sphi 0, %s117
      %s119 = sphi 0, %s117
      %s120 = sphi 0, %s119
      %s134 = sphi 0, %s120
      %s138 = sphi 0, %s138
      %s140 = sphi 0, %s138
      %s141 = sphi 0, %s140
      %s155 = sphi 0, %s141
      %s159 = sphi 0, %s159
      %s161 = sphi 0, %s159
      %s162 = sphi 0, %s161
      %s176 = sphi 0, %s162
      %s180 = sphi 0, %s180
      %s182 = sphi 0, %s180
      %s183 = sphi 0, %s182
      %s197 = sphi 0, %s183
      %s201 = sphi 0, %s201
      %s203 = sphi 0, %s201
      %s204 = sphi 0, %s203
      %s218 = sphi 0, %s204
      %s224 = sphi 0, %s226
      %s227 = sphi 0, %s224
      %s228 = sphi 0, %s227
      %s244 = sphi 0, %s228
    $region4: #{tpu_custom_call.1} parent=1 // loop_header_branch
      %23 = sbr.rel (%p21) target = $region8
    $region5: #{tpu_custom_call.1} parent=1 // loop_body
      %s25 = ssub.s32 %s20, 1
      %s26 = ssub.s32 %s20, 2
      %s27 = sadd.s32 %s20, 1
      %s28 = ssub.s32 %s20, %s27
      %p29 = scmp.eq.s32.totalorder %s28, 0
      %s31 = sadd.s32 %s30, 1
      %s32 = scalar_select %p29, %s30, %s31
      %p35 = pneg %p29
      %p36 = scmp.eq.s32.totalorder %s20, 1
      %p37 = por %p35, %p36
      %p38 = scmp.ne.s32.totalorder %s30, %s33
      %p39 = scmp.eq.s32.totalorder %s20, 0
      %p40 = por %p38, %p39
      %p41 = scmp.ne.s32.totalorder %s30, %s33
      %p42 = scmp.eq.s32.totalorder %s25, 1
      %p43 = por %p41, %p42
      %p44 = scmp.ne.s32.totalorder %s33, %s34
      %p45 = scmp.eq.s32.totalorder %s25, 0
      %p46 = por %p44, %p45
      %p47 = scmp.ne.s32.totalorder %s33, %s34
      %p48 = scmp.eq.s32.totalorder %s26, 1
      %p49 = por %p47, %p48
      %p51 = scmp.ne.s32.totalorder %s34, %s50
      %p52 = scmp.eq.s32.totalorder %s26, 0
      %p53 = por %p51, %p52
      %s55 = sadd.s32 %s54, 1
      %p58 = scmp.eq.s32.totalorder %s20, 1
      %p59 = scmp.ne.s32.totalorder %s54, %s56
      %p60 = scmp.eq.s32.totalorder %s20, 0
      %p61 = por %p59, %p60
      %p62 = scmp.ne.s32.totalorder %s54, %s56
      %p63 = scmp.eq.s32.totalorder %s25, 1
      %p64 = por %p62, %p63
      %p65 = scmp.ne.s32.totalorder %s56, %s57
      %p66 = scmp.eq.s32.totalorder %s25, 0
      %p67 = por %p65, %p66
      %p68 = scmp.ne.s32.totalorder %s56, %s57
      %p69 = scmp.eq.s32.totalorder %s26, 1
      %p70 = por %p68, %p69
      %p72 = scmp.ne.s32.totalorder %s57, %s71
      %p73 = scmp.eq.s32.totalorder %s26, 0
      %p74 = por %p72, %p73
      %s76 = sadd.s32 %s75, 1
      %p79 = scmp.eq.s32.totalorder %s20, 1
      %p80 = scmp.ne.s32.totalorder %s75, %s77
      %p81 = scmp.eq.s32.totalorder %s20, 0
      %p82 = por %p80, %p81
      %p83 = scmp.ne.s32.totalorder %s75, %s77
      %p84 = scmp.eq.s32.totalorder %s25, 1
      %p85 = por %p83, %p84
      %p86 = scmp.ne.s32.totalorder %s77, %s78
      %p87 = scmp.eq.s32.totalorder %s25, 0
      %p88 = por %p86, %p87
      %p89 = scmp.ne.s32.totalorder %s77, %s78
      %p90 = scmp.eq.s32.totalorder %s26, 1
      %p91 = por %p89, %p90
      %p93 = scmp.ne.s32.totalorder %s78, %s92
      %p94 = scmp.eq.s32.totalorder %s26, 0
      %p95 = por %p93, %p94
      %s97 = sadd.s32 %s96, 1
      %p100 = scmp.eq.s32.totalorder %s20, 1
      %p101 = scmp.ne.s32.totalorder %s96, %s98
      %p102 = scmp.eq.s32.totalorder %s20, 0
      %p103 = por %p101, %p102
      %p104 = scmp.ne.s32.totalorder %s96, %s98
      %p105 = scmp.eq.s32.totalorder %s25, 1
      %p106 = por %p104, %p105
      %p107 = scmp.ne.s32.totalorder %s98, %s99
      %p108 = scmp.eq.s32.totalorder %s25, 0
      %p109 = por %p107, %p108
      %p110 = scmp.ne.s32.totalorder %s98, %s99
      %p111 = scmp.eq.s32.totalorder %s26, 1
      %p112 = por %p110, %p111
      %p114 = scmp.ne.s32.totalorder %s99, %s113
      %p115 = scmp.eq.s32.totalorder %s26, 0
      %p116 = por %p114, %p115
      %s118 = sadd.s32 %s117, 1
      %p121 = scmp.eq.s32.totalorder %s20, 1
      %p122 = scmp.ne.s32.totalorder %s117, %s119
      %p123 = scmp.eq.s32.totalorder %s20, 0
      %p124 = por %p122, %p123
      %p125 = scmp.ne.s32.totalorder %s117, %s119
      %p126 = scmp.eq.s32.totalorder %s25, 1
      %p127 = por %p125, %p126
      %p128 = scmp.ne.s32.totalorder %s119, %s120
      %p129 = scmp.eq.s32.totalorder %s25, 0
      %p130 = por %p128, %p129
      %p131 = scmp.ne.s32.totalorder %s119, %s120
      %p132 = scmp.eq.s32.totalorder %s26, 1
      %p133 = por %p131, %p132
      %p135 = scmp.ne.s32.totalorder %s120, %s134
      %p136 = scmp.eq.s32.totalorder %s26, 0
      %p137 = por %p135, %p136
      %s139 = sadd.s32 %s138, 1
      %p142 = scmp.eq.s32.totalorder %s20, 1
      %p143 = scmp.ne.s32.totalorder %s138, %s140
      %p144 = scmp.eq.s32.totalorder %s20, 0
      %p145 = por %p143, %p144
      %p146 = scmp.ne.s32.totalorder %s138, %s140
      %p147 = scmp.eq.s32.totalorder %s25, 1
      %p148 = por %p146, %p147
      %p149 = scmp.ne.s32.totalorder %s140, %s141
      %p150 = scmp.eq.s32.totalorder %s25, 0
      %p151 = por %p149, %p150
      %p152 = scmp.ne.s32.totalorder %s140, %s141
      %p153 = scmp.eq.s32.totalorder %s26, 1
      %p154 = por %p152, %p153
      %p156 = scmp.ne.s32.totalorder %s141, %s155
      %p157 = scmp.eq.s32.totalorder %s26, 0
      %p158 = por %p156, %p157
      %s160 = sadd.s32 %s159, 1
      %p163 = scmp.eq.s32.totalorder %s20, 1
      %p164 = scmp.ne.s32.totalorder %s159, %s161
      %p165 = scmp.eq.s32.totalorder %s20, 0
      %p166 = por %p164, %p165
      %p167 = scmp.ne.s32.totalorder %s159, %s161
      %p168 = scmp.eq.s32.totalorder %s25, 1
      %p169 = por %p167, %p168
      %p170 = scmp.ne.s32.totalorder %s161, %s162
      %p171 = scmp.eq.s32.totalorder %s25, 0
      %p172 = por %p170, %p171
      %p173 = scmp.ne.s32.totalorder %s161, %s162
      %p174 = scmp.eq.s32.totalorder %s26, 1
      %p175 = por %p173, %p174
      %p177 = scmp.ne.s32.totalorder %s162, %s176
      %p178 = scmp.eq.s32.totalorder %s26, 0
      %p179 = por %p177, %p178
      %s181 = sadd.s32 %s180, 1
      %p184 = scmp.eq.s32.totalorder %s20, 1
      %p185 = scmp.ne.s32.totalorder %s180, %s182
      %p186 = scmp.eq.s32.totalorder %s20, 0
      %p187 = por %p185, %p186
      %p188 = scmp.ne.s32.totalorder %s180, %s182
      %p189 = scmp.eq.s32.totalorder %s25, 1
      %p190 = por %p188, %p189
      %p191 = scmp.ne.s32.totalorder %s182, %s183
      %p192 = scmp.eq.s32.totalorder %s25, 0
      %p193 = por %p191, %p192
      %p194 = scmp.ne.s32.totalorder %s182, %s183
      %p195 = scmp.eq.s32.totalorder %s26, 1
      %p196 = por %p194, %p195
      %p198 = scmp.ne.s32.totalorder %s183, %s197
      %p199 = scmp.eq.s32.totalorder %s26, 0
      %p200 = por %p198, %p199
      %s202 = sadd.s32 %s201, 1
      %p205 = scmp.eq.s32.totalorder %s20, 1
      %p206 = scmp.ne.s32.totalorder %s201, %s203
      %p207 = scmp.eq.s32.totalorder %s20, 0
      %p208 = por %p206, %p207
      %p209 = scmp.ne.s32.totalorder %s201, %s203
      %p210 = scmp.eq.s32.totalorder %s25, 1
      %p211 = por %p209, %p210
      %p212 = scmp.ne.s32.totalorder %s203, %s204
      %p213 = scmp.eq.s32.totalorder %s25, 0
      %p214 = por %p212, %p213
      %p215 = scmp.ne.s32.totalorder %s203, %s204
      %p216 = scmp.eq.s32.totalorder %s26, 1
      %p217 = por %p215, %p216
      %p219 = scmp.ne.s32.totalorder %s204, %s218
      %p220 = scmp.eq.s32.totalorder %s26, 0
      %p221 = por %p219, %p220
      %s222 = ssub.s32 %s20, %s27
      %p223 = scmp.eq.s32.totalorder %s222, 0
      %s225 = sadd.s32 %s224, 1
      %s226 = scalar_select %p223, %s224, %s225
      %p229 = pneg %p223
      %p230 = scmp.eq.s32.totalorder %s20, 1
      %p231 = por %p229, %p230
      %p232 = scmp.ne.s32.totalorder %s224, %s227
      %p233 = scmp.eq.s32.totalorder %s20, 0
      %p234 = por %p232, %p233
      %p235 = scmp.ne.s32.totalorder %s224, %s227
      %p236 = scmp.eq.s32.totalorder %s25, 1
      %p237 = por %p235, %p236
      %p238 = scmp.ne.s32.totalorder %s227, %s228
      %p239 = scmp.eq.s32.totalorder %s25, 0
      %p240 = por %p238, %p239
      %p241 = scmp.ne.s32.totalorder %s227, %s228
      %p242 = scmp.eq.s32.totalorder %s26, 1
      %p243 = por %p241, %p242
      %p245 = scmp.ne.s32.totalorder %s228, %s244
      %p246 = scmp.eq.s32.totalorder %s26, 0
      %p247 = por %p245, %p246
      %p248 = scmp.le.s32.totalorder 1, %s20
      %p249 = scmp.lt.s32.totalorder %s20, 3
      %p250 = pnand %p248, %p249
      %p251 = pneg %p250
      // Predicated region
      $region9: #{tpu_custom_call.1} parent=5 // pred_check
        _
      $region10: #{tpu_custom_call.1} parent=5 // pred_check_branch
        %253 = sbr.rel (%p250) target = $region12
      $region11: #{tpu_custom_call.1} parent=5 // pred_region
        %s254 = ssub.s32 %s20, 1
        // Predicated region
        $region13: #{tpu_custom_call.1} parent=11 // pred_check
          %p255 = pneg %p67
        $region14: #{tpu_custom_call.1} parent=11 // pred_check_branch
          %257 = sbr.rel (%p255) target = $region16
        $region15: #{tpu_custom_call.1} parent=11 // pred_region
          _
        $region16: #{tpu_custom_call.1} parent=11 // pred_fallthru
          _
        // Predicated region
        $region17: #{tpu_custom_call.1} parent=11 // pred_check
          %p258 = pneg %p88
        $region18: #{tpu_custom_call.1} parent=11 // pred_check_branch
          %260 = sbr.rel (%p258) target = $region20
        $region19: #{tpu_custom_call.1} parent=11 // pred_region
          _
        $region20: #{tpu_custom_call.1} parent=11 // pred_fallthru
          _
        // Predicated region
        $region21: #{tpu_custom_call.1} parent=11 // pred_check
          %p261 = pneg %p109
        $region22: #{tpu_custom_call.1} parent=11 // pred_check_branch
          %263 = sbr.rel (%p261) target = $region24
        $region23: #{tpu_custom_call.1} parent=11 // pred_region
          _
        $region24: #{tpu_custom_call.1} parent=11 // pred_fallthru
          _
        // Predicated region
        $region25: #{tpu_custom_call.1} parent=11 // pred_check
          %p264 = pneg %p130
        $region26: #{tpu_custom_call.1} parent=11 // pred_check_branch
          %266 = sbr.rel (%p264) target = $region28
        $region27: #{tpu_custom_call.1} parent=11 // pred_region
          _
        $region28: #{tpu_custom_call.1} parent=11 // pred_fallthru
          _
        // Predicated region
        $region29: #{tpu_custom_call.1} parent=11 // pred_check
          %p267 = pneg %p151
        $region30: #{tpu_custom_call.1} parent=11 // pred_check_branch
          %269 = sbr.rel (%p267) target = $region32
        $region31: #{tpu_custom_call.1} parent=11 // pred_region
          _
        $region32: #{tpu_custom_call.1} parent=11 // pred_fallthru
          _
        // Predicated region
        $region33: #{tpu_custom_call.1} parent=11 // pred_check
          %p270 = pneg %p172
        $region34: #{tpu_custom_call.1} parent=11 // pred_check_branch
          %272 = sbr.rel (%p270) target = $region36
        $region35: #{tpu_custom_call.1} parent=11 // pred_region
          _
        $region36: #{tpu_custom_call.1} parent=11 // pred_fallthru
          _
        // Predicated region
        $region37: #{tpu_custom_call.1} parent=11 // pred_check
          %p273 = pneg %p193
        $region38: #{tpu_custom_call.1} parent=11 // pred_check_branch
          %275 = sbr.rel (%p273) target = $region40
        $region39: #{tpu_custom_call.1} parent=11 // pred_region
          _
        $region40: #{tpu_custom_call.1} parent=11 // pred_fallthru
          _
        // Predicated region
        $region41: #{tpu_custom_call.1} parent=11 // pred_check
          %p276 = pneg %p214
        $region42: #{tpu_custom_call.1} parent=11 // pred_check_branch
          %278 = sbr.rel (%p276) target = $region44
        $region43: #{tpu_custom_call.1} parent=11 // pred_region
          _
        $region44: #{tpu_custom_call.1} parent=11 // pred_fallthru
          _
      $region12: #{tpu_custom_call.1} parent=5 // pred_fallthru
        _
      %p279 = scmp.lt.s32.totalorder %s20, 2
      // Predicated region
      $region45: #{tpu_custom_call.1} parent=5 // pred_check
        %p280 = pneg %p279
      $region46: #{tpu_custom_call.1} parent=5 // pred_check_branch
        %282 = sbr.rel (%p280) target = $region48
      $region47: #{tpu_custom_call.1} parent=5 // pred_region
        // Predicated region
        $region49: #{tpu_custom_call.1} parent=47 // pred_check
          %p283 = pneg %p40
        $region50: #{tpu_custom_call.1} parent=47 // pred_check_branch
          %285 = sbr.rel (%p283) target = $region52
        $region51: #{tpu_custom_call.1} parent=47 // pred_region
          %s286 = smul.u32 32, %s20
          %p287 = scmp.lt.s32.totalorder %s286, 63
          %s288 = scalar_select %p287, %s286, 63
          %s289 = smul.addr %s288, 8
          %s290 = scalar_lea.vmem %s0, %s289
          %s291 = smul.u32 32, %s20
        $region52: #{tpu_custom_call.1} parent=47 // pred_fallthru
          _
      $region48: #{tpu_custom_call.1} parent=5 // pred_fallthru
        _
      %p292 = scmp.le.s32.totalorder 1, %s20
      %p293 = scmp.lt.s32.totalorder %s20, 3
      %p294 = pnand %p292, %p293
      %p295 = pneg %p294
      // Predicated region
      $region53: #{tpu_custom_call.1} parent=5 // pred_check
        _
      $region54: #{tpu_custom_call.1} parent=5 // pred_check_branch
        %297 = sbr.rel (%p294) target = $region56
      $region55: #{tpu_custom_call.1} parent=5 // pred_region
        %s298 = ssub.s32 %s20, 1
        %s299 = smul.u32 32, %s25
        %p300 = scmp.lt.s32.totalorder %s299, 63
        %s301 = scalar_select %p300, %s299, 63
        %s302 = smul.addr %s301, 8
        %s303 = scalar_lea.vmem %s0, %s302
        %p304 = pneg %p46
        %p305 = pneg %p43
        %p306 = pneg %p67
        %p307 = pneg %p64
        %p308 = pneg %p88
        %p309 = pneg %p85
        %p310 = pneg %p109
        %p311 = pneg %p106
        %p312 = pneg %p130
        %p313 = pneg %p127
        %p314 = pneg %p151
        %p315 = pneg %p148
        %p316 = pneg %p172
        %p317 = pneg %p169
        %p318 = pneg %p193
        %p319 = pneg %p190
        %p320 = pneg %p214
        %p321 = pneg %p211
        %p322 = pneg %p240
        %p323 = pneg %p237
        %s324 = sand.u32 %s227, 1
        %s325 = scalar_lea.sflag [#allocation4], %s324
        %s326 = sand.u32 %s227, 1
        %s327 = smul.addr %s326, 2
        %s328 = scalar_lea.vmem [#allocation3], %s327
        %s329 = smul.u32 32, %s25
        %p330 = scmp.lt.s32.totalorder %s329, 63
        %s331 = scalar_select %p330, %s329, 63
        %s332 = smul.addr %s331, 8
        %s333 = scalar_lea.vmem %s0, %s332
        %s334 = smul.u32 32, %s25
        %v335 = vld [vmem:[%s333] sm:$0xff]
        %v336 = vld [vmem:[%s333 + $0x8] sm:$0xff]
        %v337 = vld [vmem:[%s333 + $0x10] sm:$0xff]
        %v338 = vld [vmem:[%s333 + $0x18] sm:$0xff]
        %v339 = vld [vmem:[%s333 + $0x20] sm:$0xff]
        %v340 = vld [vmem:[%s333 + $0x28] sm:$0xff]
        %v341 = vld [vmem:[%s333 + $0x30] sm:$0xff]
        %v342 = vld [vmem:[%s333 + $0x38] sm:$0xff]
        %v343 = vld [vmem:[%s333 + $0x40] sm:$0xff]
        %v344 = vld [vmem:[%s333 + $0x48] sm:$0xff]
        %v345 = vld [vmem:[%s333 + $0x50] sm:$0xff]
        %v346 = vld [vmem:[%s333 + $0x58] sm:$0xff]
        %v347 = vld [vmem:[%s333 + $0x60] sm:$0xff]
        %v348 = vld [vmem:[%s333 + $0x68] sm:$0xff]
        %v349 = vld [vmem:[%s333 + $0x70] sm:$0xff]
        %v350 = vld [vmem:[%s333 + $0x78] sm:$0xff]
        %v351 = vld [vmem:[%s333 + $0x80] sm:$0xff]
        %v352 = vld [vmem:[%s333 + $0x88] sm:$0xff]
        %v353 = vld [vmem:[%s333 + $0x90] sm:$0xff]
        %v354 = vld [vmem:[%s333 + $0x98] sm:$0xff]
        %v355 = vld [vmem:[%s333 + $0xa0] sm:$0xff]
        %v356 = vld [vmem:[%s333 + $0xa8] sm:$0xff]
        %v357 = vld [vmem:[%s333 + $0xb0] sm:$0xff]
        %v358 = vld [vmem:[%s333 + $0xb8] sm:$0xff]
        %v359 = vld [vmem:[%s333 + $0xc0] sm:$0xff]
        %v360 = vld [vmem:[%s333 + $0xc8] sm:$0xff]
        %v361 = vld [vmem:[%s333 + $0xd0] sm:$0xff]
        %v362 = vld [vmem:[%s333 + $0xd8] sm:$0xff]
        %v363 = vld [vmem:[%s333 + $0xe0] sm:$0xff]
        %v364 = vld [vmem:[%s333 + $0xe8] sm:$0xff]
        %v365 = vld [vmem:[%s333 + $0xf0] sm:$0xff]
        %v366 = vld [vmem:[%s333 + $0xf8] sm:$0xff]
        %v367 = vld [vmem:[%s1] sm:$0xff]
        %v368 = vld [vmem:[%s1 + $0x8] sm:$0xff]
        %v369 = vld [vmem:[%s1 + $0x10] sm:$0xff]
        %v370 = vld [vmem:[%s1 + $0x18] sm:$0xff]
        %v371 = vld [vmem:[%s2] sm:$0x1]
        %v373 = vlaneseq
        %v374 = vshrl.u32 %v373, 7
        %v375 = vsub.s32 0, %v374
        %v376 = vrot.slane %v371, %v375
        %vm378 = vcmask 261120
        %v380 = vsel %vm378, %v335, 0
        %v383 = vsel %vm378, %v336, 0
        %v386 = vsel %vm378, %v337, 0
        %v389 = vsel %vm378, %v338, 0
        %v392 = vsel %vm378, %v339, 0
        %v395 = vsel %vm378, %v340, 0
        %v398 = vsel %vm378, %v341, 0
        %v401 = vsel %vm378, %v342, 0
        %v404 = vsel %vm378, %v343, 0
        %v407 = vsel %vm378, %v344, 0
        %v410 = vsel %vm378, %v345, 0
        %v413 = vsel %vm378, %v346, 0
        %v416 = vsel %vm378, %v347, 0
        %v419 = vsel %vm378, %v348, 0
        %v422 = vsel %vm378, %v349, 0
        %v425 = vsel %vm378, %v350, 0
        %v428 = vsel %vm378, %v351, 0
        %v431 = vsel %vm378, %v352, 0
        %v434 = vsel %vm378, %v353, 0
        %v437 = vsel %vm378, %v354, 0
        %v440 = vsel %vm378, %v355, 0
        %v443 = vsel %vm378, %v356, 0
        %v446 = vsel %vm378, %v357, 0
        %v449 = vsel %vm378, %v358, 0
        %v452 = vsel %vm378, %v359, 0
        %v455 = vsel %vm378, %v360, 0
        %v458 = vsel %vm378, %v361, 0
        %v461 = vsel %vm378, %v362, 0
        %v464 = vsel %vm378, %v363, 0
        %v467 = vsel %vm378, %v364, 0
        %v470 = vsel %vm378, %v365, 0
        %v473 = vsel %vm378, %v366, 0
        %475 = vmatprep.subr.mxu0 0.0
        %476 = vmatpush1.msra.mxu0 0.0
        %477 = vmatprep.subr.mxu0 0.0
        %478 = vmatpush1.msra.mxu0 0.0
        %479 = vmatprep.subr.mxu0 0.0
        %480 = vmatpush1.msra.mxu0 0.0
        %481 = vmatprep.subr.mxu0 0.0
        %482 = vmatpush1.msra.mxu0 0.0
        %483 = vmatprep.subr.mxu0 0.0
        %484 = vmatpush1.msra.mxu0 0.0
        %485 = vmatprep.subr.mxu0 0.0
        %486 = vmatpush1.msra.mxu0 0.0
        %487 = vmatprep.subr.mxu0 0.0
        %488 = vmatpush1.msra.mxu0 0.0
        %489 = vmatprep.subr.mxu0 0.0
        %490 = vmatpush1.msra.mxu0 0.0
        %491 = vmatprep.subr.mxu0 0.0
        %492 = vmatpush1.msra.mxu0 0.0
        %493 = vmatprep.subr.mxu0 0.0
        %494 = vmatpush1.msra.mxu0 0.0
        %495 = vmatprep.subr.mxu0 0.0
        %496 = vmatpush1.msra.mxu0 0.0
        %497 = vmatprep.subr.mxu0 0.0
        %498 = vmatpush1.msra.mxu0 0.0
        %499 = vmatprep.subr.mxu0 0.0
        %500 = vmatpush1.msra.mxu0 %v370
        %501 = vmatprep.subr.mxu0 0.0
        %502 = vmatpush1.msra.mxu0 %v369
        %503 = vmatprep.subr.mxu0 0.0
        %504 = vmatpush1.msra.mxu0 %v368
        %505 = vmatprep.subr.mxu0 0.0
        %506 = vmatpush1.msra.mxu0 %v367
        %507 = vmatprep.subr.mxu0 0.0
        %508 = vmatpush2.msra.mxu0 0.0
        %509 = vmatprep.subr.mxu0 0.0
        %510 = vmatpush2.msra.mxu0 0.0
        %511 = vmatprep.subr.mxu0 0.0
        %512 = vmatpush2.msra.mxu0 0.0
        %513 = vmatprep.subr.mxu0 0.0
        %514 = vmatpush2.msra.mxu0 0.0
        %515 = vmatprep.subr.mxu0 0.0
        %516 = vmatpush2.msra.mxu0 0.0
        %517 = vmatprep.subr.mxu0 0.0
        %518 = vmatpush2.msra.mxu0 0.0
        %519 = vmatprep.subr.mxu0 0.0
        %520 = vmatpush2.msra.mxu0 0.0
        %521 = vmatprep.subr.mxu0 0.0
        %522 = vmatpush2.msra.mxu0 0.0
        %523 = vmatprep.subr.mxu0 0.0
        %524 = vmatpush2.msra.mxu0 0.0
        %525 = vmatprep.subr.mxu0 0.0
        %526 = vmatpush2.msra.mxu0 0.0
        %527 = vmatprep.subr.mxu0 0.0
        %528 = vmatpush2.msra.mxu0 0.0
        %529 = vmatprep.subr.mxu0 0.0
        %530 = vmatpush2.msra.mxu0 0.0
        %531 = vmatprep.subr.mxu0 0.0
        %532 = vmatpush2.msra.mxu0 0.0
        %533 = vmatprep.subr.mxu0 0.0
        %534 = vmatpush2.msra.mxu0 0.0
        %535 = vmatprep.subr.mxu0 0.0
        %536 = vmatpush2.msra.mxu0 0.0
        %537 = vmatprep.subr.mxu0 0.0
        %538 = vmatpush2.msra.mxu0 0.0
        %539 = vmatprep.mubr.f32.mxu0 0.0
        %540 = vmatmul.mubr.f32.gmra.mxu0 %v380
        %v541 = vpop.f32.mrf.mxu0
        %v542 = vadd.f32 %v376, %v541
        %v543 = vpop.f32.mrf.mxu0
        %544 = vmatprep.mubr.f32.mxu0 0.0
        %545 = vmatmul.mubr.f32.gmra.mxu0 %v383
        %v546 = vpop.f32.mrf.mxu0
        %v547 = vadd.f32 %v376, %v546
        %v548 = vpop.f32.mrf.mxu0
        %549 = vmatprep.mubr.f32.mxu0 0.0
        %550 = vmatmul.mubr.f32.gmra.mxu0 %v386
        %v551 = vpop.f32.mrf.mxu0
        %v552 = vadd.f32 %v376, %v551
        %v553 = vpop.f32.mrf.mxu0
        %554 = vmatprep.mubr.f32.mxu0 0.0
        %555 = vmatmul.mubr.f32.gmra.mxu0 %v389
        %v556 = vpop.f32.mrf.mxu0
        %v557 = vadd.f32 %v376, %v556
        %v558 = vpop.f32.mrf.mxu0
        %559 = vmatprep.mubr.f32.mxu0 0.0
        %560 = vmatmul.mubr.f32.gmra.mxu0 %v392
        %v561 = vpop.f32.mrf.mxu0
        %v562 = vadd.f32 %v376, %v561
        %v563 = vpop.f32.mrf.mxu0
        %564 = vmatprep.mubr.f32.mxu0 0.0
        %565 = vmatmul.mubr.f32.gmra.mxu0 %v395
        %v566 = vpop.f32.mrf.mxu0
        %v567 = vadd.f32 %v376, %v566
        %v568 = vpop.f32.mrf.mxu0
        %569 = vmatprep.mubr.f32.mxu0 0.0
        %570 = vmatmul.mubr.f32.gmra.mxu0 %v398
        %v571 = vpop.f32.mrf.mxu0
        %v572 = vadd.f32 %v376, %v571
        %v573 = vpop.f32.mrf.mxu0
        %574 = vmatprep.mubr.f32.mxu0 0.0
        %575 = vmatmul.mubr.f32.gmra.mxu0 %v401
        %v576 = vpop.f32.mrf.mxu0
        %v577 = vadd.f32 %v376, %v576
        %v578 = vpop.f32.mrf.mxu0
        %579 = vmatprep.mubr.f32.mxu0 0.0
        %580 = vmatmul.mubr.f32.gmra.mxu0 %v404
        %v581 = vpop.f32.mrf.mxu0
        %v582 = vadd.f32 %v376, %v581
        %v583 = vpop.f32.mrf.mxu0
        %584 = vmatprep.mubr.f32.mxu0 0.0
        %585 = vmatmul.mubr.f32.gmra.mxu0 %v407
        %v586 = vpop.f32.mrf.mxu0
        %v587 = vadd.f32 %v376, %v586
        %v588 = vpop.f32.mrf.mxu0
        %589 = vmatprep.mubr.f32.mxu0 0.0
        %590 = vmatmul.mubr.f32.gmra.mxu0 %v410
        %v591 = vpop.f32.mrf.mxu0
        %v592 = vadd.f32 %v376, %v591
        %v593 = vpop.f32.mrf.mxu0
        %594 = vmatprep.mubr.f32.mxu0 0.0
        %595 = vmatmul.mubr.f32.gmra.mxu0 %v413
        %v596 = vpop.f32.mrf.mxu0
        %v597 = vadd.f32 %v376, %v596
        %v598 = vpop.f32.mrf.mxu0
        %599 = vmatprep.mubr.f32.mxu0 0.0
        %600 = vmatmul.mubr.f32.gmra.mxu0 %v416
        %v601 = vpop.f32.mrf.mxu0
        %v602 = vadd.f32 %v376, %v601
        %v603 = vpop.f32.mrf.mxu0
        %604 = vmatprep.mubr.f32.mxu0 0.0
        %605 = vmatmul.mubr.f32.gmra.mxu0 %v419
        %v606 = vpop.f32.mrf.mxu0
        %v607 = vadd.f32 %v376, %v606
        %v608 = vpop.f32.mrf.mxu0
        %609 = vmatprep.mubr.f32.mxu0 0.0
        %610 = vmatmul.mubr.f32.gmra.mxu0 %v422
        %v611 = vpop.f32.mrf.mxu0
        %v612 = vadd.f32 %v376, %v611
        %v613 = vpop.f32.mrf.mxu0
        %614 = vmatprep.mubr.f32.mxu0 0.0
        %615 = vmatmul.mubr.f32.gmra.mxu0 %v425
        %v616 = vpop.f32.mrf.mxu0
        %v617 = vadd.f32 %v376, %v616
        %v618 = vpop.f32.mrf.mxu0
        %619 = vmatprep.mubr.f32.mxu0 0.0
        %620 = vmatmul.mubr.f32.gmra.mxu0 %v428
        %v621 = vpop.f32.mrf.mxu0
        %v622 = vadd.f32 %v376, %v621
        %v623 = vpop.f32.mrf.mxu0
        %624 = vmatprep.mubr.f32.mxu0 0.0
        %625 = vmatmul.mubr.f32.gmra.mxu0 %v431
        %v626 = vpop.f32.mrf.mxu0
        %v627 = vadd.f32 %v376, %v626
        %v628 = vpop.f32.mrf.mxu0
        %629 = vmatprep.mubr.f32.mxu0 0.0
        %630 = vmatmul.mubr.f32.gmra.mxu0 %v434
        %v631 = vpop.f32.mrf.mxu0
        %v632 = vadd.f32 %v376, %v631
        %v633 = vpop.f32.mrf.mxu0
        %634 = vmatprep.mubr.f32.mxu0 0.0
        %635 = vmatmul.mubr.f32.gmra.mxu0 %v437
        %v636 = vpop.f32.mrf.mxu0
        %v637 = vadd.f32 %v376, %v636
        %v638 = vpop.f32.mrf.mxu0
        %639 = vmatprep.mubr.f32.mxu0 0.0
        %640 = vmatmul.mubr.f32.gmra.mxu0 %v440
        %v641 = vpop.f32.mrf.mxu0
        %v642 = vadd.f32 %v376, %v641
        %v643 = vpop.f32.mrf.mxu0
        %644 = vmatprep.mubr.f32.mxu0 0.0
        %645 = vmatmul.mubr.f32.gmra.mxu0 %v443
        %v646 = vpop.f32.mrf.mxu0
        %v647 = vadd.f32 %v376, %v646
        %v648 = vpop.f32.mrf.mxu0
        %649 = vmatprep.mubr.f32.mxu0 0.0
        %650 = vmatmul.mubr.f32.gmra.mxu0 %v446
        %v651 = vpop.f32.mrf.mxu0
        %v652 = vadd.f32 %v376, %v651
        %v653 = vpop.f32.mrf.mxu0
        %654 = vmatprep.mubr.f32.mxu0 0.0
        %655 = vmatmul.mubr.f32.gmra.mxu0 %v449
        %v656 = vpop.f32.mrf.mxu0
        %v657 = vadd.f32 %v376, %v656
        %v658 = vpop.f32.mrf.mxu0
        %659 = vmatprep.mubr.f32.mxu0 0.0
        %660 = vmatmul.mubr.f32.gmra.mxu0 %v452
        %v661 = vpop.f32.mrf.mxu0
        %v662 = vadd.f32 %v376, %v661
        %v663 = vpop.f32.mrf.mxu0
        %664 = vmatprep.mubr.f32.mxu0 0.0
        %665 = vmatmul.mubr.f32.gmra.mxu0 %v455
        %v666 = vpop.f32.mrf.mxu0
        %v667 = vadd.f32 %v376, %v666
        %v668 = vpop.f32.mrf.mxu0
        %669 = vmatprep.mubr.f32.mxu0 0.0
        %670 = vmatmul.mubr.f32.gmra.mxu0 %v458
        %v671 = vpop.f32.mrf.mxu0
        %v672 = vadd.f32 %v376, %v671
        %v673 = vpop.f32.mrf.mxu0
        %674 = vmatprep.mubr.f32.mxu0 0.0
        %675 = vmatmul.mubr.f32.gmra.mxu0 %v461
        %v676 = vpop.f32.mrf.mxu0
        %v677 = vadd.f32 %v376, %v676
        %v678 = vpop.f32.mrf.mxu0
        %679 = vmatprep.mubr.f32.mxu0 0.0
        %680 = vmatmul.mubr.f32.gmra.mxu0 %v464
        %v681 = vpop.f32.mrf.mxu0
        %v682 = vadd.f32 %v376, %v681
        %v683 = vpop.f32.mrf.mxu0
        %684 = vmatprep.mubr.f32.mxu0 0.0
        %685 = vmatmul.mubr.f32.gmra.mxu0 %v467
        %v686 = vpop.f32.mrf.mxu0
        %v687 = vadd.f32 %v376, %v686
        %v688 = vpop.f32.mrf.mxu0
        %689 = vmatprep.mubr.f32.mxu0 0.0
        %690 = vmatmul.mubr.f32.gmra.mxu0 %v470
        %v691 = vpop.f32.mrf.mxu0
        %v692 = vadd.f32 %v376, %v691
        %v693 = vpop.f32.mrf.mxu0
        %694 = vmatprep.mubr.f32.mxu0 0.0
        %695 = vmatmul.mubr.f32.gmra.mxu0 %v473
        %v696 = vpop.f32.mrf.mxu0
        %v697 = vadd.f32 %v376, %v696
        %v698 = vpop.f32.mrf.mxu0
        %699 = vdwg.mxu0
        %v700 = vmax.f32 %v542, 0.0
        %v701 = vmax.f32 %v547, 0.0
        %v702 = vmax.f32 %v552, 0.0
        %v703 = vmax.f32 %v557, 0.0
        %v704 = vmax.f32 %v562, 0.0
        %v705 = vmax.f32 %v567, 0.0
        %v706 = vmax.f32 %v572, 0.0
        %v707 = vmax.f32 %v577, 0.0
        %v708 = vmax.f32 %v582, 0.0
        %v709 = vmax.f32 %v587, 0.0
        %v710 = vmax.f32 %v592, 0.0
        %v711 = vmax.f32 %v597, 0.0
        %v712 = vmax.f32 %v602, 0.0
        %v713 = vmax.f32 %v607, 0.0
        %v714 = vmax.f32 %v612, 0.0
        %v715 = vmax.f32 %v617, 0.0
        %v716 = vmax.f32 %v622, 0.0
        %v717 = vmax.f32 %v627, 0.0
        %v718 = vmax.f32 %v632, 0.0
        %v719 = vmax.f32 %v637, 0.0
        %v720 = vmax.f32 %v642, 0.0
        %v721 = vmax.f32 %v647, 0.0
        %v722 = vmax.f32 %v652, 0.0
        %v723 = vmax.f32 %v657, 0.0
        %v724 = vmax.f32 %v662, 0.0
        %v725 = vmax.f32 %v667, 0.0
        %v726 = vmax.f32 %v672, 0.0
        %v727 = vmax.f32 %v677, 0.0
        %v728 = vmax.f32 %v682, 0.0
        %v729 = vmax.f32 %v687, 0.0
        %v730 = vmax.f32 %v692, 0.0
        %v731 = vmax.f32 %v697, 0.0
        %v732 = vld [vmem:[%s3] sm:$0xff]
        %v733 = vld [vmem:[%s3 + $0x8] sm:$0xff]
        %v734 = vld [vmem:[%s3 + $0x10] sm:$0xff]
        %v735 = vld [vmem:[%s3 + $0x18] sm:$0xff]
        %v736 = vld [vmem:[%s3 + $0x20] sm:$0xff]
        %v737 = vld [vmem:[%s3 + $0x28] sm:$0xff]
        %v738 = vld [vmem:[%s3 + $0x30] sm:$0xff]
        %v739 = vld [vmem:[%s3 + $0x38] sm:$0xff]
        %v740 = vld [vmem:[%s3 + $0x40] sm:$0xff]
        %v741 = vld [vmem:[%s3 + $0x48] sm:$0xff]
        %v742 = vld [vmem:[%s3 + $0x50] sm:$0xff]
        %v743 = vld [vmem:[%s3 + $0x58] sm:$0xff]
        %v744 = vld [vmem:[%s3 + $0x60] sm:$0xff]
        %v745 = vld [vmem:[%s3 + $0x68] sm:$0xff]
        %v746 = vld [vmem:[%s3 + $0x70] sm:$0xff]
        %v747 = vld [vmem:[%s3 + $0x78] sm:$0xff]
        %v748 = vld [vmem:[%s4] sm:$0x1]
        %v750 = vlaneseq
        %v751 = vshrl.u32 %v750, 7
        %v752 = vsub.s32 0, %v751
        %v753 = vrot.slane %v748, %v752
        %755 = vmatprep.subr.mxu0 0.0
        %756 = vmatpush1.msra.mxu0 %v747
        %757 = vmatprep.subr.mxu0 0.0
        %758 = vmatpush1.msra.mxu0 %v746
        %759 = vmatprep.subr.mxu0 0.0
        %760 = vmatpush1.msra.mxu0 %v745
        %761 = vmatprep.subr.mxu0 0.0
        %762 = vmatpush1.msra.mxu0 %v744
        %763 = vmatprep.subr.mxu0 0.0
        %764 = vmatpush1.msra.mxu0 %v743
        %765 = vmatprep.subr.mxu0 0.0
        %766 = vmatpush1.msra.mxu0 %v742
        %767 = vmatprep.subr.mxu0 0.0
        %768 = vmatpush1.msra.mxu0 %v741
        %769 = vmatprep.subr.mxu0 0.0
        %770 = vmatpush1.msra.mxu0 %v740
        %771 = vmatprep.subr.mxu0 0.0
        %772 = vmatpush1.msra.mxu0 %v739
        %773 = vmatprep.subr.mxu0 0.0
        %774 = vmatpush1.msra.mxu0 %v738
        %775 = vmatprep.subr.mxu0 0.0
        %776 = vmatpush1.msra.mxu0 %v737
        %777 = vmatprep.subr.mxu0 0.0
        %778 = vmatpush1.msra.mxu0 %v736
        %779 = vmatprep.subr.mxu0 0.0
        %780 = vmatpush1.msra.mxu0 %v735
        %781 = vmatprep.subr.mxu0 0.0
        %782 = vmatpush1.msra.mxu0 %v734
        %783 = vmatprep.subr.mxu0 0.0
        %784 = vmatpush1.msra.mxu0 %v733
        %785 = vmatprep.subr.mxu0 0.0
        %786 = vmatpush1.msra.mxu0 %v732
        %787 = vmatprep.subr.mxu0 0.0
        %788 = vmatpush2.msra.mxu0 0.0
        %789 = vmatprep.subr.mxu0 0.0
        %790 = vmatpush2.msra.mxu0 0.0
        %791 = vmatprep.subr.mxu0 0.0
        %792 = vmatpush2.msra.mxu0 0.0
        %793 = vmatprep.subr.mxu0 0.0
        %794 = vmatpush2.msra.mxu0 0.0
        %795 = vmatprep.subr.mxu0 0.0
        %796 = vmatpush2.msra.mxu0 0.0
        %797 = vmatprep.subr.mxu0 0.0
        %798 = vmatpush2.msra.mxu0 0.0
        %799 = vmatprep.subr.mxu0 0.0
        %800 = vmatpush2.msra.mxu0 0.0
        %801 = vmatprep.subr.mxu0 0.0
        %802 = vmatpush2.msra.mxu0 0.0
        %803 = vmatprep.subr.mxu0 0.0
        %804 = vmatpush2.msra.mxu0 0.0
        %805 = vmatprep.subr.mxu0 0.0
        %806 = vmatpush2.msra.mxu0 0.0
        %807 = vmatprep.subr.mxu0 0.0
        %808 = vmatpush2.msra.mxu0 0.0
        %809 = vmatprep.subr.mxu0 0.0
        %810 = vmatpush2.msra.mxu0 0.0
        %811 = vmatprep.subr.mxu0 0.0
        %812 = vmatpush2.msra.mxu0 0.0
        %813 = vmatprep.subr.mxu0 0.0
        %814 = vmatpush2.msra.mxu0 0.0
        %815 = vmatprep.subr.mxu0 0.0
        %816 = vmatpush2.msra.mxu0 0.0
        %817 = vmatprep.subr.mxu0 0.0
        %818 = vmatpush2.msra.mxu0 0.0
        %819 = vmatprep.mubr.f32.mxu0 0.0
        %820 = vmatmul.mubr.f32.gmra.mxu0 %v700
        %v821 = vpop.f32.mrf.mxu0
        %v822 = vadd.f32 %v753, %v821
        %v823 = vpop.f32.mrf.mxu0
        %824 = vmatprep.mubr.f32.mxu0 0.0
        %825 = vmatmul.mubr.f32.gmra.mxu0 %v701
        %v826 = vpop.f32.mrf.mxu0
        %v827 = vadd.f32 %v753, %v826
        %v828 = vpop.f32.mrf.mxu0
        %829 = vmatprep.mubr.f32.mxu0 0.0
        %830 = vmatmul.mubr.f32.gmra.mxu0 %v702
        %v831 = vpop.f32.mrf.mxu0
        %v832 = vadd.f32 %v753, %v831
        %v833 = vpop.f32.mrf.mxu0
        %834 = vmatprep.mubr.f32.mxu0 0.0
        %835 = vmatmul.mubr.f32.gmra.mxu0 %v703
        %v836 = vpop.f32.mrf.mxu0
        %v837 = vadd.f32 %v753, %v836
        %v838 = vpop.f32.mrf.mxu0
        %839 = vmatprep.mubr.f32.mxu0 0.0
        %840 = vmatmul.mubr.f32.gmra.mxu0 %v704
        %v841 = vpop.f32.mrf.mxu0
        %v842 = vadd.f32 %v753, %v841
        %v843 = vpop.f32.mrf.mxu0
        %844 = vmatprep.mubr.f32.mxu0 0.0
        %845 = vmatmul.mubr.f32.gmra.mxu0 %v705
        %v846 = vpop.f32.mrf.mxu0
        %v847 = vadd.f32 %v753, %v846
        %v848 = vpop.f32.mrf.mxu0
        %849 = vmatprep.mubr.f32.mxu0 0.0
        %850 = vmatmul.mubr.f32.gmra.mxu0 %v706
        %v851 = vpop.f32.mrf.mxu0
        %v852 = vadd.f32 %v753, %v851
        %v853 = vpop.f32.mrf.mxu0
        %854 = vmatprep.mubr.f32.mxu0 0.0
        %855 = vmatmul.mubr.f32.gmra.mxu0 %v707
        %v856 = vpop.f32.mrf.mxu0
        %v857 = vadd.f32 %v753, %v856
        %v858 = vpop.f32.mrf.mxu0
        %859 = vmatprep.mubr.f32.mxu0 0.0
        %860 = vmatmul.mubr.f32.gmra.mxu0 %v708
        %v861 = vpop.f32.mrf.mxu0
        %v862 = vadd.f32 %v753, %v861
        %v863 = vpop.f32.mrf.mxu0
        %864 = vmatprep.mubr.f32.mxu0 0.0
        %865 = vmatmul.mubr.f32.gmra.mxu0 %v709
        %v866 = vpop.f32.mrf.mxu0
        %v867 = vadd.f32 %v753, %v866
        %v868 = vpop.f32.mrf.mxu0
        %869 = vmatprep.mubr.f32.mxu0 0.0
        %870 = vmatmul.mubr.f32.gmra.mxu0 %v710
        %v871 = vpop.f32.mrf.mxu0
        %v872 = vadd.f32 %v753, %v871
        %v873 = vpop.f32.mrf.mxu0
        %874 = vmatprep.mubr.f32.mxu0 0.0
        %875 = vmatmul.mubr.f32.gmra.mxu0 %v711
        %v876 = vpop.f32.mrf.mxu0
        %v877 = vadd.f32 %v753, %v876
        %v878 = vpop.f32.mrf.mxu0
        %879 = vmatprep.mubr.f32.mxu0 0.0
        %880 = vmatmul.mubr.f32.gmra.mxu0 %v712
        %v881 = vpop.f32.mrf.mxu0
        %v882 = vadd.f32 %v753, %v881
        %v883 = vpop.f32.mrf.mxu0
        %884 = vmatprep.mubr.f32.mxu0 0.0
        %885 = vmatmul.mubr.f32.gmra.mxu0 %v713
        %v886 = vpop.f32.mrf.mxu0
        %v887 = vadd.f32 %v753, %v886
        %v888 = vpop.f32.mrf.mxu0
        %889 = vmatprep.mubr.f32.mxu0 0.0
        %890 = vmatmul.mubr.f32.gmra.mxu0 %v714
        %v891 = vpop.f32.mrf.mxu0
        %v892 = vadd.f32 %v753, %v891
        %v893 = vpop.f32.mrf.mxu0
        %894 = vmatprep.mubr.f32.mxu0 0.0
        %895 = vmatmul.mubr.f32.gmra.mxu0 %v715
        %v896 = vpop.f32.mrf.mxu0
        %v897 = vadd.f32 %v753, %v896
        %v898 = vpop.f32.mrf.mxu0
        %899 = vmatprep.mubr.f32.mxu0 0.0
        %900 = vmatmul.mubr.f32.gmra.mxu0 %v716
        %v901 = vpop.f32.mrf.mxu0
        %v902 = vadd.f32 %v753, %v901
        %v903 = vpop.f32.mrf.mxu0
        %904 = vmatprep.mubr.f32.mxu0 0.0
        %905 = vmatmul.mubr.f32.gmra.mxu0 %v717
        %v906 = vpop.f32.mrf.mxu0
        %v907 = vadd.f32 %v753, %v906
        %v908 = vpop.f32.mrf.mxu0
        %909 = vmatprep.mubr.f32.mxu0 0.0
        %910 = vmatmul.mubr.f32.gmra.mxu0 %v718
        %v911 = vpop.f32.mrf.mxu0
        %v912 = vadd.f32 %v753, %v911
        %v913 = vpop.f32.mrf.mxu0
        %914 = vmatprep.mubr.f32.mxu0 0.0
        %915 = vmatmul.mubr.f32.gmra.mxu0 %v719
        %v916 = vpop.f32.mrf.mxu0
        %v917 = vadd.f32 %v753, %v916
        %v918 = vpop.f32.mrf.mxu0
        %919 = vmatprep.mubr.f32.mxu0 0.0
        %920 = vmatmul.mubr.f32.gmra.mxu0 %v720
        %v921 = vpop.f32.mrf.mxu0
        %v922 = vadd.f32 %v753, %v921
        %v923 = vpop.f32.mrf.mxu0
        %924 = vmatprep.mubr.f32.mxu0 0.0
        %925 = vmatmul.mubr.f32.gmra.mxu0 %v721
        %v926 = vpop.f32.mrf.mxu0
        %v927 = vadd.f32 %v753, %v926
        %v928 = vpop.f32.mrf.mxu0
        %929 = vmatprep.mubr.f32.mxu0 0.0
        %930 = vmatmul.mubr.f32.gmra.mxu0 %v722
        %v931 = vpop.f32.mrf.mxu0
        %v932 = vadd.f32 %v753, %v931
        %v933 = vpop.f32.mrf.mxu0
        %934 = vmatprep.mubr.f32.mxu0 0.0
        %935 = vmatmul.mubr.f32.gmra.mxu0 %v723
        %v936 = vpop.f32.mrf.mxu0
        %v937 = vadd.f32 %v753, %v936
        %v938 = vpop.f32.mrf.mxu0
        %939 = vmatprep.mubr.f32.mxu0 0.0
        %940 = vmatmul.mubr.f32.gmra.mxu0 %v724
        %v941 = vpop.f32.mrf.mxu0
        %v942 = vadd.f32 %v753, %v941
        %v943 = vpop.f32.mrf.mxu0
        %944 = vmatprep.mubr.f32.mxu0 0.0
        %945 = vmatmul.mubr.f32.gmra.mxu0 %v725
        %v946 = vpop.f32.mrf.mxu0
        %v947 = vadd.f32 %v753, %v946
        %v948 = vpop.f32.mrf.mxu0
        %949 = vmatprep.mubr.f32.mxu0 0.0
        %950 = vmatmul.mubr.f32.gmra.mxu0 %v726
        %v951 = vpop.f32.mrf.mxu0
        %v952 = vadd.f32 %v753, %v951
        %v953 = vpop.f32.mrf.mxu0
        %954 = vmatprep.mubr.f32.mxu0 0.0
        %955 = vmatmul.mubr.f32.gmra.mxu0 %v727
        %v956 = vpop.f32.mrf.mxu0
        %v957 = vadd.f32 %v753, %v956
        %v958 = vpop.f32.mrf.mxu0
        %959 = vmatprep.mubr.f32.mxu0 0.0
        %960 = vmatmul.mubr.f32.gmra.mxu0 %v728
        %v961 = vpop.f32.mrf.mxu0
        %v962 = vadd.f32 %v753, %v961
        %v963 = vpop.f32.mrf.mxu0
        %964 = vmatprep.mubr.f32.mxu0 0.0
        %965 = vmatmul.mubr.f32.gmra.mxu0 %v729
        %v966 = vpop.f32.mrf.mxu0
        %v967 = vadd.f32 %v753, %v966
        %v968 = vpop.f32.mrf.mxu0
        %969 = vmatprep.mubr.f32.mxu0 0.0
        %970 = vmatmul.mubr.f32.gmra.mxu0 %v730
        %v971 = vpop.f32.mrf.mxu0
        %v972 = vadd.f32 %v753, %v971
        %v973 = vpop.f32.mrf.mxu0
        %974 = vmatprep.mubr.f32.mxu0 0.0
        %975 = vmatmul.mubr.f32.gmra.mxu0 %v731
        %v976 = vpop.f32.mrf.mxu0
        %v977 = vadd.f32 %v753, %v976
        %v978 = vpop.f32.mrf.mxu0
        %979 = vdwg.mxu0
        %v980 = vmax.f32 %v822, 0.0
        %v981 = vmax.f32 %v827, 0.0
        %v982 = vmax.f32 %v832, 0.0
        %v983 = vmax.f32 %v837, 0.0
        %v984 = vmax.f32 %v842, 0.0
        %v985 = vmax.f32 %v847, 0.0
        %v986 = vmax.f32 %v852, 0.0
        %v987 = vmax.f32 %v857, 0.0
        %v988 = vmax.f32 %v862, 0.0
        %v989 = vmax.f32 %v867, 0.0
        %v990 = vmax.f32 %v872, 0.0
        %v991 = vmax.f32 %v877, 0.0
        %v992 = vmax.f32 %v882, 0.0
        %v993 = vmax.f32 %v887, 0.0
        %v994 = vmax.f32 %v892, 0.0
        %v995 = vmax.f32 %v897, 0.0
        %v996 = vmax.f32 %v902, 0.0
        %v997 = vmax.f32 %v907, 0.0
        %v998 = vmax.f32 %v912, 0.0
        %v999 = vmax.f32 %v917, 0.0
        %v1000 = vmax.f32 %v922, 0.0
        %v1001 = vmax.f32 %v927, 0.0
        %v1002 = vmax.f32 %v932, 0.0
        %v1003 = vmax.f32 %v937, 0.0
        %v1004 = vmax.f32 %v942, 0.0
        %v1005 = vmax.f32 %v947, 0.0
        %v1006 = vmax.f32 %v952, 0.0
        %v1007 = vmax.f32 %v957, 0.0
        %v1008 = vmax.f32 %v962, 0.0
        %v1009 = vmax.f32 %v967, 0.0
        %v1010 = vmax.f32 %v972, 0.0
        %v1011 = vmax.f32 %v977, 0.0
        %v1012 = vld [vmem:[%s5] sm:$0xff]
        %v1013 = vld [vmem:[%s5 + $0x8] sm:$0xff]
        %v1014 = vld [vmem:[%s5 + $0x10] sm:$0xff]
        %v1015 = vld [vmem:[%s5 + $0x18] sm:$0xff]
        %v1016 = vld [vmem:[%s5 + $0x20] sm:$0xff]
        %v1017 = vld [vmem:[%s5 + $0x28] sm:$0xff]
        %v1018 = vld [vmem:[%s5 + $0x30] sm:$0xff]
        %v1019 = vld [vmem:[%s5 + $0x38] sm:$0xff]
        %v1020 = vld [vmem:[%s6] sm:$0x1]
        %v1022 = vlaneseq
        %v1023 = vshrl.u32 %v1022, 7
        %v1024 = vsub.s32 0, %v1023
        %v1025 = vrot.slane %v1020, %v1024
        %vm1027 = vcmask 523264
        %v1029 = vsel %vm1027, %v980, 0
        %v1032 = vsel %vm1027, %v981, 0
        %v1035 = vsel %vm1027, %v982, 0
        %v1038 = vsel %vm1027, %v983, 0
        %v1041 = vsel %vm1027, %v984, 0
        %v1044 = vsel %vm1027, %v985, 0
        %v1047 = vsel %vm1027, %v986, 0
        %v1050 = vsel %vm1027, %v987, 0
        %v1053 = vsel %vm1027, %v988, 0
        %v1056 = vsel %vm1027, %v989, 0
        %v1059 = vsel %vm1027, %v990, 0
        %v1062 = vsel %vm1027, %v991, 0
        %v1065 = vsel %vm1027, %v992, 0
        %v1068 = vsel %vm1027, %v993, 0
        %v1071 = vsel %vm1027, %v994, 0
        %v1074 = vsel %vm1027, %v995, 0
        %v1077 = vsel %vm1027, %v996, 0
        %v1080 = vsel %vm1027, %v997, 0
        %v1083 = vsel %vm1027, %v998, 0
        %v1086 = vsel %vm1027, %v999, 0
        %v1089 = vsel %vm1027, %v1000, 0
        %v1092 = vsel %vm1027, %v1001, 0
        %v1095 = vsel %vm1027, %v1002, 0
        %v1098 = vsel %vm1027, %v1003, 0
        %v1101 = vsel %vm1027, %v1004, 0
        %v1104 = vsel %vm1027, %v1005, 0
        %v1107 = vsel %vm1027, %v1006, 0
        %v1110 = vsel %vm1027, %v1007, 0
        %v1113 = vsel %vm1027, %v1008, 0
        %v1116 = vsel %vm1027, %v1009, 0
        %v1119 = vsel %vm1027, %v1010, 0
        %v1122 = vsel %vm1027, %v1011, 0
        %1124 = vmatprep.subr.mxu0 0.0
        %1125 = vmatpush1.msra.mxu0 0.0
        %1126 = vmatprep.subr.mxu0 0.0
        %1127 = vmatpush1.msra.mxu0 0.0
        %1128 = vmatprep.subr.mxu0 0.0
        %1129 = vmatpush1.msra.mxu0 0.0
        %1130 = vmatprep.subr.mxu0 0.0
        %1131 = vmatpush1.msra.mxu0 0.0
        %1132 = vmatprep.subr.mxu0 0.0
        %1133 = vmatpush1.msra.mxu0 0.0
        %1134 = vmatprep.subr.mxu0 0.0
        %1135 = vmatpush1.msra.mxu0 0.0
        %1136 = vmatprep.subr.mxu0 0.0
        %1137 = vmatpush1.msra.mxu0 0.0
        %1138 = vmatprep.subr.mxu0 0.0
        %1139 = vmatpush1.msra.mxu0 0.0
        %1140 = vmatprep.subr.mxu0 0.0
        %1141 = vmatpush1.msra.mxu0 %v1019
        %1142 = vmatprep.subr.mxu0 0.0
        %1143 = vmatpush1.msra.mxu0 %v1018
        %1144 = vmatprep.subr.mxu0 0.0
        %1145 = vmatpush1.msra.mxu0 %v1017
        %1146 = vmatprep.subr.mxu0 0.0
        %1147 = vmatpush1.msra.mxu0 %v1016
        %1148 = vmatprep.subr.mxu0 0.0
        %1149 = vmatpush1.msra.mxu0 %v1015
        %1150 = vmatprep.subr.mxu0 0.0
        %1151 = vmatpush1.msra.mxu0 %v1014
        %1152 = vmatprep.subr.mxu0 0.0
        %1153 = vmatpush1.msra.mxu0 %v1013
        %1154 = vmatprep.subr.mxu0 0.0
        %1155 = vmatpush1.msra.mxu0 %v1012
        %1156 = vmatprep.subr.mxu0 0.0
        %1157 = vmatpush2.msra.mxu0 0.0
        %1158 = vmatprep.subr.mxu0 0.0
        %1159 = vmatpush2.msra.mxu0 0.0
        %1160 = vmatprep.subr.mxu0 0.0
        %1161 = vmatpush2.msra.mxu0 0.0
        %1162 = vmatprep.subr.mxu0 0.0
        %1163 = vmatpush2.msra.mxu0 0.0
        %1164 = vmatprep.subr.mxu0 0.0
        %1165 = vmatpush2.msra.mxu0 0.0
        %1166 = vmatprep.subr.mxu0 0.0
        %1167 = vmatpush2.msra.mxu0 0.0
        %1168 = vmatprep.subr.mxu0 0.0
        %1169 = vmatpush2.msra.mxu0 0.0
        %1170 = vmatprep.subr.mxu0 0.0
        %1171 = vmatpush2.msra.mxu0 0.0
        %1172 = vmatprep.subr.mxu0 0.0
        %1173 = vmatpush2.msra.mxu0 0.0
        %1174 = vmatprep.subr.mxu0 0.0
        %1175 = vmatpush2.msra.mxu0 0.0
        %1176 = vmatprep.subr.mxu0 0.0
        %1177 = vmatpush2.msra.mxu0 0.0
        %1178 = vmatprep.subr.mxu0 0.0
        %1179 = vmatpush2.msra.mxu0 0.0
        %1180 = vmatprep.subr.mxu0 0.0
        %1181 = vmatpush2.msra.mxu0 0.0
        %1182 = vmatprep.subr.mxu0 0.0
        %1183 = vmatpush2.msra.mxu0 0.0
        %1184 = vmatprep.subr.mxu0 0.0
        %1185 = vmatpush2.msra.mxu0 0.0
        %1186 = vmatprep.subr.mxu0 0.0
        %1187 = vmatpush2.msra.mxu0 0.0
        %1188 = vmatprep.mubr.f32.mxu0 0.0
        %1189 = vmatmul.mubr.f32.gmra.mxu0 %v1029
        %v1190 = vpop.f32.mrf.mxu0
        %v1191 = vadd.f32 %v1025, %v1190
        %v1192 = vpop.f32.mrf.mxu0
        %1193 = vmatprep.mubr.f32.mxu0 0.0
        %1194 = vmatmul.mubr.f32.gmra.mxu0 %v1032
        %v1195 = vpop.f32.mrf.mxu0
        %v1196 = vadd.f32 %v1025, %v1195
        %v1197 = vpop.f32.mrf.mxu0
        %1198 = vmatprep.mubr.f32.mxu0 0.0
        %1199 = vmatmul.mubr.f32.gmra.mxu0 %v1035
        %v1200 = vpop.f32.mrf.mxu0
        %v1201 = vadd.f32 %v1025, %v1200
        %v1202 = vpop.f32.mrf.mxu0
        %1203 = vmatprep.mubr.f32.mxu0 0.0
        %1204 = vmatmul.mubr.f32.gmra.mxu0 %v1038
        %v1205 = vpop.f32.mrf.mxu0
        %v1206 = vadd.f32 %v1025, %v1205
        %v1207 = vpop.f32.mrf.mxu0
        %1208 = vmatprep.mubr.f32.mxu0 0.0
        %1209 = vmatmul.mubr.f32.gmra.mxu0 %v1041
        %v1210 = vpop.f32.mrf.mxu0
        %v1211 = vadd.f32 %v1025, %v1210
        %v1212 = vpop.f32.mrf.mxu0
        %1213 = vmatprep.mubr.f32.mxu0 0.0
        %1214 = vmatmul.mubr.f32.gmra.mxu0 %v1044
        %v1215 = vpop.f32.mrf.mxu0
        %v1216 = vadd.f32 %v1025, %v1215
        %v1217 = vpop.f32.mrf.mxu0
        %1218 = vmatprep.mubr.f32.mxu0 0.0
        %1219 = vmatmul.mubr.f32.gmra.mxu0 %v1047
        %v1220 = vpop.f32.mrf.mxu0
        %v1221 = vadd.f32 %v1025, %v1220
        %v1222 = vpop.f32.mrf.mxu0
        %1223 = vmatprep.mubr.f32.mxu0 0.0
        %1224 = vmatmul.mubr.f32.gmra.mxu0 %v1050
        %v1225 = vpop.f32.mrf.mxu0
        %v1226 = vadd.f32 %v1025, %v1225
        %v1227 = vpop.f32.mrf.mxu0
        %1228 = vmatprep.mubr.f32.mxu0 0.0
        %1229 = vmatmul.mubr.f32.gmra.mxu0 %v1053
        %v1230 = vpop.f32.mrf.mxu0
        %v1231 = vadd.f32 %v1025, %v1230
        %v1232 = vpop.f32.mrf.mxu0
        %1233 = vmatprep.mubr.f32.mxu0 0.0
        %1234 = vmatmul.mubr.f32.gmra.mxu0 %v1056
        %v1235 = vpop.f32.mrf.mxu0
        %v1236 = vadd.f32 %v1025, %v1235
        %v1237 = vpop.f32.mrf.mxu0
        %1238 = vmatprep.mubr.f32.mxu0 0.0
        %1239 = vmatmul.mubr.f32.gmra.mxu0 %v1059
        %v1240 = vpop.f32.mrf.mxu0
        %v1241 = vadd.f32 %v1025, %v1240
        %v1242 = vpop.f32.mrf.mxu0
        %1243 = vmatprep.mubr.f32.mxu0 0.0
        %1244 = vmatmul.mubr.f32.gmra.mxu0 %v1062
        %v1245 = vpop.f32.mrf.mxu0
        %v1246 = vadd.f32 %v1025, %v1245
        %v1247 = vpop.f32.mrf.mxu0
        %1248 = vmatprep.mubr.f32.mxu0 0.0
        %1249 = vmatmul.mubr.f32.gmra.mxu0 %v1065
        %v1250 = vpop.f32.mrf.mxu0
        %v1251 = vadd.f32 %v1025, %v1250
        %v1252 = vpop.f32.mrf.mxu0
        %1253 = vmatprep.mubr.f32.mxu0 0.0
        %1254 = vmatmul.mubr.f32.gmra.mxu0 %v1068
        %v1255 = vpop.f32.mrf.mxu0
        %v1256 = vadd.f32 %v1025, %v1255
        %v1257 = vpop.f32.mrf.mxu0
        %1258 = vmatprep.mubr.f32.mxu0 0.0
        %1259 = vmatmul.mubr.f32.gmra.mxu0 %v1071
        %v1260 = vpop.f32.mrf.mxu0
        %v1261 = vadd.f32 %v1025, %v1260
        %v1262 = vpop.f32.mrf.mxu0
        %1263 = vmatprep.mubr.f32.mxu0 0.0
        %1264 = vmatmul.mubr.f32.gmra.mxu0 %v1074
        %v1265 = vpop.f32.mrf.mxu0
        %v1266 = vadd.f32 %v1025, %v1265
        %v1267 = vpop.f32.mrf.mxu0
        %1268 = vmatprep.mubr.f32.mxu0 0.0
        %1269 = vmatmul.mubr.f32.gmra.mxu0 %v1077
        %v1270 = vpop.f32.mrf.mxu0
        %v1271 = vadd.f32 %v1025, %v1270
        %v1272 = vpop.f32.mrf.mxu0
        %1273 = vmatprep.mubr.f32.mxu0 0.0
        %1274 = vmatmul.mubr.f32.gmra.mxu0 %v1080
        %v1275 = vpop.f32.mrf.mxu0
        %v1276 = vadd.f32 %v1025, %v1275
        %v1277 = vpop.f32.mrf.mxu0
        %1278 = vmatprep.mubr.f32.mxu0 0.0
        %1279 = vmatmul.mubr.f32.gmra.mxu0 %v1083
        %v1280 = vpop.f32.mrf.mxu0
        %v1281 = vadd.f32 %v1025, %v1280
        %v1282 = vpop.f32.mrf.mxu0
        %1283 = vmatprep.mubr.f32.mxu0 0.0
        %1284 = vmatmul.mubr.f32.gmra.mxu0 %v1086
        %v1285 = vpop.f32.mrf.mxu0
        %v1286 = vadd.f32 %v1025, %v1285
        %v1287 = vpop.f32.mrf.mxu0
        %1288 = vmatprep.mubr.f32.mxu0 0.0
        %1289 = vmatmul.mubr.f32.gmra.mxu0 %v1089
        %v1290 = vpop.f32.mrf.mxu0
        %v1291 = vadd.f32 %v1025, %v1290
        %v1292 = vpop.f32.mrf.mxu0
        %1293 = vmatprep.mubr.f32.mxu0 0.0
        %1294 = vmatmul.mubr.f32.gmra.mxu0 %v1092
        %v1295 = vpop.f32.mrf.mxu0
        %v1296 = vadd.f32 %v1025, %v1295
        %v1297 = vpop.f32.mrf.mxu0
        %1298 = vmatprep.mubr.f32.mxu0 0.0
        %1299 = vmatmul.mubr.f32.gmra.mxu0 %v1095
        %v1300 = vpop.f32.mrf.mxu0
        %v1301 = vadd.f32 %v1025, %v1300
        %v1302 = vpop.f32.mrf.mxu0
        %1303 = vmatprep.mubr.f32.mxu0 0.0
        %1304 = vmatmul.mubr.f32.gmra.mxu0 %v1098
        %v1305 = vpop.f32.mrf.mxu0
        %v1306 = vadd.f32 %v1025, %v1305
        %v1307 = vpop.f32.mrf.mxu0
        %1308 = vmatprep.mubr.f32.mxu0 0.0
        %1309 = vmatmul.mubr.f32.gmra.mxu0 %v1101
        %v1310 = vpop.f32.mrf.mxu0
        %v1311 = vadd.f32 %v1025, %v1310
        %v1312 = vpop.f32.mrf.mxu0
        %1313 = vmatprep.mubr.f32.mxu0 0.0
        %1314 = vmatmul.mubr.f32.gmra.mxu0 %v1104
        %v1315 = vpop.f32.mrf.mxu0
        %v1316 = vadd.f32 %v1025, %v1315
        %v1317 = vpop.f32.mrf.mxu0
        %1318 = vmatprep.mubr.f32.mxu0 0.0
        %1319 = vmatmul.mubr.f32.gmra.mxu0 %v1107
        %v1320 = vpop.f32.mrf.mxu0
        %v1321 = vadd.f32 %v1025, %v1320
        %v1322 = vpop.f32.mrf.mxu0
        %1323 = vmatprep.mubr.f32.mxu0 0.0
        %1324 = vmatmul.mubr.f32.gmra.mxu0 %v1110
        %v1325 = vpop.f32.mrf.mxu0
        %v1326 = vadd.f32 %v1025, %v1325
        %v1327 = vpop.f32.mrf.mxu0
        %1328 = vmatprep.mubr.f32.mxu0 0.0
        %1329 = vmatmul.mubr.f32.gmra.mxu0 %v1113
        %v1330 = vpop.f32.mrf.mxu0
        %v1331 = vadd.f32 %v1025, %v1330
        %v1332 = vpop.f32.mrf.mxu0
        %1333 = vmatprep.mubr.f32.mxu0 0.0
        %1334 = vmatmul.mubr.f32.gmra.mxu0 %v1116
        %v1335 = vpop.f32.mrf.mxu0
        %v1336 = vadd.f32 %v1025, %v1335
        %v1337 = vpop.f32.mrf.mxu0
        %1338 = vmatprep.mubr.f32.mxu0 0.0
        %1339 = vmatmul.mubr.f32.gmra.mxu0 %v1119
        %v1340 = vpop.f32.mrf.mxu0
        %v1341 = vadd.f32 %v1025, %v1340
        %v1342 = vpop.f32.mrf.mxu0
        %1343 = vmatprep.mubr.f32.mxu0 0.0
        %1344 = vmatmul.mubr.f32.gmra.mxu0 %v1122
        %v1345 = vpop.f32.mrf.mxu0
        %v1346 = vadd.f32 %v1025, %v1345
        %v1347 = vpop.f32.mrf.mxu0
        %1348 = vdwg.mxu0
        %v1349 = vmax.f32 %v1191, 0.0
        %v1350 = vmax.f32 %v1196, 0.0
        %v1351 = vmax.f32 %v1201, 0.0
        %v1352 = vmax.f32 %v1206, 0.0
        %v1353 = vmax.f32 %v1211, 0.0
        %v1354 = vmax.f32 %v1216, 0.0
        %v1355 = vmax.f32 %v1221, 0.0
        %v1356 = vmax.f32 %v1226, 0.0
        %v1357 = vmax.f32 %v1231, 0.0
        %v1358 = vmax.f32 %v1236, 0.0
        %v1359 = vmax.f32 %v1241, 0.0
        %v1360 = vmax.f32 %v1246, 0.0
        %v1361 = vmax.f32 %v1251, 0.0
        %v1362 = vmax.f32 %v1256, 0.0
        %v1363 = vmax.f32 %v1261, 0.0
        %v1364 = vmax.f32 %v1266, 0.0
        %v1365 = vmax.f32 %v1271, 0.0
        %v1366 = vmax.f32 %v1276, 0.0
        %v1367 = vmax.f32 %v1281, 0.0
        %v1368 = vmax.f32 %v1286, 0.0
        %v1369 = vmax.f32 %v1291, 0.0
        %v1370 = vmax.f32 %v1296, 0.0
        %v1371 = vmax.f32 %v1301, 0.0
        %v1372 = vmax.f32 %v1306, 0.0
        %v1373 = vmax.f32 %v1311, 0.0
        %v1374 = vmax.f32 %v1316, 0.0
        %v1375 = vmax.f32 %v1321, 0.0
        %v1376 = vmax.f32 %v1326, 0.0
        %v1377 = vmax.f32 %v1331, 0.0
        %v1378 = vmax.f32 %v1336, 0.0
        %v1379 = vmax.f32 %v1341, 0.0
        %v1380 = vmax.f32 %v1346, 0.0
        %v1381 = vld [vmem:[%s7] sm:$0x1]
        %v1383 = vlaneseq
        %v1384 = vshrl.u32 %v1383, 7
        %v1385 = vsub.s32 0, %v1384
        %v1386 = vrot.slane %v1381, %v1385
        %v1388 = vmul.f32 %v1349, %v1386
        %v1389 = vmul.f32 %v1350, %v1386
        %v1390 = vmul.f32 %v1351, %v1386
        %v1391 = vmul.f32 %v1352, %v1386
        %v1392 = vmul.f32 %v1353, %v1386
        %v1393 = vmul.f32 %v1354, %v1386
        %v1394 = vmul.f32 %v1355, %v1386
        %v1395 = vmul.f32 %v1356, %v1386
        %v1396 = vmul.f32 %v1357, %v1386
        %v1397 = vmul.f32 %v1358, %v1386
        %v1398 = vmul.f32 %v1359, %v1386
        %v1399 = vmul.f32 %v1360, %v1386
        %v1400 = vmul.f32 %v1361, %v1386
        %v1401 = vmul.f32 %v1362, %v1386
        %v1402 = vmul.f32 %v1363, %v1386
        %v1403 = vmul.f32 %v1364, %v1386
        %v1404 = vmul.f32 %v1365, %v1386
        %v1405 = vmul.f32 %v1366, %v1386
        %v1406 = vmul.f32 %v1367, %v1386
        %v1407 = vmul.f32 %v1368, %v1386
        %v1408 = vmul.f32 %v1369, %v1386
        %v1409 = vmul.f32 %v1370, %v1386
        %v1410 = vmul.f32 %v1371, %v1386
        %v1411 = vmul.f32 %v1372, %v1386
        %v1412 = vmul.f32 %v1373, %v1386
        %v1413 = vmul.f32 %v1374, %v1386
        %v1414 = vmul.f32 %v1375, %v1386
        %v1415 = vmul.f32 %v1376, %v1386
        %v1416 = vmul.f32 %v1377, %v1386
        %v1417 = vmul.f32 %v1378, %v1386
        %v1418 = vmul.f32 %v1379, %v1386
        %v1419 = vmul.f32 %v1380, %v1386
        %v1420 = vsel %vm378, %v1388, 0.0
        %1421 = vadd.xlane.f32.xlu0 %v1420
        %v1422 = vpop.xlane.xlu0 %1421
        %v1423 = vsel %vm378, %v1389, 0.0
        %1424 = vadd.xlane.f32.xlu0 %v1423
        %v1425 = vpop.xlane.xlu0 %1424
        %v1426 = vsel %vm378, %v1390, 0.0
        %1427 = vadd.xlane.f32.xlu0 %v1426
        %v1428 = vpop.xlane.xlu0 %1427
        %v1429 = vsel %vm378, %v1391, 0.0
        %1430 = vadd.xlane.f32.xlu0 %v1429
        %v1431 = vpop.xlane.xlu0 %1430
        %v1432 = vsel %vm378, %v1392, 0.0
        %1433 = vadd.xlane.f32.xlu0 %v1432
        %v1434 = vpop.xlane.xlu0 %1433
        %v1435 = vsel %vm378, %v1393, 0.0
        %1436 = vadd.xlane.f32.xlu0 %v1435
        %v1437 = vpop.xlane.xlu0 %1436
        %v1438 = vsel %vm378, %v1394, 0.0
        %1439 = vadd.xlane.f32.xlu0 %v1438
        %v1440 = vpop.xlane.xlu0 %1439
        %v1441 = vsel %vm378, %v1395, 0.0
        %1442 = vadd.xlane.f32.xlu0 %v1441
        %v1443 = vpop.xlane.xlu0 %1442
        %v1444 = vsel %vm378, %v1396, 0.0
        %1445 = vadd.xlane.f32.xlu0 %v1444
        %v1446 = vpop.xlane.xlu0 %1445
        %v1447 = vsel %vm378, %v1397, 0.0
        %1448 = vadd.xlane.f32.xlu0 %v1447
        %v1449 = vpop.xlane.xlu0 %1448
        %v1450 = vsel %vm378, %v1398, 0.0
        %1451 = vadd.xlane.f32.xlu0 %v1450
        %v1452 = vpop.xlane.xlu0 %1451
        %v1453 = vsel %vm378, %v1399, 0.0
        %1454 = vadd.xlane.f32.xlu0 %v1453
        %v1455 = vpop.xlane.xlu0 %1454
        %v1456 = vsel %vm378, %v1400, 0.0
        %1457 = vadd.xlane.f32.xlu0 %v1456
        %v1458 = vpop.xlane.xlu0 %1457
        %v1459 = vsel %vm378, %v1401, 0.0
        %1460 = vadd.xlane.f32.xlu0 %v1459
        %v1461 = vpop.xlane.xlu0 %1460
        %v1462 = vsel %vm378, %v1402, 0.0
        %1463 = vadd.xlane.f32.xlu0 %v1462
        %v1464 = vpop.xlane.xlu0 %1463
        %v1465 = vsel %vm378, %v1403, 0.0
        %1466 = vadd.xlane.f32.xlu0 %v1465
        %v1467 = vpop.xlane.xlu0 %1466
        %v1468 = vsel %vm378, %v1404, 0.0
        %1469 = vadd.xlane.f32.xlu0 %v1468
        %v1470 = vpop.xlane.xlu0 %1469
        %v1471 = vsel %vm378, %v1405, 0.0
        %1472 = vadd.xlane.f32.xlu0 %v1471
        %v1473 = vpop.xlane.xlu0 %1472
        %v1474 = vsel %vm378, %v1406, 0.0
        %1475 = vadd.xlane.f32.xlu0 %v1474
        %v1476 = vpop.xlane.xlu0 %1475
        %v1477 = vsel %vm378, %v1407, 0.0
        %1478 = vadd.xlane.f32.xlu0 %v1477
        %v1479 = vpop.xlane.xlu0 %1478
        %v1480 = vsel %vm378, %v1408, 0.0
        %1481 = vadd.xlane.f32.xlu0 %v1480
        %v1482 = vpop.xlane.xlu0 %1481
        %v1483 = vsel %vm378, %v1409, 0.0
        %1484 = vadd.xlane.f32.xlu0 %v1483
        %v1485 = vpop.xlane.xlu0 %1484
        %v1486 = vsel %vm378, %v1410, 0.0
        %1487 = vadd.xlane.f32.xlu0 %v1486
        %v1488 = vpop.xlane.xlu0 %1487
        %v1489 = vsel %vm378, %v1411, 0.0
        %1490 = vadd.xlane.f32.xlu0 %v1489
        %v1491 = vpop.xlane.xlu0 %1490
        %v1492 = vsel %vm378, %v1412, 0.0
        %1493 = vadd.xlane.f32.xlu0 %v1492
        %v1494 = vpop.xlane.xlu0 %1493
        %v1495 = vsel %vm378, %v1413, 0.0
        %1496 = vadd.xlane.f32.xlu0 %v1495
        %v1497 = vpop.xlane.xlu0 %1496
        %v1498 = vsel %vm378, %v1414, 0.0
        %1499 = vadd.xlane.f32.xlu0 %v1498
        %v1500 = vpop.xlane.xlu0 %1499
        %v1501 = vsel %vm378, %v1415, 0.0
        %1502 = vadd.xlane.f32.xlu0 %v1501
        %v1503 = vpop.xlane.xlu0 %1502
        %v1504 = vsel %vm378, %v1416, 0.0
        %1505 = vadd.xlane.f32.xlu0 %v1504
        %v1506 = vpop.xlane.xlu0 %1505
        %v1507 = vsel %vm378, %v1417, 0.0
        %1508 = vadd.xlane.f32.xlu0 %v1507
        %v1509 = vpop.xlane.xlu0 %1508
        %v1510 = vsel %vm378, %v1418, 0.0
        %1511 = vadd.xlane.f32.xlu0 %v1510
        %v1512 = vpop.xlane.xlu0 %1511
        %v1513 = vsel %vm378, %v1419, 0.0
        %1514 = vadd.xlane.f32.xlu0 %v1513
        %v1515 = vpop.xlane.xlu0 %1514
        %v1516 = vld [vmem:[#allocation2] sm:$0x1]
        %1518 = vset.pattern.permute.xlu0 0
        %1519 = vperm.xlu0 %1518, %v1516
        %v1520 = vpop.permute.xlu0 %1519
        %v1522 = vlaneseq
        %v1523 = vshrl.u32 %v1522, 7
        %v1524 = vsub.s32 0, %v1523
        %v1525 = vrot.slane %v1520, %v1524
        %v1526 = vadd.f32 %v1422, %v1525
        %v1527 = vadd.f32 %v1425, %v1525
        %v1528 = vadd.f32 %v1428, %v1525
        %v1529 = vadd.f32 %v1431, %v1525
        %v1530 = vadd.f32 %v1434, %v1525
        %v1531 = vadd.f32 %v1437, %v1525
        %v1532 = vadd.f32 %v1440, %v1525
        %v1533 = vadd.f32 %v1443, %v1525
        %v1534 = vadd.f32 %v1446, %v1525
        %v1535 = vadd.f32 %v1449, %v1525
        %v1536 = vadd.f32 %v1452, %v1525
        %v1537 = vadd.f32 %v1455, %v1525
        %v1538 = vadd.f32 %v1458, %v1525
        %v1539 = vadd.f32 %v1461, %v1525
        %v1540 = vadd.f32 %v1464, %v1525
        %v1541 = vadd.f32 %v1467, %v1525
        %v1542 = vadd.f32 %v1470, %v1525
        %v1543 = vadd.f32 %v1473, %v1525
        %v1544 = vadd.f32 %v1476, %v1525
        %v1545 = vadd.f32 %v1479, %v1525
        %v1546 = vadd.f32 %v1482, %v1525
        %v1547 = vadd.f32 %v1485, %v1525
        %v1548 = vadd.f32 %v1488, %v1525
        %v1549 = vadd.f32 %v1491, %v1525
        %v1550 = vadd.f32 %v1494, %v1525
        %v1551 = vadd.f32 %v1497, %v1525
        %v1552 = vadd.f32 %v1500, %v1525
        %v1553 = vadd.f32 %v1503, %v1525
        %v1554 = vadd.f32 %v1506, %v1525
        %v1555 = vadd.f32 %v1509, %v1525
        %v1556 = vadd.f32 %v1512, %v1525
        %v1557 = vadd.f32 %v1515, %v1525
        %v1590 = vlaneseq
        %v1591 = vshrl.u32 %v1590, 7
        %v1592 = vsub.s32 0, %v1591
        %v1593 = vrot.slane %v1526, %v1592
        %v1594 = vlaneseq
        %v1595 = vshrl.u32 %v1594, 7
        %v1596 = vsub.s32 1, %v1595
        %v1597 = vrot.slane %v1526, %v1596
        %v1598 = vlaneseq
        %v1599 = vshrl.u32 %v1598, 7
        %v1600 = vsub.s32 2, %v1599
        %v1601 = vrot.slane %v1526, %v1600
        %v1602 = vlaneseq
        %v1603 = vshrl.u32 %v1602, 7
        %v1604 = vsub.s32 3, %v1603
        %v1605 = vrot.slane %v1526, %v1604
        %v1606 = vlaneseq
        %v1607 = vshrl.u32 %v1606, 7
        %v1608 = vsub.s32 4, %v1607
        %v1609 = vrot.slane %v1526, %v1608
        %v1610 = vlaneseq
        %v1611 = vshrl.u32 %v1610, 7
        %v1612 = vsub.s32 5, %v1611
        %v1613 = vrot.slane %v1526, %v1612
        %v1614 = vlaneseq
        %v1615 = vshrl.u32 %v1614, 7
        %v1616 = vsub.s32 6, %v1615
        %v1617 = vrot.slane %v1526, %v1616
        %v1618 = vlaneseq
        %v1619 = vshrl.u32 %v1618, 7
        %v1620 = vsub.s32 7, %v1619
        %v1621 = vrot.slane %v1526, %v1620
        %v1622 = vlaneseq
        %v1623 = vshrl.u32 %v1622, 7
        %v1624 = vsub.s32 0, %v1623
        %v1625 = vrot.slane %v1527, %v1624
        %v1626 = vlaneseq
        %v1627 = vshrl.u32 %v1626, 7
        %v1628 = vsub.s32 1, %v1627
        %v1629 = vrot.slane %v1527, %v1628
        %v1630 = vlaneseq
        %v1631 = vshrl.u32 %v1630, 7
        %v1632 = vsub.s32 2, %v1631
        %v1633 = vrot.slane %v1527, %v1632
        %v1634 = vlaneseq
        %v1635 = vshrl.u32 %v1634, 7
        %v1636 = vsub.s32 3, %v1635
        %v1637 = vrot.slane %v1527, %v1636
        %v1638 = vlaneseq
        %v1639 = vshrl.u32 %v1638, 7
        %v1640 = vsub.s32 4, %v1639
        %v1641 = vrot.slane %v1527, %v1640
        %v1642 = vlaneseq
        %v1643 = vshrl.u32 %v1642, 7
        %v1644 = vsub.s32 5, %v1643
        %v1645 = vrot.slane %v1527, %v1644
        %v1646 = vlaneseq
        %v1647 = vshrl.u32 %v1646, 7
        %v1648 = vsub.s32 6, %v1647
        %v1649 = vrot.slane %v1527, %v1648
        %v1650 = vlaneseq
        %v1651 = vshrl.u32 %v1650, 7
        %v1652 = vsub.s32 7, %v1651
        %v1653 = vrot.slane %v1527, %v1652
        %v1654 = vlaneseq
        %v1655 = vshrl.u32 %v1654, 7
        %v1656 = vsub.s32 0, %v1655
        %v1657 = vrot.slane %v1528, %v1656
        %v1658 = vlaneseq
        %v1659 = vshrl.u32 %v1658, 7
        %v1660 = vsub.s32 1, %v1659
        %v1661 = vrot.slane %v1528, %v1660
        %v1662 = vlaneseq
        %v1663 = vshrl.u32 %v1662, 7
        %v1664 = vsub.s32 2, %v1663
        %v1665 = vrot.slane %v1528, %v1664
        %v1666 = vlaneseq
        %v1667 = vshrl.u32 %v1666, 7
        %v1668 = vsub.s32 3, %v1667
        %v1669 = vrot.slane %v1528, %v1668
        %v1670 = vlaneseq
        %v1671 = vshrl.u32 %v1670, 7
        %v1672 = vsub.s32 4, %v1671
        %v1673 = vrot.slane %v1528, %v1672
        %v1674 = vlaneseq
        %v1675 = vshrl.u32 %v1674, 7
        %v1676 = vsub.s32 5, %v1675
        %v1677 = vrot.slane %v1528, %v1676
        %v1678 = vlaneseq
        %v1679 = vshrl.u32 %v1678, 7
        %v1680 = vsub.s32 6, %v1679
        %v1681 = vrot.slane %v1528, %v1680
        %v1682 = vlaneseq
        %v1683 = vshrl.u32 %v1682, 7
        %v1684 = vsub.s32 7, %v1683
        %v1685 = vrot.slane %v1528, %v1684
        %v1686 = vlaneseq
        %v1687 = vshrl.u32 %v1686, 7
        %v1688 = vsub.s32 0, %v1687
        %v1689 = vrot.slane %v1529, %v1688
        %v1690 = vlaneseq
        %v1691 = vshrl.u32 %v1690, 7
        %v1692 = vsub.s32 1, %v1691
        %v1693 = vrot.slane %v1529, %v1692
        %v1694 = vlaneseq
        %v1695 = vshrl.u32 %v1694, 7
        %v1696 = vsub.s32 2, %v1695
        %v1697 = vrot.slane %v1529, %v1696
        %v1698 = vlaneseq
        %v1699 = vshrl.u32 %v1698, 7
        %v1700 = vsub.s32 3, %v1699
        %v1701 = vrot.slane %v1529, %v1700
        %v1702 = vlaneseq
        %v1703 = vshrl.u32 %v1702, 7
        %v1704 = vsub.s32 4, %v1703
        %v1705 = vrot.slane %v1529, %v1704
        %v1706 = vlaneseq
        %v1707 = vshrl.u32 %v1706, 7
        %v1708 = vsub.s32 5, %v1707
        %v1709 = vrot.slane %v1529, %v1708
        %v1710 = vlaneseq
        %v1711 = vshrl.u32 %v1710, 7
        %v1712 = vsub.s32 6, %v1711
        %v1713 = vrot.slane %v1529, %v1712
        %v1714 = vlaneseq
        %v1715 = vshrl.u32 %v1714, 7
        %v1716 = vsub.s32 7, %v1715
        %v1717 = vrot.slane %v1529, %v1716
        %v1718 = vlaneseq
        %v1719 = vshrl.u32 %v1718, 7
        %v1720 = vsub.s32 0, %v1719
        %v1721 = vrot.slane %v1530, %v1720
        %v1722 = vlaneseq
        %v1723 = vshrl.u32 %v1722, 7
        %v1724 = vsub.s32 1, %v1723
        %v1725 = vrot.slane %v1530, %v1724
        %v1726 = vlaneseq
        %v1727 = vshrl.u32 %v1726, 7
        %v1728 = vsub.s32 2, %v1727
        %v1729 = vrot.slane %v1530, %v1728
        %v1730 = vlaneseq
        %v1731 = vshrl.u32 %v1730, 7
        %v1732 = vsub.s32 3, %v1731
        %v1733 = vrot.slane %v1530, %v1732
        %v1734 = vlaneseq
        %v1735 = vshrl.u32 %v1734, 7
        %v1736 = vsub.s32 4, %v1735
        %v1737 = vrot.slane %v1530, %v1736
        %v1738 = vlaneseq
        %v1739 = vshrl.u32 %v1738, 7
        %v1740 = vsub.s32 5, %v1739
        %v1741 = vrot.slane %v1530, %v1740
        %v1742 = vlaneseq
        %v1743 = vshrl.u32 %v1742, 7
        %v1744 = vsub.s32 6, %v1743
        %v1745 = vrot.slane %v1530, %v1744
        %v1746 = vlaneseq
        %v1747 = vshrl.u32 %v1746, 7
        %v1748 = vsub.s32 7, %v1747
        %v1749 = vrot.slane %v1530, %v1748
        %v1750 = vlaneseq
        %v1751 = vshrl.u32 %v1750, 7
        %v1752 = vsub.s32 0, %v1751
        %v1753 = vrot.slane %v1531, %v1752
        %v1754 = vlaneseq
        %v1755 = vshrl.u32 %v1754, 7
        %v1756 = vsub.s32 1, %v1755
        %v1757 = vrot.slane %v1531, %v1756
        %v1758 = vlaneseq
        %v1759 = vshrl.u32 %v1758, 7
        %v1760 = vsub.s32 2, %v1759
        %v1761 = vrot.slane %v1531, %v1760
        %v1762 = vlaneseq
        %v1763 = vshrl.u32 %v1762, 7
        %v1764 = vsub.s32 3, %v1763
        %v1765 = vrot.slane %v1531, %v1764
        %v1766 = vlaneseq
        %v1767 = vshrl.u32 %v1766, 7
        %v1768 = vsub.s32 4, %v1767
        %v1769 = vrot.slane %v1531, %v1768
        %v1770 = vlaneseq
        %v1771 = vshrl.u32 %v1770, 7
        %v1772 = vsub.s32 5, %v1771
        %v1773 = vrot.slane %v1531, %v1772
        %v1774 = vlaneseq
        %v1775 = vshrl.u32 %v1774, 7
        %v1776 = vsub.s32 6, %v1775
        %v1777 = vrot.slane %v1531, %v1776
        %v1778 = vlaneseq
        %v1779 = vshrl.u32 %v1778, 7
        %v1780 = vsub.s32 7, %v1779
        %v1781 = vrot.slane %v1531, %v1780
        %v1782 = vlaneseq
        %v1783 = vshrl.u32 %v1782, 7
        %v1784 = vsub.s32 0, %v1783
        %v1785 = vrot.slane %v1532, %v1784
        %v1786 = vlaneseq
        %v1787 = vshrl.u32 %v1786, 7
        %v1788 = vsub.s32 1, %v1787
        %v1789 = vrot.slane %v1532, %v1788
        %v1790 = vlaneseq
        %v1791 = vshrl.u32 %v1790, 7
        %v1792 = vsub.s32 2, %v1791
        %v1793 = vrot.slane %v1532, %v1792
        %v1794 = vlaneseq
        %v1795 = vshrl.u32 %v1794, 7
        %v1796 = vsub.s32 3, %v1795
        %v1797 = vrot.slane %v1532, %v1796
        %v1798 = vlaneseq
        %v1799 = vshrl.u32 %v1798, 7
        %v1800 = vsub.s32 4, %v1799
        %v1801 = vrot.slane %v1532, %v1800
        %v1802 = vlaneseq
        %v1803 = vshrl.u32 %v1802, 7
        %v1804 = vsub.s32 5, %v1803
        %v1805 = vrot.slane %v1532, %v1804
        %v1806 = vlaneseq
        %v1807 = vshrl.u32 %v1806, 7
        %v1808 = vsub.s32 6, %v1807
        %v1809 = vrot.slane %v1532, %v1808
        %v1810 = vlaneseq
        %v1811 = vshrl.u32 %v1810, 7
        %v1812 = vsub.s32 7, %v1811
        %v1813 = vrot.slane %v1532, %v1812
        %v1814 = vlaneseq
        %v1815 = vshrl.u32 %v1814, 7
        %v1816 = vsub.s32 0, %v1815
        %v1817 = vrot.slane %v1533, %v1816
        %v1818 = vlaneseq
        %v1819 = vshrl.u32 %v1818, 7
        %v1820 = vsub.s32 1, %v1819
        %v1821 = vrot.slane %v1533, %v1820
        %v1822 = vlaneseq
        %v1823 = vshrl.u32 %v1822, 7
        %v1824 = vsub.s32 2, %v1823
        %v1825 = vrot.slane %v1533, %v1824
        %v1826 = vlaneseq
        %v1827 = vshrl.u32 %v1826, 7
        %v1828 = vsub.s32 3, %v1827
        %v1829 = vrot.slane %v1533, %v1828
        %v1830 = vlaneseq
        %v1831 = vshrl.u32 %v1830, 7
        %v1832 = vsub.s32 4, %v1831
        %v1833 = vrot.slane %v1533, %v1832
        %v1834 = vlaneseq
        %v1835 = vshrl.u32 %v1834, 7
        %v1836 = vsub.s32 5, %v1835
        %v1837 = vrot.slane %v1533, %v1836
        %v1838 = vlaneseq
        %v1839 = vshrl.u32 %v1838, 7
        %v1840 = vsub.s32 6, %v1839
        %v1841 = vrot.slane %v1533, %v1840
        %v1842 = vlaneseq
        %v1843 = vshrl.u32 %v1842, 7
        %v1844 = vsub.s32 7, %v1843
        %v1845 = vrot.slane %v1533, %v1844
        %v1846 = vlaneseq
        %v1847 = vshrl.u32 %v1846, 7
        %v1848 = vsub.s32 0, %v1847
        %v1849 = vrot.slane %v1534, %v1848
        %v1850 = vlaneseq
        %v1851 = vshrl.u32 %v1850, 7
        %v1852 = vsub.s32 1, %v1851
        %v1853 = vrot.slane %v1534, %v1852
        %v1854 = vlaneseq
        %v1855 = vshrl.u32 %v1854, 7
        %v1856 = vsub.s32 2, %v1855
        %v1857 = vrot.slane %v1534, %v1856
        %v1858 = vlaneseq
        %v1859 = vshrl.u32 %v1858, 7
        %v1860 = vsub.s32 3, %v1859
        %v1861 = vrot.slane %v1534, %v1860
        %v1862 = vlaneseq
        %v1863 = vshrl.u32 %v1862, 7
        %v1864 = vsub.s32 4, %v1863
        %v1865 = vrot.slane %v1534, %v1864
        %v1866 = vlaneseq
        %v1867 = vshrl.u32 %v1866, 7
        %v1868 = vsub.s32 5, %v1867
        %v1869 = vrot.slane %v1534, %v1868
        %v1870 = vlaneseq
        %v1871 = vshrl.u32 %v1870, 7
        %v1872 = vsub.s32 6, %v1871
        %v1873 = vrot.slane %v1534, %v1872
        %v1874 = vlaneseq
        %v1875 = vshrl.u32 %v1874, 7
        %v1876 = vsub.s32 7, %v1875
        %v1877 = vrot.slane %v1534, %v1876
        %v1878 = vlaneseq
        %v1879 = vshrl.u32 %v1878, 7
        %v1880 = vsub.s32 0, %v1879
        %v1881 = vrot.slane %v1535, %v1880
        %v1882 = vlaneseq
        %v1883 = vshrl.u32 %v1882, 7
        %v1884 = vsub.s32 1, %v1883
        %v1885 = vrot.slane %v1535, %v1884
        %v1886 = vlaneseq
        %v1887 = vshrl.u32 %v1886, 7
        %v1888 = vsub.s32 2, %v1887
        %v1889 = vrot.slane %v1535, %v1888
        %v1890 = vlaneseq
        %v1891 = vshrl.u32 %v1890, 7
        %v1892 = vsub.s32 3, %v1891
        %v1893 = vrot.slane %v1535, %v1892
        %v1894 = vlaneseq
        %v1895 = vshrl.u32 %v1894, 7
        %v1896 = vsub.s32 4, %v1895
        %v1897 = vrot.slane %v1535, %v1896
        %v1898 = vlaneseq
        %v1899 = vshrl.u32 %v1898, 7
        %v1900 = vsub.s32 5, %v1899
        %v1901 = vrot.slane %v1535, %v1900
        %v1902 = vlaneseq
        %v1903 = vshrl.u32 %v1902, 7
        %v1904 = vsub.s32 6, %v1903
        %v1905 = vrot.slane %v1535, %v1904
        %v1906 = vlaneseq
        %v1907 = vshrl.u32 %v1906, 7
        %v1908 = vsub.s32 7, %v1907
        %v1909 = vrot.slane %v1535, %v1908
        %v1910 = vlaneseq
        %v1911 = vshrl.u32 %v1910, 7
        %v1912 = vsub.s32 0, %v1911
        %v1913 = vrot.slane %v1536, %v1912
        %v1914 = vlaneseq
        %v1915 = vshrl.u32 %v1914, 7
        %v1916 = vsub.s32 1, %v1915
        %v1917 = vrot.slane %v1536, %v1916
        %v1918 = vlaneseq
        %v1919 = vshrl.u32 %v1918, 7
        %v1920 = vsub.s32 2, %v1919
        %v1921 = vrot.slane %v1536, %v1920
        %v1922 = vlaneseq
        %v1923 = vshrl.u32 %v1922, 7
        %v1924 = vsub.s32 3, %v1923
        %v1925 = vrot.slane %v1536, %v1924
        %v1926 = vlaneseq
        %v1927 = vshrl.u32 %v1926, 7
        %v1928 = vsub.s32 4, %v1927
        %v1929 = vrot.slane %v1536, %v1928
        %v1930 = vlaneseq
        %v1931 = vshrl.u32 %v1930, 7
        %v1932 = vsub.s32 5, %v1931
        %v1933 = vrot.slane %v1536, %v1932
        %v1934 = vlaneseq
        %v1935 = vshrl.u32 %v1934, 7
        %v1936 = vsub.s32 6, %v1935
        %v1937 = vrot.slane %v1536, %v1936
        %v1938 = vlaneseq
        %v1939 = vshrl.u32 %v1938, 7
        %v1940 = vsub.s32 7, %v1939
        %v1941 = vrot.slane %v1536, %v1940
        %v1942 = vlaneseq
        %v1943 = vshrl.u32 %v1942, 7
        %v1944 = vsub.s32 0, %v1943
        %v1945 = vrot.slane %v1537, %v1944
        %v1946 = vlaneseq
        %v1947 = vshrl.u32 %v1946, 7
        %v1948 = vsub.s32 1, %v1947
        %v1949 = vrot.slane %v1537, %v1948
        %v1950 = vlaneseq
        %v1951 = vshrl.u32 %v1950, 7
        %v1952 = vsub.s32 2, %v1951
        %v1953 = vrot.slane %v1537, %v1952
        %v1954 = vlaneseq
        %v1955 = vshrl.u32 %v1954, 7
        %v1956 = vsub.s32 3, %v1955
        %v1957 = vrot.slane %v1537, %v1956
        %v1958 = vlaneseq
        %v1959 = vshrl.u32 %v1958, 7
        %v1960 = vsub.s32 4, %v1959
        %v1961 = vrot.slane %v1537, %v1960
        %v1962 = vlaneseq
        %v1963 = vshrl.u32 %v1962, 7
        %v1964 = vsub.s32 5, %v1963
        %v1965 = vrot.slane %v1537, %v1964
        %v1966 = vlaneseq
        %v1967 = vshrl.u32 %v1966, 7
        %v1968 = vsub.s32 6, %v1967
        %v1969 = vrot.slane %v1537, %v1968
        %v1970 = vlaneseq
        %v1971 = vshrl.u32 %v1970, 7
        %v1972 = vsub.s32 7, %v1971
        %v1973 = vrot.slane %v1537, %v1972
        %v1974 = vlaneseq
        %v1975 = vshrl.u32 %v1974, 7
        %v1976 = vsub.s32 0, %v1975
        %v1977 = vrot.slane %v1538, %v1976
        %v1978 = vlaneseq
        %v1979 = vshrl.u32 %v1978, 7
        %v1980 = vsub.s32 1, %v1979
        %v1981 = vrot.slane %v1538, %v1980
        %v1982 = vlaneseq
        %v1983 = vshrl.u32 %v1982, 7
        %v1984 = vsub.s32 2, %v1983
        %v1985 = vrot.slane %v1538, %v1984
        %v1986 = vlaneseq
        %v1987 = vshrl.u32 %v1986, 7
        %v1988 = vsub.s32 3, %v1987
        %v1989 = vrot.slane %v1538, %v1988
        %v1990 = vlaneseq
        %v1991 = vshrl.u32 %v1990, 7
        %v1992 = vsub.s32 4, %v1991
        %v1993 = vrot.slane %v1538, %v1992
        %v1994 = vlaneseq
        %v1995 = vshrl.u32 %v1994, 7
        %v1996 = vsub.s32 5, %v1995
        %v1997 = vrot.slane %v1538, %v1996
        %v1998 = vlaneseq
        %v1999 = vshrl.u32 %v1998, 7
        %v2000 = vsub.s32 6, %v1999
        %v2001 = vrot.slane %v1538, %v2000
        %v2002 = vlaneseq
        %v2003 = vshrl.u32 %v2002, 7
        %v2004 = vsub.s32 7, %v2003
        %v2005 = vrot.slane %v1538, %v2004
        %v2006 = vlaneseq
        %v2007 = vshrl.u32 %v2006, 7
        %v2008 = vsub.s32 0, %v2007
        %v2009 = vrot.slane %v1539, %v2008
        %v2010 = vlaneseq
        %v2011 = vshrl.u32 %v2010, 7
        %v2012 = vsub.s32 1, %v2011
        %v2013 = vrot.slane %v1539, %v2012
        %v2014 = vlaneseq
        %v2015 = vshrl.u32 %v2014, 7
        %v2016 = vsub.s32 2, %v2015
        %v2017 = vrot.slane %v1539, %v2016
        %v2018 = vlaneseq
        %v2019 = vshrl.u32 %v2018, 7
        %v2020 = vsub.s32 3, %v2019
        %v2021 = vrot.slane %v1539, %v2020
        %v2022 = vlaneseq
        %v2023 = vshrl.u32 %v2022, 7
        %v2024 = vsub.s32 4, %v2023
        %v2025 = vrot.slane %v1539, %v2024
        %v2026 = vlaneseq
        %v2027 = vshrl.u32 %v2026, 7
        %v2028 = vsub.s32 5, %v2027
        %v2029 = vrot.slane %v1539, %v2028
        %v2030 = vlaneseq
        %v2031 = vshrl.u32 %v2030, 7
        %v2032 = vsub.s32 6, %v2031
        %v2033 = vrot.slane %v1539, %v2032
        %v2034 = vlaneseq
        %v2035 = vshrl.u32 %v2034, 7
        %v2036 = vsub.s32 7, %v2035
        %v2037 = vrot.slane %v1539, %v2036
        %v2038 = vlaneseq
        %v2039 = vshrl.u32 %v2038, 7
        %v2040 = vsub.s32 0, %v2039
        %v2041 = vrot.slane %v1540, %v2040
        %v2042 = vlaneseq
        %v2043 = vshrl.u32 %v2042, 7
        %v2044 = vsub.s32 1, %v2043
        %v2045 = vrot.slane %v1540, %v2044
        %v2046 = vlaneseq
        %v2047 = vshrl.u32 %v2046, 7
        %v2048 = vsub.s32 2, %v2047
        %v2049 = vrot.slane %v1540, %v2048
        %v2050 = vlaneseq
        %v2051 = vshrl.u32 %v2050, 7
        %v2052 = vsub.s32 3, %v2051
        %v2053 = vrot.slane %v1540, %v2052
        %v2054 = vlaneseq
        %v2055 = vshrl.u32 %v2054, 7
        %v2056 = vsub.s32 4, %v2055
        %v2057 = vrot.slane %v1540, %v2056
        %v2058 = vlaneseq
        %v2059 = vshrl.u32 %v2058, 7
        %v2060 = vsub.s32 5, %v2059
        %v2061 = vrot.slane %v1540, %v2060
        %v2062 = vlaneseq
        %v2063 = vshrl.u32 %v2062, 7
        %v2064 = vsub.s32 6, %v2063
        %v2065 = vrot.slane %v1540, %v2064
        %v2066 = vlaneseq
        %v2067 = vshrl.u32 %v2066, 7
        %v2068 = vsub.s32 7, %v2067
        %v2069 = vrot.slane %v1540, %v2068
        %v2070 = vlaneseq
        %v2071 = vshrl.u32 %v2070, 7
        %v2072 = vsub.s32 0, %v2071
        %v2073 = vrot.slane %v1541, %v2072
        %v2074 = vlaneseq
        %v2075 = vshrl.u32 %v2074, 7
        %v2076 = vsub.s32 1, %v2075
        %v2077 = vrot.slane %v1541, %v2076
        %v2078 = vlaneseq
        %v2079 = vshrl.u32 %v2078, 7
        %v2080 = vsub.s32 2, %v2079
        %v2081 = vrot.slane %v1541, %v2080
        %v2082 = vlaneseq
        %v2083 = vshrl.u32 %v2082, 7
        %v2084 = vsub.s32 3, %v2083
        %v2085 = vrot.slane %v1541, %v2084
        %v2086 = vlaneseq
        %v2087 = vshrl.u32 %v2086, 7
        %v2088 = vsub.s32 4, %v2087
        %v2089 = vrot.slane %v1541, %v2088
        %v2090 = vlaneseq
        %v2091 = vshrl.u32 %v2090, 7
        %v2092 = vsub.s32 5, %v2091
        %v2093 = vrot.slane %v1541, %v2092
        %v2094 = vlaneseq
        %v2095 = vshrl.u32 %v2094, 7
        %v2096 = vsub.s32 6, %v2095
        %v2097 = vrot.slane %v1541, %v2096
        %v2098 = vlaneseq
        %v2099 = vshrl.u32 %v2098, 7
        %v2100 = vsub.s32 7, %v2099
        %v2101 = vrot.slane %v1541, %v2100
        %v2102 = vlaneseq
        %v2103 = vshrl.u32 %v2102, 7
        %v2104 = vsub.s32 0, %v2103
        %v2105 = vrot.slane %v1542, %v2104
        %v2106 = vlaneseq
        %v2107 = vshrl.u32 %v2106, 7
        %v2108 = vsub.s32 1, %v2107
        %v2109 = vrot.slane %v1542, %v2108
        %v2110 = vlaneseq
        %v2111 = vshrl.u32 %v2110, 7
        %v2112 = vsub.s32 2, %v2111
        %v2113 = vrot.slane %v1542, %v2112
        %v2114 = vlaneseq
        %v2115 = vshrl.u32 %v2114, 7
        %v2116 = vsub.s32 3, %v2115
        %v2117 = vrot.slane %v1542, %v2116
        %v2118 = vlaneseq
        %v2119 = vshrl.u32 %v2118, 7
        %v2120 = vsub.s32 4, %v2119
        %v2121 = vrot.slane %v1542, %v2120
        %v2122 = vlaneseq
        %v2123 = vshrl.u32 %v2122, 7
        %v2124 = vsub.s32 5, %v2123
        %v2125 = vrot.slane %v1542, %v2124
        %v2126 = vlaneseq
        %v2127 = vshrl.u32 %v2126, 7
        %v2128 = vsub.s32 6, %v2127
        %v2129 = vrot.slane %v1542, %v2128
        %v2130 = vlaneseq
        %v2131 = vshrl.u32 %v2130, 7
        %v2132 = vsub.s32 7, %v2131
        %v2133 = vrot.slane %v1542, %v2132
        %v2134 = vlaneseq
        %v2135 = vshrl.u32 %v2134, 7
        %v2136 = vsub.s32 0, %v2135
        %v2137 = vrot.slane %v1543, %v2136
        %v2138 = vlaneseq
        %v2139 = vshrl.u32 %v2138, 7
        %v2140 = vsub.s32 1, %v2139
        %v2141 = vrot.slane %v1543, %v2140
        %v2142 = vlaneseq
        %v2143 = vshrl.u32 %v2142, 7
        %v2144 = vsub.s32 2, %v2143
        %v2145 = vrot.slane %v1543, %v2144
        %v2146 = vlaneseq
        %v2147 = vshrl.u32 %v2146, 7
        %v2148 = vsub.s32 3, %v2147
        %v2149 = vrot.slane %v1543, %v2148
        %v2150 = vlaneseq
        %v2151 = vshrl.u32 %v2150, 7
        %v2152 = vsub.s32 4, %v2151
        %v2153 = vrot.slane %v1543, %v2152
        %v2154 = vlaneseq
        %v2155 = vshrl.u32 %v2154, 7
        %v2156 = vsub.s32 5, %v2155
        %v2157 = vrot.slane %v1543, %v2156
        %v2158 = vlaneseq
        %v2159 = vshrl.u32 %v2158, 7
        %v2160 = vsub.s32 6, %v2159
        %v2161 = vrot.slane %v1543, %v2160
        %v2162 = vlaneseq
        %v2163 = vshrl.u32 %v2162, 7
        %v2164 = vsub.s32 7, %v2163
        %v2165 = vrot.slane %v1543, %v2164
        %v2166 = vlaneseq
        %v2167 = vshrl.u32 %v2166, 7
        %v2168 = vsub.s32 0, %v2167
        %v2169 = vrot.slane %v1544, %v2168
        %v2170 = vlaneseq
        %v2171 = vshrl.u32 %v2170, 7
        %v2172 = vsub.s32 1, %v2171
        %v2173 = vrot.slane %v1544, %v2172
        %v2174 = vlaneseq
        %v2175 = vshrl.u32 %v2174, 7
        %v2176 = vsub.s32 2, %v2175
        %v2177 = vrot.slane %v1544, %v2176
        %v2178 = vlaneseq
        %v2179 = vshrl.u32 %v2178, 7
        %v2180 = vsub.s32 3, %v2179
        %v2181 = vrot.slane %v1544, %v2180
        %v2182 = vlaneseq
        %v2183 = vshrl.u32 %v2182, 7
        %v2184 = vsub.s32 4, %v2183
        %v2185 = vrot.slane %v1544, %v2184
        %v2186 = vlaneseq
        %v2187 = vshrl.u32 %v2186, 7
        %v2188 = vsub.s32 5, %v2187
        %v2189 = vrot.slane %v1544, %v2188
        %v2190 = vlaneseq
        %v2191 = vshrl.u32 %v2190, 7
        %v2192 = vsub.s32 6, %v2191
        %v2193 = vrot.slane %v1544, %v2192
        %v2194 = vlaneseq
        %v2195 = vshrl.u32 %v2194, 7
        %v2196 = vsub.s32 7, %v2195
        %v2197 = vrot.slane %v1544, %v2196
        %v2198 = vlaneseq
        %v2199 = vshrl.u32 %v2198, 7
        %v2200 = vsub.s32 0, %v2199
        %v2201 = vrot.slane %v1545, %v2200
        %v2202 = vlaneseq
        %v2203 = vshrl.u32 %v2202, 7
        %v2204 = vsub.s32 1, %v2203
        %v2205 = vrot.slane %v1545, %v2204
        %v2206 = vlaneseq
        %v2207 = vshrl.u32 %v2206, 7
        %v2208 = vsub.s32 2, %v2207
        %v2209 = vrot.slane %v1545, %v2208
        %v2210 = vlaneseq
        %v2211 = vshrl.u32 %v2210, 7
        %v2212 = vsub.s32 3, %v2211
        %v2213 = vrot.slane %v1545, %v2212
        %v2214 = vlaneseq
        %v2215 = vshrl.u32 %v2214, 7
        %v2216 = vsub.s32 4, %v2215
        %v2217 = vrot.slane %v1545, %v2216
        %v2218 = vlaneseq
        %v2219 = vshrl.u32 %v2218, 7
        %v2220 = vsub.s32 5, %v2219
        %v2221 = vrot.slane %v1545, %v2220
        %v2222 = vlaneseq
        %v2223 = vshrl.u32 %v2222, 7
        %v2224 = vsub.s32 6, %v2223
        %v2225 = vrot.slane %v1545, %v2224
        %v2226 = vlaneseq
        %v2227 = vshrl.u32 %v2226, 7
        %v2228 = vsub.s32 7, %v2227
        %v2229 = vrot.slane %v1545, %v2228
        %v2230 = vlaneseq
        %v2231 = vshrl.u32 %v2230, 7
        %v2232 = vsub.s32 0, %v2231
        %v2233 = vrot.slane %v1546, %v2232
        %v2234 = vlaneseq
        %v2235 = vshrl.u32 %v2234, 7
        %v2236 = vsub.s32 1, %v2235
        %v2237 = vrot.slane %v1546, %v2236
        %v2238 = vlaneseq
        %v2239 = vshrl.u32 %v2238, 7
        %v2240 = vsub.s32 2, %v2239
        %v2241 = vrot.slane %v1546, %v2240
        %v2242 = vlaneseq
        %v2243 = vshrl.u32 %v2242, 7
        %v2244 = vsub.s32 3, %v2243
        %v2245 = vrot.slane %v1546, %v2244
        %v2246 = vlaneseq
        %v2247 = vshrl.u32 %v2246, 7
        %v2248 = vsub.s32 4, %v2247
        %v2249 = vrot.slane %v1546, %v2248
        %v2250 = vlaneseq
        %v2251 = vshrl.u32 %v2250, 7
        %v2252 = vsub.s32 5, %v2251
        %v2253 = vrot.slane %v1546, %v2252
        %v2254 = vlaneseq
        %v2255 = vshrl.u32 %v2254, 7
        %v2256 = vsub.s32 6, %v2255
        %v2257 = vrot.slane %v1546, %v2256
        %v2258 = vlaneseq
        %v2259 = vshrl.u32 %v2258, 7
        %v2260 = vsub.s32 7, %v2259
        %v2261 = vrot.slane %v1546, %v2260
        %v2262 = vlaneseq
        %v2263 = vshrl.u32 %v2262, 7
        %v2264 = vsub.s32 0, %v2263
        %v2265 = vrot.slane %v1547, %v2264
        %v2266 = vlaneseq
        %v2267 = vshrl.u32 %v2266, 7
        %v2268 = vsub.s32 1, %v2267
        %v2269 = vrot.slane %v1547, %v2268
        %v2270 = vlaneseq
        %v2271 = vshrl.u32 %v2270, 7
        %v2272 = vsub.s32 2, %v2271
        %v2273 = vrot.slane %v1547, %v2272
        %v2274 = vlaneseq
        %v2275 = vshrl.u32 %v2274, 7
        %v2276 = vsub.s32 3, %v2275
        %v2277 = vrot.slane %v1547, %v2276
        %v2278 = vlaneseq
        %v2279 = vshrl.u32 %v2278, 7
        %v2280 = vsub.s32 4, %v2279
        %v2281 = vrot.slane %v1547, %v2280
        %v2282 = vlaneseq
        %v2283 = vshrl.u32 %v2282, 7
        %v2284 = vsub.s32 5, %v2283
        %v2285 = vrot.slane %v1547, %v2284
        %v2286 = vlaneseq
        %v2287 = vshrl.u32 %v2286, 7
        %v2288 = vsub.s32 6, %v2287
        %v2289 = vrot.slane %v1547, %v2288
        %v2290 = vlaneseq
        %v2291 = vshrl.u32 %v2290, 7
        %v2292 = vsub.s32 7, %v2291
        %v2293 = vrot.slane %v1547, %v2292
        %v2294 = vlaneseq
        %v2295 = vshrl.u32 %v2294, 7
        %v2296 = vsub.s32 0, %v2295
        %v2297 = vrot.slane %v1548, %v2296
        %v2298 = vlaneseq
        %v2299 = vshrl.u32 %v2298, 7
        %v2300 = vsub.s32 1, %v2299
        %v2301 = vrot.slane %v1548, %v2300
        %v2302 = vlaneseq
        %v2303 = vshrl.u32 %v2302, 7
        %v2304 = vsub.s32 2, %v2303
        %v2305 = vrot.slane %v1548, %v2304
        %v2306 = vlaneseq
        %v2307 = vshrl.u32 %v2306, 7
        %v2308 = vsub.s32 3, %v2307
        %v2309 = vrot.slane %v1548, %v2308
        %v2310 = vlaneseq
        %v2311 = vshrl.u32 %v2310, 7
        %v2312 = vsub.s32 4, %v2311
        %v2313 = vrot.slane %v1548, %v2312
        %v2314 = vlaneseq
        %v2315 = vshrl.u32 %v2314, 7
        %v2316 = vsub.s32 5, %v2315
        %v2317 = vrot.slane %v1548, %v2316
        %v2318 = vlaneseq
        %v2319 = vshrl.u32 %v2318, 7
        %v2320 = vsub.s32 6, %v2319
        %v2321 = vrot.slane %v1548, %v2320
        %v2322 = vlaneseq
        %v2323 = vshrl.u32 %v2322, 7
        %v2324 = vsub.s32 7, %v2323
        %v2325 = vrot.slane %v1548, %v2324
        %v2326 = vlaneseq
        %v2327 = vshrl.u32 %v2326, 7
        %v2328 = vsub.s32 0, %v2327
        %v2329 = vrot.slane %v1549, %v2328
        %v2330 = vlaneseq
        %v2331 = vshrl.u32 %v2330, 7
        %v2332 = vsub.s32 1, %v2331
        %v2333 = vrot.slane %v1549, %v2332
        %v2334 = vlaneseq
        %v2335 = vshrl.u32 %v2334, 7
        %v2336 = vsub.s32 2, %v2335
        %v2337 = vrot.slane %v1549, %v2336
        %v2338 = vlaneseq
        %v2339 = vshrl.u32 %v2338, 7
        %v2340 = vsub.s32 3, %v2339
        %v2341 = vrot.slane %v1549, %v2340
        %v2342 = vlaneseq
        %v2343 = vshrl.u32 %v2342, 7
        %v2344 = vsub.s32 4, %v2343
        %v2345 = vrot.slane %v1549, %v2344
        %v2346 = vlaneseq
        %v2347 = vshrl.u32 %v2346, 7
        %v2348 = vsub.s32 5, %v2347
        %v2349 = vrot.slane %v1549, %v2348
        %v2350 = vlaneseq
        %v2351 = vshrl.u32 %v2350, 7
        %v2352 = vsub.s32 6, %v2351
        %v2353 = vrot.slane %v1549, %v2352
        %v2354 = vlaneseq
        %v2355 = vshrl.u32 %v2354, 7
        %v2356 = vsub.s32 7, %v2355
        %v2357 = vrot.slane %v1549, %v2356
        %v2358 = vlaneseq
        %v2359 = vshrl.u32 %v2358, 7
        %v2360 = vsub.s32 0, %v2359
        %v2361 = vrot.slane %v1550, %v2360
        %v2362 = vlaneseq
        %v2363 = vshrl.u32 %v2362, 7
        %v2364 = vsub.s32 1, %v2363
        %v2365 = vrot.slane %v1550, %v2364
        %v2366 = vlaneseq
        %v2367 = vshrl.u32 %v2366, 7
        %v2368 = vsub.s32 2, %v2367
        %v2369 = vrot.slane %v1550, %v2368
        %v2370 = vlaneseq
        %v2371 = vshrl.u32 %v2370, 7
        %v2372 = vsub.s32 3, %v2371
        %v2373 = vrot.slane %v1550, %v2372
        %v2374 = vlaneseq
        %v2375 = vshrl.u32 %v2374, 7
        %v2376 = vsub.s32 4, %v2375
        %v2377 = vrot.slane %v1550, %v2376
        %v2378 = vlaneseq
        %v2379 = vshrl.u32 %v2378, 7
        %v2380 = vsub.s32 5, %v2379
        %v2381 = vrot.slane %v1550, %v2380
        %v2382 = vlaneseq
        %v2383 = vshrl.u32 %v2382, 7
        %v2384 = vsub.s32 6, %v2383
        %v2385 = vrot.slane %v1550, %v2384
        %v2386 = vlaneseq
        %v2387 = vshrl.u32 %v2386, 7
        %v2388 = vsub.s32 7, %v2387
        %v2389 = vrot.slane %v1550, %v2388
        %v2390 = vlaneseq
        %v2391 = vshrl.u32 %v2390, 7
        %v2392 = vsub.s32 0, %v2391
        %v2393 = vrot.slane %v1551, %v2392
        %v2394 = vlaneseq
        %v2395 = vshrl.u32 %v2394, 7
        %v2396 = vsub.s32 1, %v2395
        %v2397 = vrot.slane %v1551, %v2396
        %v2398 = vlaneseq
        %v2399 = vshrl.u32 %v2398, 7
        %v2400 = vsub.s32 2, %v2399
        %v2401 = vrot.slane %v1551, %v2400
        %v2402 = vlaneseq
        %v2403 = vshrl.u32 %v2402, 7
        %v2404 = vsub.s32 3, %v2403
        %v2405 = vrot.slane %v1551, %v2404
        %v2406 = vlaneseq
        %v2407 = vshrl.u32 %v2406, 7
        %v2408 = vsub.s32 4, %v2407
        %v2409 = vrot.slane %v1551, %v2408
        %v2410 = vlaneseq
        %v2411 = vshrl.u32 %v2410, 7
        %v2412 = vsub.s32 5, %v2411
        %v2413 = vrot.slane %v1551, %v2412
        %v2414 = vlaneseq
        %v2415 = vshrl.u32 %v2414, 7
        %v2416 = vsub.s32 6, %v2415
        %v2417 = vrot.slane %v1551, %v2416
        %v2418 = vlaneseq
        %v2419 = vshrl.u32 %v2418, 7
        %v2420 = vsub.s32 7, %v2419
        %v2421 = vrot.slane %v1551, %v2420
        %v2422 = vlaneseq
        %v2423 = vshrl.u32 %v2422, 7
        %v2424 = vsub.s32 0, %v2423
        %v2425 = vrot.slane %v1552, %v2424
        %v2426 = vlaneseq
        %v2427 = vshrl.u32 %v2426, 7
        %v2428 = vsub.s32 1, %v2427
        %v2429 = vrot.slane %v1552, %v2428
        %v2430 = vlaneseq
        %v2431 = vshrl.u32 %v2430, 7
        %v2432 = vsub.s32 2, %v2431
        %v2433 = vrot.slane %v1552, %v2432
        %v2434 = vlaneseq
        %v2435 = vshrl.u32 %v2434, 7
        %v2436 = vsub.s32 3, %v2435
        %v2437 = vrot.slane %v1552, %v2436
        %v2438 = vlaneseq
        %v2439 = vshrl.u32 %v2438, 7
        %v2440 = vsub.s32 4, %v2439
        %v2441 = vrot.slane %v1552, %v2440
        %v2442 = vlaneseq
        %v2443 = vshrl.u32 %v2442, 7
        %v2444 = vsub.s32 5, %v2443
        %v2445 = vrot.slane %v1552, %v2444
        %v2446 = vlaneseq
        %v2447 = vshrl.u32 %v2446, 7
        %v2448 = vsub.s32 6, %v2447
        %v2449 = vrot.slane %v1552, %v2448
        %v2450 = vlaneseq
        %v2451 = vshrl.u32 %v2450, 7
        %v2452 = vsub.s32 7, %v2451
        %v2453 = vrot.slane %v1552, %v2452
        %v2454 = vlaneseq
        %v2455 = vshrl.u32 %v2454, 7
        %v2456 = vsub.s32 0, %v2455
        %v2457 = vrot.slane %v1553, %v2456
        %v2458 = vlaneseq
        %v2459 = vshrl.u32 %v2458, 7
        %v2460 = vsub.s32 1, %v2459
        %v2461 = vrot.slane %v1553, %v2460
        %v2462 = vlaneseq
        %v2463 = vshrl.u32 %v2462, 7
        %v2464 = vsub.s32 2, %v2463
        %v2465 = vrot.slane %v1553, %v2464
        %v2466 = vlaneseq
        %v2467 = vshrl.u32 %v2466, 7
        %v2468 = vsub.s32 3, %v2467
        %v2469 = vrot.slane %v1553, %v2468
        %v2470 = vlaneseq
        %v2471 = vshrl.u32 %v2470, 7
        %v2472 = vsub.s32 4, %v2471
        %v2473 = vrot.slane %v1553, %v2472
        %v2474 = vlaneseq
        %v2475 = vshrl.u32 %v2474, 7
        %v2476 = vsub.s32 5, %v2475
        %v2477 = vrot.slane %v1553, %v2476
        %v2478 = vlaneseq
        %v2479 = vshrl.u32 %v2478, 7
        %v2480 = vsub.s32 6, %v2479
        %v2481 = vrot.slane %v1553, %v2480
        %v2482 = vlaneseq
        %v2483 = vshrl.u32 %v2482, 7
        %v2484 = vsub.s32 7, %v2483
        %v2485 = vrot.slane %v1553, %v2484
        %v2486 = vlaneseq
        %v2487 = vshrl.u32 %v2486, 7
        %v2488 = vsub.s32 0, %v2487
        %v2489 = vrot.slane %v1554, %v2488
        %v2490 = vlaneseq
        %v2491 = vshrl.u32 %v2490, 7
        %v2492 = vsub.s32 1, %v2491
        %v2493 = vrot.slane %v1554, %v2492
        %v2494 = vlaneseq
        %v2495 = vshrl.u32 %v2494, 7
        %v2496 = vsub.s32 2, %v2495
        %v2497 = vrot.slane %v1554, %v2496
        %v2498 = vlaneseq
        %v2499 = vshrl.u32 %v2498, 7
        %v2500 = vsub.s32 3, %v2499
        %v2501 = vrot.slane %v1554, %v2500
        %v2502 = vlaneseq
        %v2503 = vshrl.u32 %v2502, 7
        %v2504 = vsub.s32 4, %v2503
        %v2505 = vrot.slane %v1554, %v2504
        %v2506 = vlaneseq
        %v2507 = vshrl.u32 %v2506, 7
        %v2508 = vsub.s32 5, %v2507
        %v2509 = vrot.slane %v1554, %v2508
        %v2510 = vlaneseq
        %v2511 = vshrl.u32 %v2510, 7
        %v2512 = vsub.s32 6, %v2511
        %v2513 = vrot.slane %v1554, %v2512
        %v2514 = vlaneseq
        %v2515 = vshrl.u32 %v2514, 7
        %v2516 = vsub.s32 7, %v2515
        %v2517 = vrot.slane %v1554, %v2516
        %v2518 = vlaneseq
        %v2519 = vshrl.u32 %v2518, 7
        %v2520 = vsub.s32 0, %v2519
        %v2521 = vrot.slane %v1555, %v2520
        %v2522 = vlaneseq
        %v2523 = vshrl.u32 %v2522, 7
        %v2524 = vsub.s32 1, %v2523
        %v2525 = vrot.slane %v1555, %v2524
        %v2526 = vlaneseq
        %v2527 = vshrl.u32 %v2526, 7
        %v2528 = vsub.s32 2, %v2527
        %v2529 = vrot.slane %v1555, %v2528
        %v2530 = vlaneseq
        %v2531 = vshrl.u32 %v2530, 7
        %v2532 = vsub.s32 3, %v2531
        %v2533 = vrot.slane %v1555, %v2532
        %v2534 = vlaneseq
        %v2535 = vshrl.u32 %v2534, 7
        %v2536 = vsub.s32 4, %v2535
        %v2537 = vrot.slane %v1555, %v2536
        %v2538 = vlaneseq
        %v2539 = vshrl.u32 %v2538, 7
        %v2540 = vsub.s32 5, %v2539
        %v2541 = vrot.slane %v1555, %v2540
        %v2542 = vlaneseq
        %v2543 = vshrl.u32 %v2542, 7
        %v2544 = vsub.s32 6, %v2543
        %v2545 = vrot.slane %v1555, %v2544
        %v2546 = vlaneseq
        %v2547 = vshrl.u32 %v2546, 7
        %v2548 = vsub.s32 7, %v2547
        %v2549 = vrot.slane %v1555, %v2548
        %v2550 = vlaneseq
        %v2551 = vshrl.u32 %v2550, 7
        %v2552 = vsub.s32 0, %v2551
        %v2553 = vrot.slane %v1556, %v2552
        %v2554 = vlaneseq
        %v2555 = vshrl.u32 %v2554, 7
        %v2556 = vsub.s32 1, %v2555
        %v2557 = vrot.slane %v1556, %v2556
        %v2558 = vlaneseq
        %v2559 = vshrl.u32 %v2558, 7
        %v2560 = vsub.s32 2, %v2559
        %v2561 = vrot.slane %v1556, %v2560
        %v2562 = vlaneseq
        %v2563 = vshrl.u32 %v2562, 7
        %v2564 = vsub.s32 3, %v2563
        %v2565 = vrot.slane %v1556, %v2564
        %v2566 = vlaneseq
        %v2567 = vshrl.u32 %v2566, 7
        %v2568 = vsub.s32 4, %v2567
        %v2569 = vrot.slane %v1556, %v2568
        %v2570 = vlaneseq
        %v2571 = vshrl.u32 %v2570, 7
        %v2572 = vsub.s32 5, %v2571
        %v2573 = vrot.slane %v1556, %v2572
        %v2574 = vlaneseq
        %v2575 = vshrl.u32 %v2574, 7
        %v2576 = vsub.s32 6, %v2575
        %v2577 = vrot.slane %v1556, %v2576
        %v2578 = vlaneseq
        %v2579 = vshrl.u32 %v2578, 7
        %v2580 = vsub.s32 7, %v2579
        %v2581 = vrot.slane %v1556, %v2580
        %v2582 = vlaneseq
        %v2583 = vshrl.u32 %v2582, 7
        %v2584 = vsub.s32 0, %v2583
        %v2585 = vrot.slane %v1557, %v2584
        %v2586 = vlaneseq
        %v2587 = vshrl.u32 %v2586, 7
        %v2588 = vsub.s32 1, %v2587
        %v2589 = vrot.slane %v1557, %v2588
        %v2590 = vlaneseq
        %v2591 = vshrl.u32 %v2590, 7
        %v2592 = vsub.s32 2, %v2591
        %v2593 = vrot.slane %v1557, %v2592
        %v2594 = vlaneseq
        %v2595 = vshrl.u32 %v2594, 7
        %v2596 = vsub.s32 3, %v2595
        %v2597 = vrot.slane %v1557, %v2596
        %v2598 = vlaneseq
        %v2599 = vshrl.u32 %v2598, 7
        %v2600 = vsub.s32 4, %v2599
        %v2601 = vrot.slane %v1557, %v2600
        %v2602 = vlaneseq
        %v2603 = vshrl.u32 %v2602, 7
        %v2604 = vsub.s32 5, %v2603
        %v2605 = vrot.slane %v1557, %v2604
        %v2606 = vlaneseq
        %v2607 = vshrl.u32 %v2606, 7
        %v2608 = vsub.s32 6, %v2607
        %v2609 = vrot.slane %v1557, %v2608
        %v2610 = vlaneseq
        %v2611 = vshrl.u32 %v2610, 7
        %v2612 = vsub.s32 7, %v2611
        %v2613 = vrot.slane %v1557, %v2612
        %v2614 = vcombine.low %v1593, %v1597
        %v2615 = vcombine.low %v1601, %v1605
        %v2616 = vcombine.low %v1609, %v1613
        %v2617 = vcombine.low %v1617, %v1621
        %v2619 = vunpack.c.l.s4 1966171168
        %v2620 = vunpack.c.0.s8 %v2619
        %v2621 = vlaneseq
        %v2622 = vshrl.u32 %v2621, 7
        %v2623 = vsub.s32 %v2620, %v2622
        %v2624 = vrot.slane %v2614, %v2623
        %v2626 = vunpack.c.l.s4 1966171168
        %v2627 = vunpack.c.0.s8 %v2626
        %v2628 = vlaneseq
        %v2629 = vshrl.u32 %v2628, 7
        %v2630 = vsub.s32 %v2627, %v2629
        %v2631 = vrot.slane %v2615, %v2630
        %v2633 = vunpack.c.l.s4 1966171168
        %v2634 = vunpack.c.0.s8 %v2633
        %v2635 = vlaneseq
        %v2636 = vshrl.u32 %v2635, 7
        %v2637 = vsub.s32 %v2634, %v2636
        %v2638 = vrot.slane %v2616, %v2637
        %v2640 = vunpack.c.l.s4 1966171168
        %v2641 = vunpack.c.0.s8 %v2640
        %v2642 = vlaneseq
        %v2643 = vshrl.u32 %v2642, 7
        %v2644 = vsub.s32 %v2641, %v2643
        %v2645 = vrot.slane %v2617, %v2644
        %v2646 = vcombine.low %v2624, %v2631
        %v2647 = vcombine.low %v2638, %v2645
        %v2649 = vunpack.c.l.s4 1966171168
        %v2650 = vunpack.c.0.s8 %v2649
        %v2651 = vlaneseq
        %v2652 = vshrl.u32 %v2651, 7
        %v2653 = vsub.s32 %v2650, %v2652
        %v2654 = vrot.slane %v2646, %v2653
        %v2656 = vunpack.c.l.s4 1966171168
        %v2657 = vunpack.c.0.s8 %v2656
        %v2658 = vlaneseq
        %v2659 = vshrl.u32 %v2658, 7
        %v2660 = vsub.s32 %v2657, %v2659
        %v2661 = vrot.slane %v2647, %v2660
        %v2662 = vcombine.low %v2654, %v2661
        %v2663 = vcombine.low %v1625, %v1629
        %v2664 = vcombine.low %v1633, %v1637
        %v2665 = vcombine.low %v1641, %v1645
        %v2666 = vcombine.low %v1649, %v1653
        %v2668 = vunpack.c.l.s4 1966171168
        %v2669 = vunpack.c.0.s8 %v2668
        %v2670 = vlaneseq
        %v2671 = vshrl.u32 %v2670, 7
        %v2672 = vsub.s32 %v2669, %v2671
        %v2673 = vrot.slane %v2663, %v2672
        %v2675 = vunpack.c.l.s4 1966171168
        %v2676 = vunpack.c.0.s8 %v2675
        %v2677 = vlaneseq
        %v2678 = vshrl.u32 %v2677, 7
        %v2679 = vsub.s32 %v2676, %v2678
        %v2680 = vrot.slane %v2664, %v2679
        %v2682 = vunpack.c.l.s4 1966171168
        %v2683 = vunpack.c.0.s8 %v2682
        %v2684 = vlaneseq
        %v2685 = vshrl.u32 %v2684, 7
        %v2686 = vsub.s32 %v2683, %v2685
        %v2687 = vrot.slane %v2665, %v2686
        %v2689 = vunpack.c.l.s4 1966171168
        %v2690 = vunpack.c.0.s8 %v2689
        %v2691 = vlaneseq
        %v2692 = vshrl.u32 %v2691, 7
        %v2693 = vsub.s32 %v2690, %v2692
        %v2694 = vrot.slane %v2666, %v2693
        %v2695 = vcombine.low %v2673, %v2680
        %v2696 = vcombine.low %v2687, %v2694
        %v2698 = vunpack.c.l.s4 1966171168
        %v2699 = vunpack.c.0.s8 %v2698
        %v2700 = vlaneseq
        %v2701 = vshrl.u32 %v2700, 7
        %v2702 = vsub.s32 %v2699, %v2701
        %v2703 = vrot.slane %v2695, %v2702
        %v2705 = vunpack.c.l.s4 1966171168
        %v2706 = vunpack.c.0.s8 %v2705
        %v2707 = vlaneseq
        %v2708 = vshrl.u32 %v2707, 7
        %v2709 = vsub.s32 %v2706, %v2708
        %v2710 = vrot.slane %v2696, %v2709
        %v2711 = vcombine.low %v2703, %v2710
        %v2712 = vcombine.low %v1657, %v1661
        %v2713 = vcombine.low %v1665, %v1669
        %v2714 = vcombine.low %v1673, %v1677
        %v2715 = vcombine.low %v1681, %v1685
        %v2717 = vunpack.c.l.s4 1966171168
        %v2718 = vunpack.c.0.s8 %v2717
        %v2719 = vlaneseq
        %v2720 = vshrl.u32 %v2719, 7
        %v2721 = vsub.s32 %v2718, %v2720
        %v2722 = vrot.slane %v2712, %v2721
        %v2724 = vunpack.c.l.s4 1966171168
        %v2725 = vunpack.c.0.s8 %v2724
        %v2726 = vlaneseq
        %v2727 = vshrl.u32 %v2726, 7
        %v2728 = vsub.s32 %v2725, %v2727
        %v2729 = vrot.slane %v2713, %v2728
        %v2731 = vunpack.c.l.s4 1966171168
        %v2732 = vunpack.c.0.s8 %v2731
        %v2733 = vlaneseq
        %v2734 = vshrl.u32 %v2733, 7
        %v2735 = vsub.s32 %v2732, %v2734
        %v2736 = vrot.slane %v2714, %v2735
        %v2738 = vunpack.c.l.s4 1966171168
        %v2739 = vunpack.c.0.s8 %v2738
        %v2740 = vlaneseq
        %v2741 = vshrl.u32 %v2740, 7
        %v2742 = vsub.s32 %v2739, %v2741
        %v2743 = vrot.slane %v2715, %v2742
        %v2744 = vcombine.low %v2722, %v2729
        %v2745 = vcombine.low %v2736, %v2743
        %v2747 = vunpack.c.l.s4 1966171168
        %v2748 = vunpack.c.0.s8 %v2747
        %v2749 = vlaneseq
        %v2750 = vshrl.u32 %v2749, 7
        %v2751 = vsub.s32 %v2748, %v2750
        %v2752 = vrot.slane %v2744, %v2751
        %v2754 = vunpack.c.l.s4 1966171168
        %v2755 = vunpack.c.0.s8 %v2754
        %v2756 = vlaneseq
        %v2757 = vshrl.u32 %v2756, 7
        %v2758 = vsub.s32 %v2755, %v2757
        %v2759 = vrot.slane %v2745, %v2758
        %v2760 = vcombine.low %v2752, %v2759
        %v2761 = vcombine.low %v1689, %v1693
        %v2762 = vcombine.low %v1697, %v1701
        %v2763 = vcombine.low %v1705, %v1709
        %v2764 = vcombine.low %v1713, %v1717
        %v2766 = vunpack.c.l.s4 1966171168
        %v2767 = vunpack.c.0.s8 %v2766
        %v2768 = vlaneseq
        %v2769 = vshrl.u32 %v2768, 7
        %v2770 = vsub.s32 %v2767, %v2769
        %v2771 = vrot.slane %v2761, %v2770
        %v2773 = vunpack.c.l.s4 1966171168
        %v2774 = vunpack.c.0.s8 %v2773
        %v2775 = vlaneseq
        %v2776 = vshrl.u32 %v2775, 7
        %v2777 = vsub.s32 %v2774, %v2776
        %v2778 = vrot.slane %v2762, %v2777
        %v2780 = vunpack.c.l.s4 1966171168
        %v2781 = vunpack.c.0.s8 %v2780
        %v2782 = vlaneseq
        %v2783 = vshrl.u32 %v2782, 7
        %v2784 = vsub.s32 %v2781, %v2783
        %v2785 = vrot.slane %v2763, %v2784
        %v2787 = vunpack.c.l.s4 1966171168
        %v2788 = vunpack.c.0.s8 %v2787
        %v2789 = vlaneseq
        %v2790 = vshrl.u32 %v2789, 7
        %v2791 = vsub.s32 %v2788, %v2790
        %v2792 = vrot.slane %v2764, %v2791
        %v2793 = vcombine.low %v2771, %v2778
        %v2794 = vcombine.low %v2785, %v2792
        %v2796 = vunpack.c.l.s4 1966171168
        %v2797 = vunpack.c.0.s8 %v2796
        %v2798 = vlaneseq
        %v2799 = vshrl.u32 %v2798, 7
        %v2800 = vsub.s32 %v2797, %v2799
        %v2801 = vrot.slane %v2793, %v2800
        %v2803 = vunpack.c.l.s4 1966171168
        %v2804 = vunpack.c.0.s8 %v2803
        %v2805 = vlaneseq
        %v2806 = vshrl.u32 %v2805, 7
        %v2807 = vsub.s32 %v2804, %v2806
        %v2808 = vrot.slane %v2794, %v2807
        %v2809 = vcombine.low %v2801, %v2808
        %v2810 = vcombine.low %v1721, %v1725
        %v2811 = vcombine.low %v1729, %v1733
        %v2812 = vcombine.low %v1737, %v1741
        %v2813 = vcombine.low %v1745, %v1749
        %v2815 = vunpack.c.l.s4 1966171168
        %v2816 = vunpack.c.0.s8 %v2815
        %v2817 = vlaneseq
        %v2818 = vshrl.u32 %v2817, 7
        %v2819 = vsub.s32 %v2816, %v2818
        %v2820 = vrot.slane %v2810, %v2819
        %v2822 = vunpack.c.l.s4 1966171168
        %v2823 = vunpack.c.0.s8 %v2822
        %v2824 = vlaneseq
        %v2825 = vshrl.u32 %v2824, 7
        %v2826 = vsub.s32 %v2823, %v2825
        %v2827 = vrot.slane %v2811, %v2826
        %v2829 = vunpack.c.l.s4 1966171168
        %v2830 = vunpack.c.0.s8 %v2829
        %v2831 = vlaneseq
        %v2832 = vshrl.u32 %v2831, 7
        %v2833 = vsub.s32 %v2830, %v2832
        %v2834 = vrot.slane %v2812, %v2833
        %v2836 = vunpack.c.l.s4 1966171168
        %v2837 = vunpack.c.0.s8 %v2836
        %v2838 = vlaneseq
        %v2839 = vshrl.u32 %v2838, 7
        %v2840 = vsub.s32 %v2837, %v2839
        %v2841 = vrot.slane %v2813, %v2840
        %v2842 = vcombine.low %v2820, %v2827
        %v2843 = vcombine.low %v2834, %v2841
        %v2845 = vunpack.c.l.s4 1966171168
        %v2846 = vunpack.c.0.s8 %v2845
        %v2847 = vlaneseq
        %v2848 = vshrl.u32 %v2847, 7
        %v2849 = vsub.s32 %v2846, %v2848
        %v2850 = vrot.slane %v2842, %v2849
        %v2852 = vunpack.c.l.s4 1966171168
        %v2853 = vunpack.c.0.s8 %v2852
        %v2854 = vlaneseq
        %v2855 = vshrl.u32 %v2854, 7
        %v2856 = vsub.s32 %v2853, %v2855
        %v2857 = vrot.slane %v2843, %v2856
        %v2858 = vcombine.low %v2850, %v2857
        %v2859 = vcombine.low %v1753, %v1757
        %v2860 = vcombine.low %v1761, %v1765
        %v2861 = vcombine.low %v1769, %v1773
        %v2862 = vcombine.low %v1777, %v1781
        %v2864 = vunpack.c.l.s4 1966171168
        %v2865 = vunpack.c.0.s8 %v2864
        %v2866 = vlaneseq
        %v2867 = vshrl.u32 %v2866, 7
        %v2868 = vsub.s32 %v2865, %v2867
        %v2869 = vrot.slane %v2859, %v2868
        %v2871 = vunpack.c.l.s4 1966171168
        %v2872 = vunpack.c.0.s8 %v2871
        %v2873 = vlaneseq
        %v2874 = vshrl.u32 %v2873, 7
        %v2875 = vsub.s32 %v2872, %v2874
        %v2876 = vrot.slane %v2860, %v2875
        %v2878 = vunpack.c.l.s4 1966171168
        %v2879 = vunpack.c.0.s8 %v2878
        %v2880 = vlaneseq
        %v2881 = vshrl.u32 %v2880, 7
        %v2882 = vsub.s32 %v2879, %v2881
        %v2883 = vrot.slane %v2861, %v2882
        %v2885 = vunpack.c.l.s4 1966171168
        %v2886 = vunpack.c.0.s8 %v2885
        %v2887 = vlaneseq
        %v2888 = vshrl.u32 %v2887, 7
        %v2889 = vsub.s32 %v2886, %v2888
        %v2890 = vrot.slane %v2862, %v2889
        %v2891 = vcombine.low %v2869, %v2876
        %v2892 = vcombine.low %v2883, %v2890
        %v2894 = vunpack.c.l.s4 1966171168
        %v2895 = vunpack.c.0.s8 %v2894
        %v2896 = vlaneseq
        %v2897 = vshrl.u32 %v2896, 7
        %v2898 = vsub.s32 %v2895, %v2897
        %v2899 = vrot.slane %v2891, %v2898
        %v2901 = vunpack.c.l.s4 1966171168
        %v2902 = vunpack.c.0.s8 %v2901
        %v2903 = vlaneseq
        %v2904 = vshrl.u32 %v2903, 7
        %v2905 = vsub.s32 %v2902, %v2904
        %v2906 = vrot.slane %v2892, %v2905
        %v2907 = vcombine.low %v2899, %v2906
        %v2908 = vcombine.low %v1785, %v1789
        %v2909 = vcombine.low %v1793, %v1797
        %v2910 = vcombine.low %v1801, %v1805
        %v2911 = vcombine.low %v1809, %v1813
        %v2913 = vunpack.c.l.s4 1966171168
        %v2914 = vunpack.c.0.s8 %v2913
        %v2915 = vlaneseq
        %v2916 = vshrl.u32 %v2915, 7
        %v2917 = vsub.s32 %v2914, %v2916
        %v2918 = vrot.slane %v2908, %v2917
        %v2920 = vunpack.c.l.s4 1966171168
        %v2921 = vunpack.c.0.s8 %v2920
        %v2922 = vlaneseq
        %v2923 = vshrl.u32 %v2922, 7
        %v2924 = vsub.s32 %v2921, %v2923
        %v2925 = vrot.slane %v2909, %v2924
        %v2927 = vunpack.c.l.s4 1966171168
        %v2928 = vunpack.c.0.s8 %v2927
        %v2929 = vlaneseq
        %v2930 = vshrl.u32 %v2929, 7
        %v2931 = vsub.s32 %v2928, %v2930
        %v2932 = vrot.slane %v2910, %v2931
        %v2934 = vunpack.c.l.s4 1966171168
        %v2935 = vunpack.c.0.s8 %v2934
        %v2936 = vlaneseq
        %v2937 = vshrl.u32 %v2936, 7
        %v2938 = vsub.s32 %v2935, %v2937
        %v2939 = vrot.slane %v2911, %v2938
        %v2940 = vcombine.low %v2918, %v2925
        %v2941 = vcombine.low %v2932, %v2939
        %v2943 = vunpack.c.l.s4 1966171168
        %v2944 = vunpack.c.0.s8 %v2943
        %v2945 = vlaneseq
        %v2946 = vshrl.u32 %v2945, 7
        %v2947 = vsub.s32 %v2944, %v2946
        %v2948 = vrot.slane %v2940, %v2947
        %v2950 = vunpack.c.l.s4 1966171168
        %v2951 = vunpack.c.0.s8 %v2950
        %v2952 = vlaneseq
        %v2953 = vshrl.u32 %v2952, 7
        %v2954 = vsub.s32 %v2951, %v2953
        %v2955 = vrot.slane %v2941, %v2954
        %v2956 = vcombine.low %v2948, %v2955
        %v2957 = vcombine.low %v1817, %v1821
        %v2958 = vcombine.low %v1825, %v1829
        %v2959 = vcombine.low %v1833, %v1837
        %v2960 = vcombine.low %v1841, %v1845
        %v2962 = vunpack.c.l.s4 1966171168
        %v2963 = vunpack.c.0.s8 %v2962
        %v2964 = vlaneseq
        %v2965 = vshrl.u32 %v2964, 7
        %v2966 = vsub.s32 %v2963, %v2965
        %v2967 = vrot.slane %v2957, %v2966
        %v2969 = vunpack.c.l.s4 1966171168
        %v2970 = vunpack.c.0.s8 %v2969
        %v2971 = vlaneseq
        %v2972 = vshrl.u32 %v2971, 7
        %v2973 = vsub.s32 %v2970, %v2972
        %v2974 = vrot.slane %v2958, %v2973
        %v2976 = vunpack.c.l.s4 1966171168
        %v2977 = vunpack.c.0.s8 %v2976
        %v2978 = vlaneseq
        %v2979 = vshrl.u32 %v2978, 7
        %v2980 = vsub.s32 %v2977, %v2979
        %v2981 = vrot.slane %v2959, %v2980
        %v2983 = vunpack.c.l.s4 1966171168
        %v2984 = vunpack.c.0.s8 %v2983
        %v2985 = vlaneseq
        %v2986 = vshrl.u32 %v2985, 7
        %v2987 = vsub.s32 %v2984, %v2986
        %v2988 = vrot.slane %v2960, %v2987
        %v2989 = vcombine.low %v2967, %v2974
        %v2990 = vcombine.low %v2981, %v2988
        %v2992 = vunpack.c.l.s4 1966171168
        %v2993 = vunpack.c.0.s8 %v2992
        %v2994 = vlaneseq
        %v2995 = vshrl.u32 %v2994, 7
        %v2996 = vsub.s32 %v2993, %v2995
        %v2997 = vrot.slane %v2989, %v2996
        %v2999 = vunpack.c.l.s4 1966171168
        %v3000 = vunpack.c.0.s8 %v2999
        %v3001 = vlaneseq
        %v3002 = vshrl.u32 %v3001, 7
        %v3003 = vsub.s32 %v3000, %v3002
        %v3004 = vrot.slane %v2990, %v3003
        %v3005 = vcombine.low %v2997, %v3004
        %v3006 = vcombine.low %v1849, %v1853
        %v3007 = vcombine.low %v1857, %v1861
        %v3008 = vcombine.low %v1865, %v1869
        %v3009 = vcombine.low %v1873, %v1877
        %v3011 = vunpack.c.l.s4 1966171168
        %v3012 = vunpack.c.0.s8 %v3011
        %v3013 = vlaneseq
        %v3014 = vshrl.u32 %v3013, 7
        %v3015 = vsub.s32 %v3012, %v3014
        %v3016 = vrot.slane %v3006, %v3015
        %v3018 = vunpack.c.l.s4 1966171168
        %v3019 = vunpack.c.0.s8 %v3018
        %v3020 = vlaneseq
        %v3021 = vshrl.u32 %v3020, 7
        %v3022 = vsub.s32 %v3019, %v3021
        %v3023 = vrot.slane %v3007, %v3022
        %v3025 = vunpack.c.l.s4 1966171168
        %v3026 = vunpack.c.0.s8 %v3025
        %v3027 = vlaneseq
        %v3028 = vshrl.u32 %v3027, 7
        %v3029 = vsub.s32 %v3026, %v3028
        %v3030 = vrot.slane %v3008, %v3029
        %v3032 = vunpack.c.l.s4 1966171168
        %v3033 = vunpack.c.0.s8 %v3032
        %v3034 = vlaneseq
        %v3035 = vshrl.u32 %v3034, 7
        %v3036 = vsub.s32 %v3033, %v3035
        %v3037 = vrot.slane %v3009, %v3036
        %v3038 = vcombine.low %v3016, %v3023
        %v3039 = vcombine.low %v3030, %v3037
        %v3041 = vunpack.c.l.s4 1966171168
        %v3042 = vunpack.c.0.s8 %v3041
        %v3043 = vlaneseq
        %v3044 = vshrl.u32 %v3043, 7
        %v3045 = vsub.s32 %v3042, %v3044
        %v3046 = vrot.slane %v3038, %v3045
        %v3048 = vunpack.c.l.s4 1966171168
        %v3049 = vunpack.c.0.s8 %v3048
        %v3050 = vlaneseq
        %v3051 = vshrl.u32 %v3050, 7
        %v3052 = vsub.s32 %v3049, %v3051
        %v3053 = vrot.slane %v3039, %v3052
        %v3054 = vcombine.low %v3046, %v3053
        %v3055 = vcombine.low %v1881, %v1885
        %v3056 = vcombine.low %v1889, %v1893
        %v3057 = vcombine.low %v1897, %v1901
        %v3058 = vcombine.low %v1905, %v1909
        %v3060 = vunpack.c.l.s4 1966171168
        %v3061 = vunpack.c.0.s8 %v3060
        %v3062 = vlaneseq
        %v3063 = vshrl.u32 %v3062, 7
        %v3064 = vsub.s32 %v3061, %v3063
        %v3065 = vrot.slane %v3055, %v3064
        %v3067 = vunpack.c.l.s4 1966171168
        %v3068 = vunpack.c.0.s8 %v3067
        %v3069 = vlaneseq
        %v3070 = vshrl.u32 %v3069, 7
        %v3071 = vsub.s32 %v3068, %v3070
        %v3072 = vrot.slane %v3056, %v3071
        %v3074 = vunpack.c.l.s4 1966171168
        %v3075 = vunpack.c.0.s8 %v3074
        %v3076 = vlaneseq
        %v3077 = vshrl.u32 %v3076, 7
        %v3078 = vsub.s32 %v3075, %v3077
        %v3079 = vrot.slane %v3057, %v3078
        %v3081 = vunpack.c.l.s4 1966171168
        %v3082 = vunpack.c.0.s8 %v3081
        %v3083 = vlaneseq
        %v3084 = vshrl.u32 %v3083, 7
        %v3085 = vsub.s32 %v3082, %v3084
        %v3086 = vrot.slane %v3058, %v3085
        %v3087 = vcombine.low %v3065, %v3072
        %v3088 = vcombine.low %v3079, %v3086
        %v3090 = vunpack.c.l.s4 1966171168
        %v3091 = vunpack.c.0.s8 %v3090
        %v3092 = vlaneseq
        %v3093 = vshrl.u32 %v3092, 7
        %v3094 = vsub.s32 %v3091, %v3093
        %v3095 = vrot.slane %v3087, %v3094
        %v3097 = vunpack.c.l.s4 1966171168
        %v3098 = vunpack.c.0.s8 %v3097
        %v3099 = vlaneseq
        %v3100 = vshrl.u32 %v3099, 7
        %v3101 = vsub.s32 %v3098, %v3100
        %v3102 = vrot.slane %v3088, %v3101
        %v3103 = vcombine.low %v3095, %v3102
        %v3104 = vcombine.low %v1913, %v1917
        %v3105 = vcombine.low %v1921, %v1925
        %v3106 = vcombine.low %v1929, %v1933
        %v3107 = vcombine.low %v1937, %v1941
        %v3109 = vunpack.c.l.s4 1966171168
        %v3110 = vunpack.c.0.s8 %v3109
        %v3111 = vlaneseq
        %v3112 = vshrl.u32 %v3111, 7
        %v3113 = vsub.s32 %v3110, %v3112
        %v3114 = vrot.slane %v3104, %v3113
        %v3116 = vunpack.c.l.s4 1966171168
        %v3117 = vunpack.c.0.s8 %v3116
        %v3118 = vlaneseq
        %v3119 = vshrl.u32 %v3118, 7
        %v3120 = vsub.s32 %v3117, %v3119
        %v3121 = vrot.slane %v3105, %v3120
        %v3123 = vunpack.c.l.s4 1966171168
        %v3124 = vunpack.c.0.s8 %v3123
        %v3125 = vlaneseq
        %v3126 = vshrl.u32 %v3125, 7
        %v3127 = vsub.s32 %v3124, %v3126
        %v3128 = vrot.slane %v3106, %v3127
        %v3130 = vunpack.c.l.s4 1966171168
        %v3131 = vunpack.c.0.s8 %v3130
        %v3132 = vlaneseq
        %v3133 = vshrl.u32 %v3132, 7
        %v3134 = vsub.s32 %v3131, %v3133
        %v3135 = vrot.slane %v3107, %v3134
        %v3136 = vcombine.low %v3114, %v3121
        %v3137 = vcombine.low %v3128, %v3135
        %v3139 = vunpack.c.l.s4 1966171168
        %v3140 = vunpack.c.0.s8 %v3139
        %v3141 = vlaneseq
        %v3142 = vshrl.u32 %v3141, 7
        %v3143 = vsub.s32 %v3140, %v3142
        %v3144 = vrot.slane %v3136, %v3143
        %v3146 = vunpack.c.l.s4 1966171168
        %v3147 = vunpack.c.0.s8 %v3146
        %v3148 = vlaneseq
        %v3149 = vshrl.u32 %v3148, 7
        %v3150 = vsub.s32 %v3147, %v3149
        %v3151 = vrot.slane %v3137, %v3150
        %v3152 = vcombine.low %v3144, %v3151
        %v3153 = vcombine.low %v1945, %v1949
        %v3154 = vcombine.low %v1953, %v1957
        %v3155 = vcombine.low %v1961, %v1965
        %v3156 = vcombine.low %v1969, %v1973
        %v3158 = vunpack.c.l.s4 1966171168
        %v3159 = vunpack.c.0.s8 %v3158
        %v3160 = vlaneseq
        %v3161 = vshrl.u32 %v3160, 7
        %v3162 = vsub.s32 %v3159, %v3161
        %v3163 = vrot.slane %v3153, %v3162
        %v3165 = vunpack.c.l.s4 1966171168
        %v3166 = vunpack.c.0.s8 %v3165
        %v3167 = vlaneseq
        %v3168 = vshrl.u32 %v3167, 7
        %v3169 = vsub.s32 %v3166, %v3168
        %v3170 = vrot.slane %v3154, %v3169
        %v3172 = vunpack.c.l.s4 1966171168
        %v3173 = vunpack.c.0.s8 %v3172
        %v3174 = vlaneseq
        %v3175 = vshrl.u32 %v3174, 7
        %v3176 = vsub.s32 %v3173, %v3175
        %v3177 = vrot.slane %v3155, %v3176
        %v3179 = vunpack.c.l.s4 1966171168
        %v3180 = vunpack.c.0.s8 %v3179
        %v3181 = vlaneseq
        %v3182 = vshrl.u32 %v3181, 7
        %v3183 = vsub.s32 %v3180, %v3182
        %v3184 = vrot.slane %v3156, %v3183
        %v3185 = vcombine.low %v3163, %v3170
        %v3186 = vcombine.low %v3177, %v3184
        %v3188 = vunpack.c.l.s4 1966171168
        %v3189 = vunpack.c.0.s8 %v3188
        %v3190 = vlaneseq
        %v3191 = vshrl.u32 %v3190, 7
        %v3192 = vsub.s32 %v3189, %v3191
        %v3193 = vrot.slane %v3185, %v3192
        %v3195 = vunpack.c.l.s4 1966171168
        %v3196 = vunpack.c.0.s8 %v3195
        %v3197 = vlaneseq
        %v3198 = vshrl.u32 %v3197, 7
        %v3199 = vsub.s32 %v3196, %v3198
        %v3200 = vrot.slane %v3186, %v3199
        %v3201 = vcombine.low %v3193, %v3200
        %v3202 = vcombine.low %v1977, %v1981
        %v3203 = vcombine.low %v1985, %v1989
        %v3204 = vcombine.low %v1993, %v1997
        %v3205 = vcombine.low %v2001, %v2005
        %v3207 = vunpack.c.l.s4 1966171168
        %v3208 = vunpack.c.0.s8 %v3207
        %v3209 = vlaneseq
        %v3210 = vshrl.u32 %v3209, 7
        %v3211 = vsub.s32 %v3208, %v3210
        %v3212 = vrot.slane %v3202, %v3211
        %v3214 = vunpack.c.l.s4 1966171168
        %v3215 = vunpack.c.0.s8 %v3214
        %v3216 = vlaneseq
        %v3217 = vshrl.u32 %v3216, 7
        %v3218 = vsub.s32 %v3215, %v3217
        %v3219 = vrot.slane %v3203, %v3218
        %v3221 = vunpack.c.l.s4 1966171168
        %v3222 = vunpack.c.0.s8 %v3221
        %v3223 = vlaneseq
        %v3224 = vshrl.u32 %v3223, 7
        %v3225 = vsub.s32 %v3222, %v3224
        %v3226 = vrot.slane %v3204, %v3225
        %v3228 = vunpack.c.l.s4 1966171168
        %v3229 = vunpack.c.0.s8 %v3228
        %v3230 = vlaneseq
        %v3231 = vshrl.u32 %v3230, 7
        %v3232 = vsub.s32 %v3229, %v3231
        %v3233 = vrot.slane %v3205, %v3232
        %v3234 = vcombine.low %v3212, %v3219
        %v3235 = vcombine.low %v3226, %v3233
        %v3237 = vunpack.c.l.s4 1966171168
        %v3238 = vunpack.c.0.s8 %v3237
        %v3239 = vlaneseq
        %v3240 = vshrl.u32 %v3239, 7
        %v3241 = vsub.s32 %v3238, %v3240
        %v3242 = vrot.slane %v3234, %v3241
        %v3244 = vunpack.c.l.s4 1966171168
        %v3245 = vunpack.c.0.s8 %v3244
        %v3246 = vlaneseq
        %v3247 = vshrl.u32 %v3246, 7
        %v3248 = vsub.s32 %v3245, %v3247
        %v3249 = vrot.slane %v3235, %v3248
        %v3250 = vcombine.low %v3242, %v3249
        %v3251 = vcombine.low %v2009, %v2013
        %v3252 = vcombine.low %v2017, %v2021
        %v3253 = vcombine.low %v2025, %v2029
        %v3254 = vcombine.low %v2033, %v2037
        %v3256 = vunpack.c.l.s4 1966171168
        %v3257 = vunpack.c.0.s8 %v3256
        %v3258 = vlaneseq
        %v3259 = vshrl.u32 %v3258, 7
        %v3260 = vsub.s32 %v3257, %v3259
        %v3261 = vrot.slane %v3251, %v3260
        %v3263 = vunpack.c.l.s4 1966171168
        %v3264 = vunpack.c.0.s8 %v3263
        %v3265 = vlaneseq
        %v3266 = vshrl.u32 %v3265, 7
        %v3267 = vsub.s32 %v3264, %v3266
        %v3268 = vrot.slane %v3252, %v3267
        %v3270 = vunpack.c.l.s4 1966171168
        %v3271 = vunpack.c.0.s8 %v3270
        %v3272 = vlaneseq
        %v3273 = vshrl.u32 %v3272, 7
        %v3274 = vsub.s32 %v3271, %v3273
        %v3275 = vrot.slane %v3253, %v3274
        %v3277 = vunpack.c.l.s4 1966171168
        %v3278 = vunpack.c.0.s8 %v3277
        %v3279 = vlaneseq
        %v3280 = vshrl.u32 %v3279, 7
        %v3281 = vsub.s32 %v3278, %v3280
        %v3282 = vrot.slane %v3254, %v3281
        %v3283 = vcombine.low %v3261, %v3268
        %v3284 = vcombine.low %v3275, %v3282
        %v3286 = vunpack.c.l.s4 1966171168
        %v3287 = vunpack.c.0.s8 %v3286
        %v3288 = vlaneseq
        %v3289 = vshrl.u32 %v3288, 7
        %v3290 = vsub.s32 %v3287, %v3289
        %v3291 = vrot.slane %v3283, %v3290
        %v3293 = vunpack.c.l.s4 1966171168
        %v3294 = vunpack.c.0.s8 %v3293
        %v3295 = vlaneseq
        %v3296 = vshrl.u32 %v3295, 7
        %v3297 = vsub.s32 %v3294, %v3296
        %v3298 = vrot.slane %v3284, %v3297
        %v3299 = vcombine.low %v3291, %v3298
        %v3300 = vcombine.low %v2041, %v2045
        %v3301 = vcombine.low %v2049, %v2053
        %v3302 = vcombine.low %v2057, %v2061
        %v3303 = vcombine.low %v2065, %v2069
        %v3305 = vunpack.c.l.s4 1966171168
        %v3306 = vunpack.c.0.s8 %v3305
        %v3307 = vlaneseq
        %v3308 = vshrl.u32 %v3307, 7
        %v3309 = vsub.s32 %v3306, %v3308
        %v3310 = vrot.slane %v3300, %v3309
        %v3312 = vunpack.c.l.s4 1966171168
        %v3313 = vunpack.c.0.s8 %v3312
        %v3314 = vlaneseq
        %v3315 = vshrl.u32 %v3314, 7
        %v3316 = vsub.s32 %v3313, %v3315
        %v3317 = vrot.slane %v3301, %v3316
        %v3319 = vunpack.c.l.s4 1966171168
        %v3320 = vunpack.c.0.s8 %v3319
        %v3321 = vlaneseq
        %v3322 = vshrl.u32 %v3321, 7
        %v3323 = vsub.s32 %v3320, %v3322
        %v3324 = vrot.slane %v3302, %v3323
        %v3326 = vunpack.c.l.s4 1966171168
        %v3327 = vunpack.c.0.s8 %v3326
        %v3328 = vlaneseq
        %v3329 = vshrl.u32 %v3328, 7
        %v3330 = vsub.s32 %v3327, %v3329
        %v3331 = vrot.slane %v3303, %v3330
        %v3332 = vcombine.low %v3310, %v3317
        %v3333 = vcombine.low %v3324, %v3331
        %v3335 = vunpack.c.l.s4 1966171168
        %v3336 = vunpack.c.0.s8 %v3335
        %v3337 = vlaneseq
        %v3338 = vshrl.u32 %v3337, 7
        %v3339 = vsub.s32 %v3336, %v3338
        %v3340 = vrot.slane %v3332, %v3339
        %v3342 = vunpack.c.l.s4 1966171168
        %v3343 = vunpack.c.0.s8 %v3342
        %v3344 = vlaneseq
        %v3345 = vshrl.u32 %v3344, 7
        %v3346 = vsub.s32 %v3343, %v3345
        %v3347 = vrot.slane %v3333, %v3346
        %v3348 = vcombine.low %v3340, %v3347
        %v3349 = vcombine.low %v2073, %v2077
        %v3350 = vcombine.low %v2081, %v2085
        %v3351 = vcombine.low %v2089, %v2093
        %v3352 = vcombine.low %v2097, %v2101
        %v3354 = vunpack.c.l.s4 1966171168
        %v3355 = vunpack.c.0.s8 %v3354
        %v3356 = vlaneseq
        %v3357 = vshrl.u32 %v3356, 7
        %v3358 = vsub.s32 %v3355, %v3357
        %v3359 = vrot.slane %v3349, %v3358
        %v3361 = vunpack.c.l.s4 1966171168
        %v3362 = vunpack.c.0.s8 %v3361
        %v3363 = vlaneseq
        %v3364 = vshrl.u32 %v3363, 7
        %v3365 = vsub.s32 %v3362, %v3364
        %v3366 = vrot.slane %v3350, %v3365
        %v3368 = vunpack.c.l.s4 1966171168
        %v3369 = vunpack.c.0.s8 %v3368
        %v3370 = vlaneseq
        %v3371 = vshrl.u32 %v3370, 7
        %v3372 = vsub.s32 %v3369, %v3371
        %v3373 = vrot.slane %v3351, %v3372
        %v3375 = vunpack.c.l.s4 1966171168
        %v3376 = vunpack.c.0.s8 %v3375
        %v3377 = vlaneseq
        %v3378 = vshrl.u32 %v3377, 7
        %v3379 = vsub.s32 %v3376, %v3378
        %v3380 = vrot.slane %v3352, %v3379
        %v3381 = vcombine.low %v3359, %v3366
        %v3382 = vcombine.low %v3373, %v3380
        %v3384 = vunpack.c.l.s4 1966171168
        %v3385 = vunpack.c.0.s8 %v3384
        %v3386 = vlaneseq
        %v3387 = vshrl.u32 %v3386, 7
        %v3388 = vsub.s32 %v3385, %v3387
        %v3389 = vrot.slane %v3381, %v3388
        %v3391 = vunpack.c.l.s4 1966171168
        %v3392 = vunpack.c.0.s8 %v3391
        %v3393 = vlaneseq
        %v3394 = vshrl.u32 %v3393, 7
        %v3395 = vsub.s32 %v3392, %v3394
        %v3396 = vrot.slane %v3382, %v3395
        %v3397 = vcombine.low %v3389, %v3396
        %v3398 = vcombine.low %v2105, %v2109
        %v3399 = vcombine.low %v2113, %v2117
        %v3400 = vcombine.low %v2121, %v2125
        %v3401 = vcombine.low %v2129, %v2133
        %v3403 = vunpack.c.l.s4 1966171168
        %v3404 = vunpack.c.0.s8 %v3403
        %v3405 = vlaneseq
        %v3406 = vshrl.u32 %v3405, 7
        %v3407 = vsub.s32 %v3404, %v3406
        %v3408 = vrot.slane %v3398, %v3407
        %v3410 = vunpack.c.l.s4 1966171168
        %v3411 = vunpack.c.0.s8 %v3410
        %v3412 = vlaneseq
        %v3413 = vshrl.u32 %v3412, 7
        %v3414 = vsub.s32 %v3411, %v3413
        %v3415 = vrot.slane %v3399, %v3414
        %v3417 = vunpack.c.l.s4 1966171168
        %v3418 = vunpack.c.0.s8 %v3417
        %v3419 = vlaneseq
        %v3420 = vshrl.u32 %v3419, 7
        %v3421 = vsub.s32 %v3418, %v3420
        %v3422 = vrot.slane %v3400, %v3421
        %v3424 = vunpack.c.l.s4 1966171168
        %v3425 = vunpack.c.0.s8 %v3424
        %v3426 = vlaneseq
        %v3427 = vshrl.u32 %v3426, 7
        %v3428 = vsub.s32 %v3425, %v3427
        %v3429 = vrot.slane %v3401, %v3428
        %v3430 = vcombine.low %v3408, %v3415
        %v3431 = vcombine.low %v3422, %v3429
        %v3433 = vunpack.c.l.s4 1966171168
        %v3434 = vunpack.c.0.s8 %v3433
        %v3435 = vlaneseq
        %v3436 = vshrl.u32 %v3435, 7
        %v3437 = vsub.s32 %v3434, %v3436
        %v3438 = vrot.slane %v3430, %v3437
        %v3440 = vunpack.c.l.s4 1966171168
        %v3441 = vunpack.c.0.s8 %v3440
        %v3442 = vlaneseq
        %v3443 = vshrl.u32 %v3442, 7
        %v3444 = vsub.s32 %v3441, %v3443
        %v3445 = vrot.slane %v3431, %v3444
        %v3446 = vcombine.low %v3438, %v3445
        %v3447 = vcombine.low %v2137, %v2141
        %v3448 = vcombine.low %v2145, %v2149
        %v3449 = vcombine.low %v2153, %v2157
        %v3450 = vcombine.low %v2161, %v2165
        %v3452 = vunpack.c.l.s4 1966171168
        %v3453 = vunpack.c.0.s8 %v3452
        %v3454 = vlaneseq
        %v3455 = vshrl.u32 %v3454, 7
        %v3456 = vsub.s32 %v3453, %v3455
        %v3457 = vrot.slane %v3447, %v3456
        %v3459 = vunpack.c.l.s4 1966171168
        %v3460 = vunpack.c.0.s8 %v3459
        %v3461 = vlaneseq
        %v3462 = vshrl.u32 %v3461, 7
        %v3463 = vsub.s32 %v3460, %v3462
        %v3464 = vrot.slane %v3448, %v3463
        %v3466 = vunpack.c.l.s4 1966171168
        %v3467 = vunpack.c.0.s8 %v3466
        %v3468 = vlaneseq
        %v3469 = vshrl.u32 %v3468, 7
        %v3470 = vsub.s32 %v3467, %v3469
        %v3471 = vrot.slane %v3449, %v3470
        %v3473 = vunpack.c.l.s4 1966171168
        %v3474 = vunpack.c.0.s8 %v3473
        %v3475 = vlaneseq
        %v3476 = vshrl.u32 %v3475, 7
        %v3477 = vsub.s32 %v3474, %v3476
        %v3478 = vrot.slane %v3450, %v3477
        %v3479 = vcombine.low %v3457, %v3464
        %v3480 = vcombine.low %v3471, %v3478
        %v3482 = vunpack.c.l.s4 1966171168
        %v3483 = vunpack.c.0.s8 %v3482
        %v3484 = vlaneseq
        %v3485 = vshrl.u32 %v3484, 7
        %v3486 = vsub.s32 %v3483, %v3485
        %v3487 = vrot.slane %v3479, %v3486
        %v3489 = vunpack.c.l.s4 1966171168
        %v3490 = vunpack.c.0.s8 %v3489
        %v3491 = vlaneseq
        %v3492 = vshrl.u32 %v3491, 7
        %v3493 = vsub.s32 %v3490, %v3492
        %v3494 = vrot.slane %v3480, %v3493
        %v3495 = vcombine.low %v3487, %v3494
        %v3496 = vcombine.low %v2169, %v2173
        %v3497 = vcombine.low %v2177, %v2181
        %v3498 = vcombine.low %v2185, %v2189
        %v3499 = vcombine.low %v2193, %v2197
        %v3501 = vunpack.c.l.s4 1966171168
        %v3502 = vunpack.c.0.s8 %v3501
        %v3503 = vlaneseq
        %v3504 = vshrl.u32 %v3503, 7
        %v3505 = vsub.s32 %v3502, %v3504
        %v3506 = vrot.slane %v3496, %v3505
        %v3508 = vunpack.c.l.s4 1966171168
        %v3509 = vunpack.c.0.s8 %v3508
        %v3510 = vlaneseq
        %v3511 = vshrl.u32 %v3510, 7
        %v3512 = vsub.s32 %v3509, %v3511
        %v3513 = vrot.slane %v3497, %v3512
        %v3515 = vunpack.c.l.s4 1966171168
        %v3516 = vunpack.c.0.s8 %v3515
        %v3517 = vlaneseq
        %v3518 = vshrl.u32 %v3517, 7
        %v3519 = vsub.s32 %v3516, %v3518
        %v3520 = vrot.slane %v3498, %v3519
        %v3522 = vunpack.c.l.s4 1966171168
        %v3523 = vunpack.c.0.s8 %v3522
        %v3524 = vlaneseq
        %v3525 = vshrl.u32 %v3524, 7
        %v3526 = vsub.s32 %v3523, %v3525
        %v3527 = vrot.slane %v3499, %v3526
        %v3528 = vcombine.low %v3506, %v3513
        %v3529 = vcombine.low %v3520, %v3527
        %v3531 = vunpack.c.l.s4 1966171168
        %v3532 = vunpack.c.0.s8 %v3531
        %v3533 = vlaneseq
        %v3534 = vshrl.u32 %v3533, 7
        %v3535 = vsub.s32 %v3532, %v3534
        %v3536 = vrot.slane %v3528, %v3535
        %v3538 = vunpack.c.l.s4 1966171168
        %v3539 = vunpack.c.0.s8 %v3538
        %v3540 = vlaneseq
        %v3541 = vshrl.u32 %v3540, 7
        %v3542 = vsub.s32 %v3539, %v3541
        %v3543 = vrot.slane %v3529, %v3542
        %v3544 = vcombine.low %v3536, %v3543
        %v3545 = vcombine.low %v2201, %v2205
        %v3546 = vcombine.low %v2209, %v2213
        %v3547 = vcombine.low %v2217, %v2221
        %v3548 = vcombine.low %v2225, %v2229
        %v3550 = vunpack.c.l.s4 1966171168
        %v3551 = vunpack.c.0.s8 %v3550
        %v3552 = vlaneseq
        %v3553 = vshrl.u32 %v3552, 7
        %v3554 = vsub.s32 %v3551, %v3553
        %v3555 = vrot.slane %v3545, %v3554
        %v3557 = vunpack.c.l.s4 1966171168
        %v3558 = vunpack.c.0.s8 %v3557
        %v3559 = vlaneseq
        %v3560 = vshrl.u32 %v3559, 7
        %v3561 = vsub.s32 %v3558, %v3560
        %v3562 = vrot.slane %v3546, %v3561
        %v3564 = vunpack.c.l.s4 1966171168
        %v3565 = vunpack.c.0.s8 %v3564
        %v3566 = vlaneseq
        %v3567 = vshrl.u32 %v3566, 7
        %v3568 = vsub.s32 %v3565, %v3567
        %v3569 = vrot.slane %v3547, %v3568
        %v3571 = vunpack.c.l.s4 1966171168
        %v3572 = vunpack.c.0.s8 %v3571
        %v3573 = vlaneseq
        %v3574 = vshrl.u32 %v3573, 7
        %v3575 = vsub.s32 %v3572, %v3574
        %v3576 = vrot.slane %v3548, %v3575
        %v3577 = vcombine.low %v3555, %v3562
        %v3578 = vcombine.low %v3569, %v3576
        %v3580 = vunpack.c.l.s4 1966171168
        %v3581 = vunpack.c.0.s8 %v3580
        %v3582 = vlaneseq
        %v3583 = vshrl.u32 %v3582, 7
        %v3584 = vsub.s32 %v3581, %v3583
        %v3585 = vrot.slane %v3577, %v3584
        %v3587 = vunpack.c.l.s4 1966171168
        %v3588 = vunpack.c.0.s8 %v3587
        %v3589 = vlaneseq
        %v3590 = vshrl.u32 %v3589, 7
        %v3591 = vsub.s32 %v3588, %v3590
        %v3592 = vrot.slane %v3578, %v3591
        %v3593 = vcombine.low %v3585, %v3592
        %v3594 = vcombine.low %v2233, %v2237
        %v3595 = vcombine.low %v2241, %v2245
        %v3596 = vcombine.low %v2249, %v2253
        %v3597 = vcombine.low %v2257, %v2261
        %v3599 = vunpack.c.l.s4 1966171168
        %v3600 = vunpack.c.0.s8 %v3599
        %v3601 = vlaneseq
        %v3602 = vshrl.u32 %v3601, 7
        %v3603 = vsub.s32 %v3600, %v3602
        %v3604 = vrot.slane %v3594, %v3603
        %v3606 = vunpack.c.l.s4 1966171168
        %v3607 = vunpack.c.0.s8 %v3606
        %v3608 = vlaneseq
        %v3609 = vshrl.u32 %v3608, 7
        %v3610 = vsub.s32 %v3607, %v3609
        %v3611 = vrot.slane %v3595, %v3610
        %v3613 = vunpack.c.l.s4 1966171168
        %v3614 = vunpack.c.0.s8 %v3613
        %v3615 = vlaneseq
        %v3616 = vshrl.u32 %v3615, 7
        %v3617 = vsub.s32 %v3614, %v3616
        %v3618 = vrot.slane %v3596, %v3617
        %v3620 = vunpack.c.l.s4 1966171168
        %v3621 = vunpack.c.0.s8 %v3620
        %v3622 = vlaneseq
        %v3623 = vshrl.u32 %v3622, 7
        %v3624 = vsub.s32 %v3621, %v3623
        %v3625 = vrot.slane %v3597, %v3624
        %v3626 = vcombine.low %v3604, %v3611
        %v3627 = vcombine.low %v3618, %v3625
        %v3629 = vunpack.c.l.s4 1966171168
        %v3630 = vunpack.c.0.s8 %v3629
        %v3631 = vlaneseq
        %v3632 = vshrl.u32 %v3631, 7
        %v3633 = vsub.s32 %v3630, %v3632
        %v3634 = vrot.slane %v3626, %v3633
        %v3636 = vunpack.c.l.s4 1966171168
        %v3637 = vunpack.c.0.s8 %v3636
        %v3638 = vlaneseq
        %v3639 = vshrl.u32 %v3638, 7
        %v3640 = vsub.s32 %v3637, %v3639
        %v3641 = vrot.slane %v3627, %v3640
        %v3642 = vcombine.low %v3634, %v3641
        %v3643 = vcombine.low %v2265, %v2269
        %v3644 = vcombine.low %v2273, %v2277
        %v3645 = vcombine.low %v2281, %v2285
        %v3646 = vcombine.low %v2289, %v2293
        %v3648 = vunpack.c.l.s4 1966171168
        %v3649 = vunpack.c.0.s8 %v3648
        %v3650 = vlaneseq
        %v3651 = vshrl.u32 %v3650, 7
        %v3652 = vsub.s32 %v3649, %v3651
        %v3653 = vrot.slane %v3643, %v3652
        %v3655 = vunpack.c.l.s4 1966171168
        %v3656 = vunpack.c.0.s8 %v3655
        %v3657 = vlaneseq
        %v3658 = vshrl.u32 %v3657, 7
        %v3659 = vsub.s32 %v3656, %v3658
        %v3660 = vrot.slane %v3644, %v3659
        %v3662 = vunpack.c.l.s4 1966171168
        %v3663 = vunpack.c.0.s8 %v3662
        %v3664 = vlaneseq
        %v3665 = vshrl.u32 %v3664, 7
        %v3666 = vsub.s32 %v3663, %v3665
        %v3667 = vrot.slane %v3645, %v3666
        %v3669 = vunpack.c.l.s4 1966171168
        %v3670 = vunpack.c.0.s8 %v3669
        %v3671 = vlaneseq
        %v3672 = vshrl.u32 %v3671, 7
        %v3673 = vsub.s32 %v3670, %v3672
        %v3674 = vrot.slane %v3646, %v3673
        %v3675 = vcombine.low %v3653, %v3660
        %v3676 = vcombine.low %v3667, %v3674
        %v3678 = vunpack.c.l.s4 1966171168
        %v3679 = vunpack.c.0.s8 %v3678
        %v3680 = vlaneseq
        %v3681 = vshrl.u32 %v3680, 7
        %v3682 = vsub.s32 %v3679, %v3681
        %v3683 = vrot.slane %v3675, %v3682
        %v3685 = vunpack.c.l.s4 1966171168
        %v3686 = vunpack.c.0.s8 %v3685
        %v3687 = vlaneseq
        %v3688 = vshrl.u32 %v3687, 7
        %v3689 = vsub.s32 %v3686, %v3688
        %v3690 = vrot.slane %v3676, %v3689
        %v3691 = vcombine.low %v3683, %v3690
        %v3692 = vcombine.low %v2297, %v2301
        %v3693 = vcombine.low %v2305, %v2309
        %v3694 = vcombine.low %v2313, %v2317
        %v3695 = vcombine.low %v2321, %v2325
        %v3697 = vunpack.c.l.s4 1966171168
        %v3698 = vunpack.c.0.s8 %v3697
        %v3699 = vlaneseq
        %v3700 = vshrl.u32 %v3699, 7
        %v3701 = vsub.s32 %v3698, %v3700
        %v3702 = vrot.slane %v3692, %v3701
        %v3704 = vunpack.c.l.s4 1966171168
        %v3705 = vunpack.c.0.s8 %v3704
        %v3706 = vlaneseq
        %v3707 = vshrl.u32 %v3706, 7
        %v3708 = vsub.s32 %v3705, %v3707
        %v3709 = vrot.slane %v3693, %v3708
        %v3711 = vunpack.c.l.s4 1966171168
        %v3712 = vunpack.c.0.s8 %v3711
        %v3713 = vlaneseq
        %v3714 = vshrl.u32 %v3713, 7
        %v3715 = vsub.s32 %v3712, %v3714
        %v3716 = vrot.slane %v3694, %v3715
        %v3718 = vunpack.c.l.s4 1966171168
        %v3719 = vunpack.c.0.s8 %v3718
        %v3720 = vlaneseq
        %v3721 = vshrl.u32 %v3720, 7
        %v3722 = vsub.s32 %v3719, %v3721
        %v3723 = vrot.slane %v3695, %v3722
        %v3724 = vcombine.low %v3702, %v3709
        %v3725 = vcombine.low %v3716, %v3723
        %v3727 = vunpack.c.l.s4 1966171168
        %v3728 = vunpack.c.0.s8 %v3727
        %v3729 = vlaneseq
        %v3730 = vshrl.u32 %v3729, 7
        %v3731 = vsub.s32 %v3728, %v3730
        %v3732 = vrot.slane %v3724, %v3731
        %v3734 = vunpack.c.l.s4 1966171168
        %v3735 = vunpack.c.0.s8 %v3734
        %v3736 = vlaneseq
        %v3737 = vshrl.u32 %v3736, 7
        %v3738 = vsub.s32 %v3735, %v3737
        %v3739 = vrot.slane %v3725, %v3738
        %v3740 = vcombine.low %v3732, %v3739
        %v3741 = vcombine.low %v2329, %v2333
        %v3742 = vcombine.low %v2337, %v2341
        %v3743 = vcombine.low %v2345, %v2349
        %v3744 = vcombine.low %v2353, %v2357
        %v3746 = vunpack.c.l.s4 1966171168
        %v3747 = vunpack.c.0.s8 %v3746
        %v3748 = vlaneseq
        %v3749 = vshrl.u32 %v3748, 7
        %v3750 = vsub.s32 %v3747, %v3749
        %v3751 = vrot.slane %v3741, %v3750
        %v3753 = vunpack.c.l.s4 1966171168
        %v3754 = vunpack.c.0.s8 %v3753
        %v3755 = vlaneseq
        %v3756 = vshrl.u32 %v3755, 7
        %v3757 = vsub.s32 %v3754, %v3756
        %v3758 = vrot.slane %v3742, %v3757
        %v3760 = vunpack.c.l.s4 1966171168
        %v3761 = vunpack.c.0.s8 %v3760
        %v3762 = vlaneseq
        %v3763 = vshrl.u32 %v3762, 7
        %v3764 = vsub.s32 %v3761, %v3763
        %v3765 = vrot.slane %v3743, %v3764
        %v3767 = vunpack.c.l.s4 1966171168
        %v3768 = vunpack.c.0.s8 %v3767
        %v3769 = vlaneseq
        %v3770 = vshrl.u32 %v3769, 7
        %v3771 = vsub.s32 %v3768, %v3770
        %v3772 = vrot.slane %v3744, %v3771
        %v3773 = vcombine.low %v3751, %v3758
        %v3774 = vcombine.low %v3765, %v3772
        %v3776 = vunpack.c.l.s4 1966171168
        %v3777 = vunpack.c.0.s8 %v3776
        %v3778 = vlaneseq
        %v3779 = vshrl.u32 %v3778, 7
        %v3780 = vsub.s32 %v3777, %v3779
        %v3781 = vrot.slane %v3773, %v3780
        %v3783 = vunpack.c.l.s4 1966171168
        %v3784 = vunpack.c.0.s8 %v3783
        %v3785 = vlaneseq
        %v3786 = vshrl.u32 %v3785, 7
        %v3787 = vsub.s32 %v3784, %v3786
        %v3788 = vrot.slane %v3774, %v3787
        %v3789 = vcombine.low %v3781, %v3788
        %v3790 = vcombine.low %v2361, %v2365
        %v3791 = vcombine.low %v2369, %v2373
        %v3792 = vcombine.low %v2377, %v2381
        %v3793 = vcombine.low %v2385, %v2389
        %v3795 = vunpack.c.l.s4 1966171168
        %v3796 = vunpack.c.0.s8 %v3795
        %v3797 = vlaneseq
        %v3798 = vshrl.u32 %v3797, 7
        %v3799 = vsub.s32 %v3796, %v3798
        %v3800 = vrot.slane %v3790, %v3799
        %v3802 = vunpack.c.l.s4 1966171168
        %v3803 = vunpack.c.0.s8 %v3802
        %v3804 = vlaneseq
        %v3805 = vshrl.u32 %v3804, 7
        %v3806 = vsub.s32 %v3803, %v3805
        %v3807 = vrot.slane %v3791, %v3806
        %v3809 = vunpack.c.l.s4 1966171168
        %v3810 = vunpack.c.0.s8 %v3809
        %v3811 = vlaneseq
        %v3812 = vshrl.u32 %v3811, 7
        %v3813 = vsub.s32 %v3810, %v3812
        %v3814 = vrot.slane %v3792, %v3813
        %v3816 = vunpack.c.l.s4 1966171168
        %v3817 = vunpack.c.0.s8 %v3816
        %v3818 = vlaneseq
        %v3819 = vshrl.u32 %v3818, 7
        %v3820 = vsub.s32 %v3817, %v3819
        %v3821 = vrot.slane %v3793, %v3820
        %v3822 = vcombine.low %v3800, %v3807
        %v3823 = vcombine.low %v3814, %v3821
        %v3825 = vunpack.c.l.s4 1966171168
        %v3826 = vunpack.c.0.s8 %v3825
        %v3827 = vlaneseq
        %v3828 = vshrl.u32 %v3827, 7
        %v3829 = vsub.s32 %v3826, %v3828
        %v3830 = vrot.slane %v3822, %v3829
        %v3832 = vunpack.c.l.s4 1966171168
        %v3833 = vunpack.c.0.s8 %v3832
        %v3834 = vlaneseq
        %v3835 = vshrl.u32 %v3834, 7
        %v3836 = vsub.s32 %v3833, %v3835
        %v3837 = vrot.slane %v3823, %v3836
        %v3838 = vcombine.low %v3830, %v3837
        %v3839 = vcombine.low %v2393, %v2397
        %v3840 = vcombine.low %v2401, %v2405
        %v3841 = vcombine.low %v2409, %v2413
        %v3842 = vcombine.low %v2417, %v2421
        %v3844 = vunpack.c.l.s4 1966171168
        %v3845 = vunpack.c.0.s8 %v3844
        %v3846 = vlaneseq
        %v3847 = vshrl.u32 %v3846, 7
        %v3848 = vsub.s32 %v3845, %v3847
        %v3849 = vrot.slane %v3839, %v3848
        %v3851 = vunpack.c.l.s4 1966171168
        %v3852 = vunpack.c.0.s8 %v3851
        %v3853 = vlaneseq
        %v3854 = vshrl.u32 %v3853, 7
        %v3855 = vsub.s32 %v3852, %v3854
        %v3856 = vrot.slane %v3840, %v3855
        %v3858 = vunpack.c.l.s4 1966171168
        %v3859 = vunpack.c.0.s8 %v3858
        %v3860 = vlaneseq
        %v3861 = vshrl.u32 %v3860, 7
        %v3862 = vsub.s32 %v3859, %v3861
        %v3863 = vrot.slane %v3841, %v3862
        %v3865 = vunpack.c.l.s4 1966171168
        %v3866 = vunpack.c.0.s8 %v3865
        %v3867 = vlaneseq
        %v3868 = vshrl.u32 %v3867, 7
        %v3869 = vsub.s32 %v3866, %v3868
        %v3870 = vrot.slane %v3842, %v3869
        %v3871 = vcombine.low %v3849, %v3856
        %v3872 = vcombine.low %v3863, %v3870
        %v3874 = vunpack.c.l.s4 1966171168
        %v3875 = vunpack.c.0.s8 %v3874
        %v3876 = vlaneseq
        %v3877 = vshrl.u32 %v3876, 7
        %v3878 = vsub.s32 %v3875, %v3877
        %v3879 = vrot.slane %v3871, %v3878
        %v3881 = vunpack.c.l.s4 1966171168
        %v3882 = vunpack.c.0.s8 %v3881
        %v3883 = vlaneseq
        %v3884 = vshrl.u32 %v3883, 7
        %v3885 = vsub.s32 %v3882, %v3884
        %v3886 = vrot.slane %v3872, %v3885
        %v3887 = vcombine.low %v3879, %v3886
        %v3888 = vcombine.low %v2425, %v2429
        %v3889 = vcombine.low %v2433, %v2437
        %v3890 = vcombine.low %v2441, %v2445
        %v3891 = vcombine.low %v2449, %v2453
        %v3893 = vunpack.c.l.s4 1966171168
        %v3894 = vunpack.c.0.s8 %v3893
        %v3895 = vlaneseq
        %v3896 = vshrl.u32 %v3895, 7
        %v3897 = vsub.s32 %v3894, %v3896
        %v3898 = vrot.slane %v3888, %v3897
        %v3900 = vunpack.c.l.s4 1966171168
        %v3901 = vunpack.c.0.s8 %v3900
        %v3902 = vlaneseq
        %v3903 = vshrl.u32 %v3902, 7
        %v3904 = vsub.s32 %v3901, %v3903
        %v3905 = vrot.slane %v3889, %v3904
        %v3907 = vunpack.c.l.s4 1966171168
        %v3908 = vunpack.c.0.s8 %v3907
        %v3909 = vlaneseq
        %v3910 = vshrl.u32 %v3909, 7
        %v3911 = vsub.s32 %v3908, %v3910
        %v3912 = vrot.slane %v3890, %v3911
        %v3914 = vunpack.c.l.s4 1966171168
        %v3915 = vunpack.c.0.s8 %v3914
        %v3916 = vlaneseq
        %v3917 = vshrl.u32 %v3916, 7
        %v3918 = vsub.s32 %v3915, %v3917
        %v3919 = vrot.slane %v3891, %v3918
        %v3920 = vcombine.low %v3898, %v3905
        %v3921 = vcombine.low %v3912, %v3919
        %v3923 = vunpack.c.l.s4 1966171168
        %v3924 = vunpack.c.0.s8 %v3923
        %v3925 = vlaneseq
        %v3926 = vshrl.u32 %v3925, 7
        %v3927 = vsub.s32 %v3924, %v3926
        %v3928 = vrot.slane %v3920, %v3927
        %v3930 = vunpack.c.l.s4 1966171168
        %v3931 = vunpack.c.0.s8 %v3930
        %v3932 = vlaneseq
        %v3933 = vshrl.u32 %v3932, 7
        %v3934 = vsub.s32 %v3931, %v3933
        %v3935 = vrot.slane %v3921, %v3934
        %v3936 = vcombine.low %v3928, %v3935
        %v3937 = vcombine.low %v2457, %v2461
        %v3938 = vcombine.low %v2465, %v2469
        %v3939 = vcombine.low %v2473, %v2477
        %v3940 = vcombine.low %v2481, %v2485
        %v3942 = vunpack.c.l.s4 1966171168
        %v3943 = vunpack.c.0.s8 %v3942
        %v3944 = vlaneseq
        %v3945 = vshrl.u32 %v3944, 7
        %v3946 = vsub.s32 %v3943, %v3945
        %v3947 = vrot.slane %v3937, %v3946
        %v3949 = vunpack.c.l.s4 1966171168
        %v3950 = vunpack.c.0.s8 %v3949
        %v3951 = vlaneseq
        %v3952 = vshrl.u32 %v3951, 7
        %v3953 = vsub.s32 %v3950, %v3952
        %v3954 = vrot.slane %v3938, %v3953
        %v3956 = vunpack.c.l.s4 1966171168
        %v3957 = vunpack.c.0.s8 %v3956
        %v3958 = vlaneseq
        %v3959 = vshrl.u32 %v3958, 7
        %v3960 = vsub.s32 %v3957, %v3959
        %v3961 = vrot.slane %v3939, %v3960
        %v3963 = vunpack.c.l.s4 1966171168
        %v3964 = vunpack.c.0.s8 %v3963
        %v3965 = vlaneseq
        %v3966 = vshrl.u32 %v3965, 7
        %v3967 = vsub.s32 %v3964, %v3966
        %v3968 = vrot.slane %v3940, %v3967
        %v3969 = vcombine.low %v3947, %v3954
        %v3970 = vcombine.low %v3961, %v3968
        %v3972 = vunpack.c.l.s4 1966171168
        %v3973 = vunpack.c.0.s8 %v3972
        %v3974 = vlaneseq
        %v3975 = vshrl.u32 %v3974, 7
        %v3976 = vsub.s32 %v3973, %v3975
        %v3977 = vrot.slane %v3969, %v3976
        %v3979 = vunpack.c.l.s4 1966171168
        %v3980 = vunpack.c.0.s8 %v3979
        %v3981 = vlaneseq
        %v3982 = vshrl.u32 %v3981, 7
        %v3983 = vsub.s32 %v3980, %v3982
        %v3984 = vrot.slane %v3970, %v3983
        %v3985 = vcombine.low %v3977, %v3984
        %v3986 = vcombine.low %v2489, %v2493
        %v3987 = vcombine.low %v2497, %v2501
        %v3988 = vcombine.low %v2505, %v2509
        %v3989 = vcombine.low %v2513, %v2517
        %v3991 = vunpack.c.l.s4 1966171168
        %v3992 = vunpack.c.0.s8 %v3991
        %v3993 = vlaneseq
        %v3994 = vshrl.u32 %v3993, 7
        %v3995 = vsub.s32 %v3992, %v3994
        %v3996 = vrot.slane %v3986, %v3995
        %v3998 = vunpack.c.l.s4 1966171168
        %v3999 = vunpack.c.0.s8 %v3998
        %v4000 = vlaneseq
        %v4001 = vshrl.u32 %v4000, 7
        %v4002 = vsub.s32 %v3999, %v4001
        %v4003 = vrot.slane %v3987, %v4002
        %v4005 = vunpack.c.l.s4 1966171168
        %v4006 = vunpack.c.0.s8 %v4005
        %v4007 = vlaneseq
        %v4008 = vshrl.u32 %v4007, 7
        %v4009 = vsub.s32 %v4006, %v4008
        %v4010 = vrot.slane %v3988, %v4009
        %v4012 = vunpack.c.l.s4 1966171168
        %v4013 = vunpack.c.0.s8 %v4012
        %v4014 = vlaneseq
        %v4015 = vshrl.u32 %v4014, 7
        %v4016 = vsub.s32 %v4013, %v4015
        %v4017 = vrot.slane %v3989, %v4016
        %v4018 = vcombine.low %v3996, %v4003
        %v4019 = vcombine.low %v4010, %v4017
        %v4021 = vunpack.c.l.s4 1966171168
        %v4022 = vunpack.c.0.s8 %v4021
        %v4023 = vlaneseq
        %v4024 = vshrl.u32 %v4023, 7
        %v4025 = vsub.s32 %v4022, %v4024
        %v4026 = vrot.slane %v4018, %v4025
        %v4028 = vunpack.c.l.s4 1966171168
        %v4029 = vunpack.c.0.s8 %v4028
        %v4030 = vlaneseq
        %v4031 = vshrl.u32 %v4030, 7
        %v4032 = vsub.s32 %v4029, %v4031
        %v4033 = vrot.slane %v4019, %v4032
        %v4034 = vcombine.low %v4026, %v4033
        %v4035 = vcombine.low %v2521, %v2525
        %v4036 = vcombine.low %v2529, %v2533
        %v4037 = vcombine.low %v2537, %v2541
        %v4038 = vcombine.low %v2545, %v2549
        %v4040 = vunpack.c.l.s4 1966171168
        %v4041 = vunpack.c.0.s8 %v4040
        %v4042 = vlaneseq
        %v4043 = vshrl.u32 %v4042, 7
        %v4044 = vsub.s32 %v4041, %v4043
        %v4045 = vrot.slane %v4035, %v4044
        %v4047 = vunpack.c.l.s4 1966171168
        %v4048 = vunpack.c.0.s8 %v4047
        %v4049 = vlaneseq
        %v4050 = vshrl.u32 %v4049, 7
        %v4051 = vsub.s32 %v4048, %v4050
        %v4052 = vrot.slane %v4036, %v4051
        %v4054 = vunpack.c.l.s4 1966171168
        %v4055 = vunpack.c.0.s8 %v4054
        %v4056 = vlaneseq
        %v4057 = vshrl.u32 %v4056, 7
        %v4058 = vsub.s32 %v4055, %v4057
        %v4059 = vrot.slane %v4037, %v4058
        %v4061 = vunpack.c.l.s4 1966171168
        %v4062 = vunpack.c.0.s8 %v4061
        %v4063 = vlaneseq
        %v4064 = vshrl.u32 %v4063, 7
        %v4065 = vsub.s32 %v4062, %v4064
        %v4066 = vrot.slane %v4038, %v4065
        %v4067 = vcombine.low %v4045, %v4052
        %v4068 = vcombine.low %v4059, %v4066
        %v4070 = vunpack.c.l.s4 1966171168
        %v4071 = vunpack.c.0.s8 %v4070
        %v4072 = vlaneseq
        %v4073 = vshrl.u32 %v4072, 7
        %v4074 = vsub.s32 %v4071, %v4073
        %v4075 = vrot.slane %v4067, %v4074
        %v4077 = vunpack.c.l.s4 1966171168
        %v4078 = vunpack.c.0.s8 %v4077
        %v4079 = vlaneseq
        %v4080 = vshrl.u32 %v4079, 7
        %v4081 = vsub.s32 %v4078, %v4080
        %v4082 = vrot.slane %v4068, %v4081
        %v4083 = vcombine.low %v4075, %v4082
        %v4084 = vcombine.low %v2553, %v2557
        %v4085 = vcombine.low %v2561, %v2565
        %v4086 = vcombine.low %v2569, %v2573
        %v4087 = vcombine.low %v2577, %v2581
        %v4089 = vunpack.c.l.s4 1966171168
        %v4090 = vunpack.c.0.s8 %v4089
        %v4091 = vlaneseq
        %v4092 = vshrl.u32 %v4091, 7
        %v4093 = vsub.s32 %v4090, %v4092
        %v4094 = vrot.slane %v4084, %v4093
        %v4096 = vunpack.c.l.s4 1966171168
        %v4097 = vunpack.c.0.s8 %v4096
        %v4098 = vlaneseq
        %v4099 = vshrl.u32 %v4098, 7
        %v4100 = vsub.s32 %v4097, %v4099
        %v4101 = vrot.slane %v4085, %v4100
        %v4103 = vunpack.c.l.s4 1966171168
        %v4104 = vunpack.c.0.s8 %v4103
        %v4105 = vlaneseq
        %v4106 = vshrl.u32 %v4105, 7
        %v4107 = vsub.s32 %v4104, %v4106
        %v4108 = vrot.slane %v4086, %v4107
        %v4110 = vunpack.c.l.s4 1966171168
        %v4111 = vunpack.c.0.s8 %v4110
        %v4112 = vlaneseq
        %v4113 = vshrl.u32 %v4112, 7
        %v4114 = vsub.s32 %v4111, %v4113
        %v4115 = vrot.slane %v4087, %v4114
        %v4116 = vcombine.low %v4094, %v4101
        %v4117 = vcombine.low %v4108, %v4115
        %v4119 = vunpack.c.l.s4 1966171168
        %v4120 = vunpack.c.0.s8 %v4119
        %v4121 = vlaneseq
        %v4122 = vshrl.u32 %v4121, 7
        %v4123 = vsub.s32 %v4120, %v4122
        %v4124 = vrot.slane %v4116, %v4123
        %v4126 = vunpack.c.l.s4 1966171168
        %v4127 = vunpack.c.0.s8 %v4126
        %v4128 = vlaneseq
        %v4129 = vshrl.u32 %v4128, 7
        %v4130 = vsub.s32 %v4127, %v4129
        %v4131 = vrot.slane %v4117, %v4130
        %v4132 = vcombine.low %v4124, %v4131
        %v4133 = vcombine.low %v2585, %v2589
        %v4134 = vcombine.low %v2593, %v2597
        %v4135 = vcombine.low %v2601, %v2605
        %v4136 = vcombine.low %v2609, %v2613
        %v4138 = vunpack.c.l.s4 1966171168
        %v4139 = vunpack.c.0.s8 %v4138
        %v4140 = vlaneseq
        %v4141 = vshrl.u32 %v4140, 7
        %v4142 = vsub.s32 %v4139, %v4141
        %v4143 = vrot.slane %v4133, %v4142
        %v4145 = vunpack.c.l.s4 1966171168
        %v4146 = vunpack.c.0.s8 %v4145
        %v4147 = vlaneseq
        %v4148 = vshrl.u32 %v4147, 7
        %v4149 = vsub.s32 %v4146, %v4148
        %v4150 = vrot.slane %v4134, %v4149
        %v4152 = vunpack.c.l.s4 1966171168
        %v4153 = vunpack.c.0.s8 %v4152
        %v4154 = vlaneseq
        %v4155 = vshrl.u32 %v4154, 7
        %v4156 = vsub.s32 %v4153, %v4155
        %v4157 = vrot.slane %v4135, %v4156
        %v4159 = vunpack.c.l.s4 1966171168
        %v4160 = vunpack.c.0.s8 %v4159
        %v4161 = vlaneseq
        %v4162 = vshrl.u32 %v4161, 7
        %v4163 = vsub.s32 %v4160, %v4162
        %v4164 = vrot.slane %v4136, %v4163
        %v4165 = vcombine.low %v4143, %v4150
        %v4166 = vcombine.low %v4157, %v4164
        %v4168 = vunpack.c.l.s4 1966171168
        %v4169 = vunpack.c.0.s8 %v4168
        %v4170 = vlaneseq
        %v4171 = vshrl.u32 %v4170, 7
        %v4172 = vsub.s32 %v4169, %v4171
        %v4173 = vrot.slane %v4165, %v4172
        %v4175 = vunpack.c.l.s4 1966171168
        %v4176 = vunpack.c.0.s8 %v4175
        %v4177 = vlaneseq
        %v4178 = vshrl.u32 %v4177, 7
        %v4179 = vsub.s32 %v4176, %v4178
        %v4180 = vrot.slane %v4166, %v4179
        %v4181 = vcombine.low %v4173, %v4180
        %4182 = vset.pattern.permute.xlu0 0
        %4183 = vperm.xlu0 %4182, %v2662
        %v4184 = vpop.permute.xlu0 %4183
        %4185 = vset.pattern.permute.xlu0 0
        %4186 = vperm.xlu0 %4185, %v2711
        %v4187 = vpop.permute.xlu0 %4186
        %4188 = vset.pattern.permute.xlu0 0
        %4189 = vperm.xlu0 %4188, %v2760
        %v4190 = vpop.permute.xlu0 %4189
        %4191 = vset.pattern.permute.xlu0 0
        %4192 = vperm.xlu0 %4191, %v2809
        %v4193 = vpop.permute.xlu0 %4192
        %4194 = vset.pattern.permute.xlu0 0
        %4195 = vperm.xlu0 %4194, %v2858
        %v4196 = vpop.permute.xlu0 %4195
        %4197 = vset.pattern.permute.xlu0 0
        %4198 = vperm.xlu0 %4197, %v2907
        %v4199 = vpop.permute.xlu0 %4198
        %4200 = vset.pattern.permute.xlu0 0
        %4201 = vperm.xlu0 %4200, %v2956
        %v4202 = vpop.permute.xlu0 %4201
        %4203 = vset.pattern.permute.xlu0 0
        %4204 = vperm.xlu0 %4203, %v3005
        %v4205 = vpop.permute.xlu0 %4204
        %4206 = vset.pattern.permute.xlu0 0
        %4207 = vperm.xlu0 %4206, %v3054
        %v4208 = vpop.permute.xlu0 %4207
        %4209 = vset.pattern.permute.xlu0 0
        %4210 = vperm.xlu0 %4209, %v3103
        %v4211 = vpop.permute.xlu0 %4210
        %4212 = vset.pattern.permute.xlu0 0
        %4213 = vperm.xlu0 %4212, %v3152
        %v4214 = vpop.permute.xlu0 %4213
        %4215 = vset.pattern.permute.xlu0 0
        %4216 = vperm.xlu0 %4215, %v3201
        %v4217 = vpop.permute.xlu0 %4216
        %4218 = vset.pattern.permute.xlu0 0
        %4219 = vperm.xlu0 %4218, %v3250
        %v4220 = vpop.permute.xlu0 %4219
        %4221 = vset.pattern.permute.xlu0 0
        %4222 = vperm.xlu0 %4221, %v3299
        %v4223 = vpop.permute.xlu0 %4222
        %4224 = vset.pattern.permute.xlu0 0
        %4225 = vperm.xlu0 %4224, %v3348
        %v4226 = vpop.permute.xlu0 %4225
        %4227 = vset.pattern.permute.xlu0 0
        %4228 = vperm.xlu0 %4227, %v3397
        %v4229 = vpop.permute.xlu0 %4228
        %4230 = vset.pattern.permute.xlu0 0
        %4231 = vperm.xlu0 %4230, %v3446
        %v4232 = vpop.permute.xlu0 %4231
        %4233 = vset.pattern.permute.xlu0 0
        %4234 = vperm.xlu0 %4233, %v3495
        %v4235 = vpop.permute.xlu0 %4234
        %4236 = vset.pattern.permute.xlu0 0
        %4237 = vperm.xlu0 %4236, %v3544
        %v4238 = vpop.permute.xlu0 %4237
        %4239 = vset.pattern.permute.xlu0 0
        %4240 = vperm.xlu0 %4239, %v3593
        %v4241 = vpop.permute.xlu0 %4240
        %4242 = vset.pattern.permute.xlu0 0
        %4243 = vperm.xlu0 %4242, %v3642
        %v4244 = vpop.permute.xlu0 %4243
        %4245 = vset.pattern.permute.xlu0 0
        %4246 = vperm.xlu0 %4245, %v3691
        %v4247 = vpop.permute.xlu0 %4246
        %4248 = vset.pattern.permute.xlu0 0
        %4249 = vperm.xlu0 %4248, %v3740
        %v4250 = vpop.permute.xlu0 %4249
        %4251 = vset.pattern.permute.xlu0 0
        %4252 = vperm.xlu0 %4251, %v3789
        %v4253 = vpop.permute.xlu0 %4252
        %4254 = vset.pattern.permute.xlu0 0
        %4255 = vperm.xlu0 %4254, %v3838
        %v4256 = vpop.permute.xlu0 %4255
        %4257 = vset.pattern.permute.xlu0 0
        %4258 = vperm.xlu0 %4257, %v3887
        %v4259 = vpop.permute.xlu0 %4258
        %4260 = vset.pattern.permute.xlu0 0
        %4261 = vperm.xlu0 %4260, %v3936
        %v4262 = vpop.permute.xlu0 %4261
        %4263 = vset.pattern.permute.xlu0 0
        %4264 = vperm.xlu0 %4263, %v3985
        %v4265 = vpop.permute.xlu0 %4264
        %4266 = vset.pattern.permute.xlu0 0
        %4267 = vperm.xlu0 %4266, %v4034
        %v4268 = vpop.permute.xlu0 %4267
        %4269 = vset.pattern.permute.xlu0 0
        %4270 = vperm.xlu0 %4269, %v4083
        %v4271 = vpop.permute.xlu0 %4270
        %4272 = vset.pattern.permute.xlu0 0
        %4273 = vperm.xlu0 %4272, %v4132
        %v4274 = vpop.permute.xlu0 %4273
        %4275 = vset.pattern.permute.xlu0 0
        %4276 = vperm.xlu0 %4275, %v4181
        %v4277 = vpop.permute.xlu0 %4276
        %v4278 = vlaneseq
        %v4279 = vand.u32 %v4278, 127
        %v4280 = vlaneseq
        %v4281 = vshrl.u32 %v4280, 7
        %v4282 = vsub.s32 %v4279, %v4281
        %v4283 = vrot.slane %v4184, %v4282
        %v4284 = vadd.s32 %v4279, 4294967288
        %v4285 = vlaneseq
        %v4286 = vshrl.u32 %v4285, 7
        %v4287 = vsub.s32 %v4284, %v4286
        %v4288 = vrot.slane %v4187, %v4287
        %vm4289 = vcmask 130112
        %v4290 = vsel %vm4289, %v4288, %v4283
        %v4291 = vadd.s32 %v4279, 4294967280
        %v4292 = vlaneseq
        %v4293 = vshrl.u32 %v4292, 7
        %v4294 = vsub.s32 %v4291, %v4293
        %v4295 = vrot.slane %v4190, %v4294
        %vm4296 = vcmask 195712
        %v4297 = vsel %vm4296, %v4295, %v4290
        %v4298 = vadd.s32 %v4279, 4294967272
        %v4299 = vlaneseq
        %v4300 = vshrl.u32 %v4299, 7
        %v4301 = vsub.s32 %v4298, %v4300
        %v4302 = vrot.slane %v4193, %v4301
        %vm4303 = vcmask 261312
        %v4304 = vsel %vm4303, %v4302, %v4297
        %v4305 = vadd.s32 %v4279, 4294967264
        %v4306 = vlaneseq
        %v4307 = vshrl.u32 %v4306, 7
        %v4308 = vsub.s32 %v4305, %v4307
        %v4309 = vrot.slane %v4196, %v4308
        %vm4310 = vcmask 326912
        %v4311 = vsel %vm4310, %v4309, %v4304
        %v4312 = vadd.s32 %v4279, 4294967256
        %v4313 = vlaneseq
        %v4314 = vshrl.u32 %v4313, 7
        %v4315 = vsub.s32 %v4312, %v4314
        %v4316 = vrot.slane %v4199, %v4315
        %vm4317 = vcmask 392512
        %v4318 = vsel %vm4317, %v4316, %v4311
        %v4319 = vadd.s32 %v4279, 4294967248
        %v4320 = vlaneseq
        %v4321 = vshrl.u32 %v4320, 7
        %v4322 = vsub.s32 %v4319, %v4321
        %v4323 = vrot.slane %v4202, %v4322
        %vm4324 = vcmask 458112
        %v4325 = vsel %vm4324, %v4323, %v4318
        %v4326 = vadd.s32 %v4279, 4294967240
        %v4327 = vlaneseq
        %v4328 = vshrl.u32 %v4327, 7
        %v4329 = vsub.s32 %v4326, %v4328
        %v4330 = vrot.slane %v4205, %v4329
        %vm4331 = vcmask 523712
        %v4332 = vsel %vm4331, %v4330, %v4325
        %v4333 = vadd.s32 %v4279, 4294967232
        %v4334 = vlaneseq
        %v4335 = vshrl.u32 %v4334, 7
        %v4336 = vsub.s32 %v4333, %v4335
        %v4337 = vrot.slane %v4208, %v4336
        %vm4338 = vcmask 589312
        %v4339 = vsel %vm4338, %v4337, %v4332
        %v4340 = vadd.s32 %v4279, 4294967224
        %v4341 = vlaneseq
        %v4342 = vshrl.u32 %v4341, 7
        %v4343 = vsub.s32 %v4340, %v4342
        %v4344 = vrot.slane %v4211, %v4343
        %vm4345 = vcmask 654912
        %v4346 = vsel %vm4345, %v4344, %v4339
        %v4347 = vadd.s32 %v4279, 4294967216
        %v4348 = vlaneseq
        %v4349 = vshrl.u32 %v4348, 7
        %v4350 = vsub.s32 %v4347, %v4349
        %v4351 = vrot.slane %v4214, %v4350
        %vm4352 = vcmask 720512
        %v4353 = vsel %vm4352, %v4351, %v4346
        %v4354 = vadd.s32 %v4279, 4294967208
        %v4355 = vlaneseq
        %v4356 = vshrl.u32 %v4355, 7
        %v4357 = vsub.s32 %v4354, %v4356
        %v4358 = vrot.slane %v4217, %v4357
        %vm4359 = vcmask 786112
        %v4360 = vsel %vm4359, %v4358, %v4353
        %v4361 = vadd.s32 %v4279, 4294967200
        %v4362 = vlaneseq
        %v4363 = vshrl.u32 %v4362, 7
        %v4364 = vsub.s32 %v4361, %v4363
        %v4365 = vrot.slane %v4220, %v4364
        %vm4366 = vcmask 851712
        %v4367 = vsel %vm4366, %v4365, %v4360
        %v4368 = vadd.s32 %v4279, 4294967192
        %v4369 = vlaneseq
        %v4370 = vshrl.u32 %v4369, 7
        %v4371 = vsub.s32 %v4368, %v4370
        %v4372 = vrot.slane %v4223, %v4371
        %vm4373 = vcmask 917312
        %v4374 = vsel %vm4373, %v4372, %v4367
        %v4375 = vadd.s32 %v4279, 4294967184
        %v4376 = vlaneseq
        %v4377 = vshrl.u32 %v4376, 7
        %v4378 = vsub.s32 %v4375, %v4377
        %v4379 = vrot.slane %v4226, %v4378
        %vm4380 = vcmask 982912
        %v4381 = vsel %vm4380, %v4379, %v4374
        %v4382 = vadd.s32 %v4279, 4294967176
        %v4383 = vlaneseq
        %v4384 = vshrl.u32 %v4383, 7
        %v4385 = vsub.s32 %v4382, %v4384
        %v4386 = vrot.slane %v4229, %v4385
        %vm4387 = vcmask 1048512
        %v4388 = vsel %vm4387, %v4386, %v4381
        %v4389 = vlaneseq
        %v4390 = vshrl.u32 %v4389, 7
        %v4391 = vsub.s32 %v4279, %v4390
        %v4392 = vrot.slane %v4232, %v4391
        %v4393 = vlaneseq
        %v4394 = vshrl.u32 %v4393, 7
        %v4395 = vsub.s32 %v4284, %v4394
        %v4396 = vrot.slane %v4235, %v4395
        %v4397 = vsel %vm4289, %v4396, %v4392
        %v4398 = vlaneseq
        %v4399 = vshrl.u32 %v4398, 7
        %v4400 = vsub.s32 %v4291, %v4399
        %v4401 = vrot.slane %v4238, %v4400
        %v4402 = vsel %vm4296, %v4401, %v4397
        %v4403 = vlaneseq
        %v4404 = vshrl.u32 %v4403, 7
        %v4405 = vsub.s32 %v4298, %v4404
        %v4406 = vrot.slane %v4241, %v4405
        %v4407 = vsel %vm4303, %v4406, %v4402
        %v4408 = vlaneseq
        %v4409 = vshrl.u32 %v4408, 7
        %v4410 = vsub.s32 %v4305, %v4409
        %v4411 = vrot.slane %v4244, %v4410
        %v4412 = vsel %vm4310, %v4411, %v4407
        %v4413 = vlaneseq
        %v4414 = vshrl.u32 %v4413, 7
        %v4415 = vsub.s32 %v4312, %v4414
        %v4416 = vrot.slane %v4247, %v4415
        %v4417 = vsel %vm4317, %v4416, %v4412
        %v4418 = vlaneseq
        %v4419 = vshrl.u32 %v4418, 7
        %v4420 = vsub.s32 %v4319, %v4419
        %v4421 = vrot.slane %v4250, %v4420
        %v4422 = vsel %vm4324, %v4421, %v4417
        %v4423 = vlaneseq
        %v4424 = vshrl.u32 %v4423, 7
        %v4425 = vsub.s32 %v4326, %v4424
        %v4426 = vrot.slane %v4253, %v4425
        %v4427 = vsel %vm4331, %v4426, %v4422
        %v4428 = vlaneseq
        %v4429 = vshrl.u32 %v4428, 7
        %v4430 = vsub.s32 %v4333, %v4429
        %v4431 = vrot.slane %v4256, %v4430
        %v4432 = vsel %vm4338, %v4431, %v4427
        %v4433 = vlaneseq
        %v4434 = vshrl.u32 %v4433, 7
        %v4435 = vsub.s32 %v4340, %v4434
        %v4436 = vrot.slane %v4259, %v4435
        %v4437 = vsel %vm4345, %v4436, %v4432
        %v4438 = vlaneseq
        %v4439 = vshrl.u32 %v4438, 7
        %v4440 = vsub.s32 %v4347, %v4439
        %v4441 = vrot.slane %v4262, %v4440
        %v4442 = vsel %vm4352, %v4441, %v4437
        %v4443 = vlaneseq
        %v4444 = vshrl.u32 %v4443, 7
        %v4445 = vsub.s32 %v4354, %v4444
        %v4446 = vrot.slane %v4265, %v4445
        %v4447 = vsel %vm4359, %v4446, %v4442
        %v4448 = vlaneseq
        %v4449 = vshrl.u32 %v4448, 7
        %v4450 = vsub.s32 %v4361, %v4449
        %v4451 = vrot.slane %v4268, %v4450
        %v4452 = vsel %vm4366, %v4451, %v4447
        %v4453 = vlaneseq
        %v4454 = vshrl.u32 %v4453, 7
        %v4455 = vsub.s32 %v4368, %v4454
        %v4456 = vrot.slane %v4271, %v4455
        %v4457 = vsel %vm4373, %v4456, %v4452
        %v4458 = vlaneseq
        %v4459 = vshrl.u32 %v4458, 7
        %v4460 = vsub.s32 %v4375, %v4459
        %v4461 = vrot.slane %v4274, %v4460
        %v4462 = vsel %vm4380, %v4461, %v4457
        %v4463 = vlaneseq
        %v4464 = vshrl.u32 %v4463, 7
        %v4465 = vsub.s32 %v4382, %v4464
        %v4466 = vrot.slane %v4277, %v4465
        %v4467 = vsel %vm4387, %v4466, %v4462
        %v4468 = vcombine.low %v4388, %v4467
        %v4470 = vunpack.c.l.s4 1966171168
        %v4471 = vunpack.c.0.s8 %v4470
        %v4472 = vlaneseq
        %v4473 = vshrl.u32 %v4472, 7
        %v4474 = vsub.s32 %v4471, %v4473
        %v4475 = vrot.slane %v4468, %v4474
        %v4477 = vunpack.c.l.s4 1966171168
        %v4478 = vunpack.c.0.s8 %v4477
        %v4479 = vlaneseq
        %v4480 = vshrl.u32 %v4479, 7
        %v4481 = vsub.s32 %v4478, %v4480
        %v4482 = vrot.slane %v4475, %v4481
        %v4484 = vlaneseq
        %vm4485 = vcmp.ge.s32.totalorder %v4484, 0
        %vm4486 = vcmp.lt.s32.totalorder %v4484, 256
        %vm4487 = vmand %vm4485, %vm4486
        %4488 = vst.msk [vmem:[%s328] sm:$0x3] %vm4487, %v4482
        %s4489 = sand.u32 %s227, 1
        %s4490 = scalar_lea.sflag [#allocation4], %s4489
        %s4491 = sand.u32 %s227, 1
        %s4492 = smul.addr %s4491, 2
        %s4493 = scalar_lea.vmem [#allocation3], %s4492
        // Predicated region
        $region57: #{tpu_custom_call.1} parent=55 // pred_check
          %p4494 = pneg %p237
        $region58: #{tpu_custom_call.1} parent=55 // pred_check_branch
          %4496 = sbr.rel (%p4494) target = $region60
        $region59: #{tpu_custom_call.1} parent=55 // pred_region
          %s4498 = ssub.s32 32, 32
          %4499 = vsyncadd %s4490, %s4498
          %s4500 = smul.addr %s25, 2
          %s4501 = smul.addr %s4500, 16
          %s4502 = scalar_lea.hbm %s9, %s4501
          %s4504 = sshll.u32 %s4493, 4
          %s4505 = int_to_ptr.vmem [resolvable:$true] %s4504
          %4507 = dma.vmem_to_hbm [thread:$0]  %s4505, 32, %s4502, %s4490
        $region60: #{tpu_custom_call.1} parent=55 // pred_fallthru
          _
      $region56: #{tpu_custom_call.1} parent=5 // pred_fallthru
        _
      %p4508 = scmp.le.s32.totalorder 2, %s20
      // Predicated region
      $region61: #{tpu_custom_call.1} parent=5 // pred_check
        %p4509 = pneg %p4508
      $region62: #{tpu_custom_call.1} parent=5 // pred_check_branch
        %4511 = sbr.rel (%p4509) target = $region64
      $region63: #{tpu_custom_call.1} parent=5 // pred_region
        %s4512 = ssub.s32 %s20, 2
        // Predicated region
        $region65: #{tpu_custom_call.1} parent=63 // pred_check
          %p4513 = pneg %p243
        $region66: #{tpu_custom_call.1} parent=63 // pred_check_branch
          %4515 = sbr.rel (%p4513) target = $region68
        $region67: #{tpu_custom_call.1} parent=63 // pred_region
          %s4516 = sand.u32 %s228, 1
          %s4517 = scalar_lea.sflag [#allocation4], %s4516
          %s4518 = sand.u32 %s228, 1
          %s4519 = smul.addr %s4518, 2
          %s4520 = scalar_lea.vmem [#allocation3], %s4519
          %4521 = dma.done %s4517, 32
        $region68: #{tpu_custom_call.1} parent=63 // pred_fallthru
          _
      $region64: #{tpu_custom_call.1} parent=5 // pred_fallthru
        _
    $region6: #{tpu_custom_call.1} parent=1 // loop_footer
      %s24 = sadd.s32 1, %s20
    $region7: #{tpu_custom_call.1} parent=1 // loop_footer_branch
      %19 = sbr.rel target = $region3
    $region8: #{tpu_custom_call.1} parent=1 // loop_exit
      _
    %4522 = vsyncpa [#allocation4], 1
    %s4523 = scalar_lea.sflag [#allocation4], 1
    %4524 = vsyncpa %s4523, 1

</llo_original>
